<compile_context>
chip_gen: v7x
topology: tpu7x:2x2x1
jax: 0.10.0
libtpu: 0.0.40
codegen_flags: <defaults>
</compile_context>

<pallas_src>
import jax
import jax.numpy as jnp
from jax.experimental import pallas as pl
from jax.experimental.pallas import tpu as pltpu

# ----------------------- model hyper-parameters (config) -----------------------
HID_DIM = 16          # Seq2Seq_para['hid_dim']
LAYERS = 2            # Seq2Seq_para['layer']
BATCH = 2
SEQ_LEN = 8           # config.input_len
PRED_LEN = 4          # config.pred_len
DIFF = 1              # config.data_diff
VAR_LEN = 1 + DIFF    # config.var_len  (raw series + diff channels)
OUT_DIM = 3           # config.out_dim

# ----------------------- packed-slab static row offsets ------------------------
# weight slab (64 lanes wide = 4*HID_DIM)
_R_ENC_WIH0 = 0                      # [16, 64]  enc layer-0 W_ih^T  (rows >= VAR_LEN zero)
_R_ENC_WHH0 = 16                     # [16, 64]  enc layer-0 W_hh^T
_R_ENC_W1 = 32                       # [32, 64]  enc layer-1 [W_ih^T; W_hh^T]
_R_DEC_W0 = 64                       # [32, 64]  dec layer-0 [W_ih^T; W_hh^T]
_R_DEC_W1 = 96                       # [32, 64]  dec layer-1 [W_ih^T; W_hh^T]
_R_EMB_W = 128                       # [16, 64]  embedding W^T (rows >= VAR_LEN, lanes >= H zero)
_R_BIAS = 144                        # rows: +0 enc_b0, +1 enc_b1, +2 dec_b0, +3 dec_b1, +4 emb_b
_W_SLAB_ROWS = 152

# data slab (16 lanes wide = HID_DIM)
_R_INP = 0                           # [SEQ_LEN*B, 16] time-major input (lanes >= VAR_LEN zero)
_R_STATE = SEQ_LEN * BATCH           # h (layer0, layer1) then c (layer0, layer1), B rows each
_DATA_ROWS = SEQ_LEN * BATCH + 4 * BATCH

# fc slab (128 lanes wide)
_R_FC_W = 0                          # [16, 128] out_fc W^T  (lanes >= OUT_DIM zero)
_R_FC_B = HID_DIM                    # [1, 128]
_FC_SLAB_ROWS = 24
OUT_LANES = 128


def _vmem():
    return pl.BlockSpec(memory_space=pltpu.MemorySpace.VMEM)


# --------------------------------- fused kernel ---------------------------------
def _lstm_gates(gates, c_prev):
    """Gate block in permuted (i, f, o, g) column order -> 1 sigmoid + 1 tanh push."""
    H = HID_DIM
    sig = jax.nn.sigmoid(gates[:, 0:3 * H])
    g_g = jnp.tanh(gates[:, 3 * H:4 * H])
    i_g = sig[:, 0:H]
    f_g = sig[:, H:2 * H]
    o_g = sig[:, 2 * H:3 * H]
    c_new = f_g * c_prev + i_g * g_g
    h_new = o_g * jnp.tanh(c_new)
    return h_new, c_new


def seq2seq_kernel(data_ref, w_ref, fc_ref, out_ref):
    B, H = BATCH, HID_DIM

    # ---- unpack data slab --------------------------------------------------
    inp = data_ref[_R_INP:_R_INP + SEQ_LEN * B, :]                 # [16, 16]
    h0 = data_ref[_R_STATE + 0 * B:_R_STATE + 1 * B, :]            # [B, H]
    h1 = data_ref[_R_STATE + 1 * B:_R_STATE + 2 * B, :]
    c0 = data_ref[_R_STATE + 2 * B:_R_STATE + 3 * B, :]
    c1 = data_ref[_R_STATE + 3 * B:_R_STATE + 4 * B, :]

    # ---- unpack weight slab (hoisted loads, all static slices) -------------
    enc_wih0 = w_ref[_R_ENC_WIH0:_R_ENC_WIH0 + 16, :]              # [16, 64]
    enc_whh0 = w_ref[_R_ENC_WHH0:_R_ENC_WHH0 + H, :]               # [16, 64]
    enc_w1 = w_ref[_R_ENC_W1:_R_ENC_W1 + 2 * H, :]                 # [32, 64]
    dec_w0 = w_ref[_R_DEC_W0:_R_DEC_W0 + 2 * H, :]                 # [32, 64]
    dec_w1 = w_ref[_R_DEC_W1:_R_DEC_W1 + 2 * H, :]                 # [32, 64]
    emb_w = w_ref[_R_EMB_W:_R_EMB_W + 16, :]                       # [16, 64]

    # Bias broadcasts hoisted out of the unrolled loops (JAX does not CSE them).
    enc_b0 = w_ref[_R_BIAS + 0:_R_BIAS + 1, :]                     # [1, 64]
    enc_b1 = jnp.broadcast_to(w_ref[_R_BIAS + 1:_R_BIAS + 2, :], (B, 4 * H))
    dec_b0 = jnp.broadcast_to(w_ref[_R_BIAS + 2:_R_BIAS + 3, :], (B, 4 * H))
    dec_b1 = jnp.broadcast_to(w_ref[_R_BIAS + 3:_R_BIAS + 4, :], (B, 4 * H))
    emb_b = w_ref[_R_BIAS + 4:_R_BIAS + 5, :]                      # [1, 64]

    # ---- Encoder layer-0 x-projection for ALL timesteps (one MXU push, off the
    #      recurrent critical path); fused bias folded in.
    xproj0 = (jnp.dot(inp, enc_wih0, preferred_element_type=jnp.float32)
              + enc_b0)                                            # [SEQ_LEN*B, 64]

    # ---- Encoder: 2-layer LSTM, statically unrolled over SEQ_LEN -----------
    for t in range(SEQ_LEN):
        g0 = xproj0[t * B:(t + 1) * B, :] + jnp.dot(
            h0, enc_whh0, preferred_element_type=jnp.float32)
        h0, c0 = _lstm_gates(g0, c0)
        # fused [x|h] @ [W_ih^T; W_hh^T]: one dot per cell
        g1 = jnp.dot(jnp.concatenate([h0, h1], axis=1), enc_w1,
                     preferred_element_type=jnp.float32) + enc_b1
        h1, c1 = _lstm_gates(g1, c1)

    # ---- Embedding of the LAST encoder-input timestep (the only row consumed).
    # TODO(synk): Dropout(p=0.1) treated as inference-mode identity (no RNG mask).
    x_last = inp[(SEQ_LEN - 1) * B:SEQ_LEN * B, :]                 # [B, 16]
    dec_in = (jnp.dot(x_last, emb_w, preferred_element_type=jnp.float32)
              + emb_b)[:, 0:H]                                     # [B, H]

    # ---- Decoder: autoregressive 2-layer LSTM, statically unrolled ---------
    dec_outs = []
    for _ in range(PRED_LEN):
        g0 = jnp.dot(jnp.concatenate([dec_in, h0], axis=1), dec_w0,
                     preferred_element_type=jnp.float32) + dec_b0
        h0, c0 = _lstm_gates(g0, c0)
        g1 = jnp.dot(jnp.concatenate([h0, h1], axis=1), dec_w1,
                     preferred_element_type=jnp.float32) + dec_b1
        h1, c1 = _lstm_gates(g1, c1)
        dec_outs.append(h1)
        dec_in = h1                                                # raw top-layer output feeds back

    dec_slab = jnp.concatenate(dec_outs, axis=0)                   # [PRED_LEN*B, H] (in vregs)

    # ---- Single lane-dense output projection --------------------------------
    out_ref[...] = (jnp.dot(dec_slab, fc_ref[_R_FC_W:_R_FC_W + H, :],
                            preferred_element_type=jnp.float32)
                    + fc_ref[_R_FC_B:_R_FC_B + 1, :])              # [PRED_LEN*B, 128]


# ------------------------------ parameter init ----------------------------------
def _permute_ifog(w):
    """Permute last-dim gate blocks from PyTorch (i,f,g,o) to (i,f,o,g)."""
    H = HID_DIM
    return jnp.concatenate([w[..., 0:2 * H], w[..., 3 * H:4 * H], w[..., 2 * H:3 * H]],
                           axis=-1)


def _init_lstm_layer(key, in_sz, hidden):
    """(W_ih^T [in,4H], W_hh^T [H,4H], fused bias [1,4H]) in (i,f,o,g) column order."""
    scale = 1.0 / jnp.sqrt(jnp.float32(hidden))
    key, k1, k2, k3, k4 = jax.random.split(key, 5)
    w_ih = jax.random.uniform(k1, (4 * hidden, in_sz), minval=-scale, maxval=scale,
                              dtype=jnp.float32)
    w_hh = jax.random.uniform(k2, (4 * hidden, hidden), minval=-scale, maxval=scale,
                              dtype=jnp.float32)
    b_ih = jax.random.uniform(k3, (4 * hidden,), minval=-scale, maxval=scale,
                              dtype=jnp.float32)
    b_hh = jax.random.uniform(k4, (4 * hidden,), minval=-scale, maxval=scale,
                              dtype=jnp.float32)
    w_ih_t = _permute_ifog(w_ih.T)
    w_hh_t = _permute_ifog(w_hh.T)
    b = _permute_ifog((b_ih + b_hh)[None, :])
    return (w_ih_t, w_hh_t, b), key


def _rowpad(a, rows):
    return jnp.pad(a, ((0, rows - a.shape[0]), (0, 0)))


def _lanepad(a, lanes):
    return jnp.pad(a, ((0, 0), (0, lanes - a.shape[1])))


def init_params(key):
    """Build the 2 constant packed slabs (weights/biases 64-lane, fc 128-lane)."""
    H = HID_DIM
    (e0_wi, e0_wh, e0_b), key = _init_lstm_layer(key, VAR_LEN, H)
    (e1_wi, e1_wh, e1_b), key = _init_lstm_layer(key, H, H)
    (d0_wi, d0_wh, d0_b), key = _init_lstm_layer(key, H, H)
    (d1_wi, d1_wh, d1_b), key = _init_lstm_layer(key, H, H)

    key, k1, k2, k3, k4 = jax.random.split(key, 5)
    s_e = 1.0 / jnp.sqrt(jnp.float32(VAR_LEN))
    emb_w = jax.random.uniform(k1, (H, VAR_LEN), minval=-s_e, maxval=s_e,
                               dtype=jnp.float32).T                 # [VAR_LEN, H]
    emb_b = jax.random.uniform(k2, (H,), minval=-s_e, maxval=s_e, dtype=jnp.float32)
    s_o = 1.0 / jnp.sqrt(jnp.float32(H))
    fc_w = jax.random.uniform(k3, (OUT_DIM, H), minval=-s_o, maxval=s_o,
                              dtype=jnp.float32).T                  # [H, OUT_DIM]
    fc_b = jax.random.uniform(k4, (OUT_DIM,), minval=-s_o, maxval=s_o, dtype=jnp.float32)

    bias_block = jnp.concatenate(
        [e0_b, e1_b, d0_b, d1_b, _lanepad(emb_b[None, :], 4 * H)], axis=0)   # [5, 64]

    w_slab = jnp.concatenate([
        _rowpad(e0_wi, 16),                                   # rows   0: 16 enc W_ih^T (l0)
        e0_wh,                                                # rows  16: 32 enc W_hh^T (l0)
        jnp.concatenate([e1_wi, e1_wh], axis=0),              # rows  32: 64 enc fused  (l1)
        jnp.concatenate([d0_wi, d0_wh], axis=0),              # rows  64: 96 dec fused  (l0)
        jnp.concatenate([d1_wi, d1_wh], axis=0),              # rows  96:128 dec fused  (l1)
        _rowpad(_lanepad(emb_w, 4 * H), 16),                  # rows 128:144 embedding W^T
        _rowpad(bias_block, 8),                               # rows 144:152 biases
    ], axis=0)
    assert w_slab.shape == (_W_SLAB_ROWS, 4 * H), w_slab.shape

    fc_slab = _rowpad(jnp.concatenate(
        [_lanepad(fc_w, OUT_LANES), _lanepad(fc_b[None, :], OUT_LANES)], axis=0),
        _FC_SLAB_ROWS)                                        # [24, 128]

    return {'w_slab': w_slab, 'fc_slab': fc_slab}, key


# --------------------------------- forward --------------------------------------
@jax.jit
def seq2seq_forward(params, x, h0, c0):
    """x: [bs, seq_len] f32.  h0, c0: [LAYERS, bs, HID_DIM] (encoder initial state)."""
    bs, seq_len = x.shape
    assert bs == BATCH and seq_len == SEQ_LEN

    inp = x[:, :, None]                                       # [bs, seq_len, 1]

    # data_diff feature construction (tiny plain-JAX glue, matches the PyTorch loop).
    if DIFF != 0:
        diff_data = []
        d_in = inp
        for _ in range(DIFF):
            d_in = d_in[:, 1:, :] - d_in[:, :-1, :]
            d_in = jnp.concatenate(
                [jnp.zeros((bs, 1, 1), dtype=inp.dtype), d_in], axis=1)
            diff_data.append(d_in)
        inp = jnp.concatenate([inp] + diff_data, axis=2)       # [bs, seq_len, VAR_LEN]

    # Time-major flatten so static [t*B:(t+1)*B] row slices pick timestep t, then pack
    # input + initial states into ONE lane/sublane-dense data slab (single DMA).
    inp_tm = jnp.transpose(inp, (1, 0, 2)).reshape(seq_len * bs, VAR_LEN)
    inp_pad = _lanepad(inp_tm, HID_DIM)                        # [16, 16]
    state = jnp.concatenate([h0.reshape(LAYERS * bs, HID_DIM),
                             c0.reshape(LAYERS * bs, HID_DIM)], axis=0)   # [8, 16]
    data_slab = jnp.concatenate([inp_pad, state], axis=0)      # [24, 16]

    out_pad = pl.pallas_call(
        seq2seq_kernel,
        out_shape=jax.ShapeDtypeStruct((PRED_LEN * bs, OUT_LANES), jnp.float32),
        in_specs=[_vmem(), _vmem(), _vmem()],
        out_specs=_vmem(),
    )(data_slab, params['w_slab'], params['fc_slab'])

    # [pred_len*bs, 128] -> slice real lanes -> [bs, out_dim, pred_len], then
    # torch.squeeze-equivalent (no-op at these shapes).
    out = out_pad[:, :OUT_DIM].reshape(PRED_LEN, bs, OUT_DIM).transpose(1, 2, 0)
    return jnp.squeeze(out)


# ----------------------------------- main ----------------------------------------
if __name__ == "__main__":
    key = jax.random.PRNGKey(0)
    params, key = init_params(key)

    key, kx, kh, kc = jax.random.split(key, 4)
    x = jax.random.normal(kx, (BATCH, SEQ_LEN), dtype=jnp.float32)
    # Encoder's torch.randn initial states, made deterministic here.
    h0 = jax.random.normal(kh, (LAYERS, BATCH, HID_DIM), dtype=jnp.float32)
    c0 = jax.random.normal(kc, (LAYERS, BATCH, HID_DIM), dtype=jnp.float32)

    out = seq2seq_forward(params, x, h0, c0)
    out = jax.block_until_ready(out)
    assert out.shape == (BATCH, OUT_DIM, PRED_LEN), out.shape
    assert jnp.all(jnp.isfinite(out))
    print("KERNEL_OK")
</pallas_src>

<mosaic_0001>
module attributes {stable_mosaic.version = 11 : i64} {
  func.func @seq2seq_kernel(%arg0: memref<24x16xf32, #tpu.memory_space<vmem>>, %arg1: memref<152x64xf32, #tpu.memory_space<vmem>>, %arg2: memref<24x128xf32, #tpu.memory_space<vmem>>, %arg3: memref<8x128xf32, #tpu.memory_space<vmem>>) attributes {dimension_semantics = [], scalar_prefetch = 0 : i64, scratch_operands = 0 : i64, tpu.core_type = #tpu.core_type<tc>} {
    %c0 = arith.constant 0 : index
    %c0_0 = arith.constant 0 : index
    %0 = vector.load %arg0[%c0, %c0_0] : memref<24x16xf32, #tpu.memory_space<vmem>>, vector<16x16xf32>
    %c16 = arith.constant 16 : index
    %c0_1 = arith.constant 0 : index
    %1 = vector.load %arg0[%c16, %c0_1] : memref<24x16xf32, #tpu.memory_space<vmem>>, vector<2x16xf32>
    %c18 = arith.constant 18 : index
    %c0_2 = arith.constant 0 : index
    %2 = vector.load %arg0[%c18, %c0_2] : memref<24x16xf32, #tpu.memory_space<vmem>>, vector<2x16xf32>
    %c20 = arith.constant 20 : index
    %c0_3 = arith.constant 0 : index
    %3 = vector.load %arg0[%c20, %c0_3] : memref<24x16xf32, #tpu.memory_space<vmem>>, vector<2x16xf32>
    %c22 = arith.constant 22 : index
    %c0_4 = arith.constant 0 : index
    %4 = vector.load %arg0[%c22, %c0_4] : memref<24x16xf32, #tpu.memory_space<vmem>>, vector<2x16xf32>
    %c0_5 = arith.constant 0 : index
    %c0_6 = arith.constant 0 : index
    %5 = vector.load %arg1[%c0_5, %c0_6] : memref<152x64xf32, #tpu.memory_space<vmem>>, vector<16x64xf32>
    %c16_7 = arith.constant 16 : index
    %c0_8 = arith.constant 0 : index
    %6 = vector.load %arg1[%c16_7, %c0_8] : memref<152x64xf32, #tpu.memory_space<vmem>>, vector<16x64xf32>
    %c32 = arith.constant 32 : index
    %c0_9 = arith.constant 0 : index
    %7 = vector.load %arg1[%c32, %c0_9] : memref<152x64xf32, #tpu.memory_space<vmem>>, vector<32x64xf32>
    %c64 = arith.constant 64 : index
    %c0_10 = arith.constant 0 : index
    %8 = vector.load %arg1[%c64, %c0_10] : memref<152x64xf32, #tpu.memory_space<vmem>>, vector<32x64xf32>
    %c96 = arith.constant 96 : index
    %c0_11 = arith.constant 0 : index
    %9 = vector.load %arg1[%c96, %c0_11] : memref<152x64xf32, #tpu.memory_space<vmem>>, vector<32x64xf32>
    %c128 = arith.constant 128 : index
    %c0_12 = arith.constant 0 : index
    %10 = vector.load %arg1[%c128, %c0_12] : memref<152x64xf32, #tpu.memory_space<vmem>>, vector<16x64xf32>
    %c144 = arith.constant 144 : index
    %c0_13 = arith.constant 0 : index
    %11 = vector.load %arg1[%c144, %c0_13] : memref<152x64xf32, #tpu.memory_space<vmem>>, vector<1x64xf32>
    %c145 = arith.constant 145 : index
    %c0_14 = arith.constant 0 : index
    %12 = vector.load %arg1[%c145, %c0_14] : memref<152x64xf32, #tpu.memory_space<vmem>>, vector<1x64xf32>
    %13 = vector.shape_cast %12 : vector<1x64xf32> to vector<1x64xf32>
    %14 = vector.broadcast %13 : vector<1x64xf32> to vector<2x64xf32>
    %c146 = arith.constant 146 : index
    %c0_15 = arith.constant 0 : index
    %15 = vector.load %arg1[%c146, %c0_15] : memref<152x64xf32, #tpu.memory_space<vmem>>, vector<1x64xf32>
    %16 = vector.shape_cast %15 : vector<1x64xf32> to vector<1x64xf32>
    %17 = vector.broadcast %16 : vector<1x64xf32> to vector<2x64xf32>
    %c147 = arith.constant 147 : index
    %c0_16 = arith.constant 0 : index
    %18 = vector.load %arg1[%c147, %c0_16] : memref<152x64xf32, #tpu.memory_space<vmem>>, vector<1x64xf32>
    %19 = vector.shape_cast %18 : vector<1x64xf32> to vector<1x64xf32>
    %20 = vector.broadcast %19 : vector<1x64xf32> to vector<2x64xf32>
    %c148 = arith.constant 148 : index
    %c0_17 = arith.constant 0 : index
    %21 = vector.load %arg1[%c148, %c0_17] : memref<152x64xf32, #tpu.memory_space<vmem>>, vector<1x64xf32>
    %cst = arith.constant dense<0.000000e+00> : vector<16x64xf32>
    %22 = tpu.matmul %0, %5, %cst {dimension_numbers = #tpu.dot_dimension_numbers<[1], [0], [0], [1], [0, 0, 1, 1], [], []>} : vector<16x16xf32>, vector<16x64xf32>, vector<16x64xf32> -> vector<16x64xf32>
    %23 = vector.broadcast %11 : vector<1x64xf32> to vector<16x64xf32>
    %24 = arith.addf %22, %23 : vector<16x64xf32>
    %25 = vector.extract_strided_slice %24 {offsets = [0, 0], sizes = [2, 64], strides = [1, 1]} : vector<16x64xf32> to vector<2x64xf32>
    %cst_18 = arith.constant dense<0.000000e+00> : vector<2x64xf32>
    %26 = tpu.matmul %1, %6, %cst_18 {dimension_numbers = #tpu.dot_dimension_numbers<[1], [0], [0], [1], [0, 0, 1, 1], [], []>} : vector<2x16xf32>, vector<16x64xf32>, vector<2x64xf32> -> vector<2x64xf32>
    %27 = arith.addf %25, %26 : vector<2x64xf32>
    %28 = vector.extract_strided_slice %27 {offsets = [0, 0], sizes = [2, 48], strides = [1, 1]} : vector<2x64xf32> to vector<2x48xf32>
    %29 = arith.negf %28 : vector<2x48xf32>
    %30 = math.exp %29 : vector<2x48xf32>
    %cst_19 = arith.constant 1.000000e+00 : f32
    %31 = vector.broadcast %cst_19 : f32 to vector<2x48xf32>
    %32 = arith.addf %31, %30 : vector<2x48xf32>
    %33 = arith.divf %31, %32 : vector<2x48xf32>
    %34 = vector.extract_strided_slice %27 {offsets = [0, 48], sizes = [2, 16], strides = [1, 1]} : vector<2x64xf32> to vector<2x16xf32>
    %35 = math.tanh %34 : vector<2x16xf32>
    %36 = vector.extract_strided_slice %33 {offsets = [0, 0], sizes = [2, 16], strides = [1, 1]} : vector<2x48xf32> to vector<2x16xf32>
    %37 = vector.extract_strided_slice %33 {offsets = [0, 16], sizes = [2, 16], strides = [1, 1]} : vector<2x48xf32> to vector<2x16xf32>
    %38 = vector.extract_strided_slice %33 {offsets = [0, 32], sizes = [2, 16], strides = [1, 1]} : vector<2x48xf32> to vector<2x16xf32>
    %39 = arith.mulf %37, %3 : vector<2x16xf32>
    %40 = arith.mulf %36, %35 : vector<2x16xf32>
    %41 = arith.addf %39, %40 : vector<2x16xf32>
    %42 = math.tanh %41 : vector<2x16xf32>
    %43 = arith.mulf %38, %42 : vector<2x16xf32>
    %44 = tpu.concatenate %43, %2 in 1 : vector<2x16xf32>, vector<2x16xf32> -> vector<2x32xf32>
    %cst_20 = arith.constant dense<0.000000e+00> : vector<2x64xf32>
    %45 = tpu.matmul %44, %7, %cst_20 {dimension_numbers = #tpu.dot_dimension_numbers<[1], [0], [0], [1], [0, 0, 1, 1], [], []>} : vector<2x32xf32>, vector<32x64xf32>, vector<2x64xf32> -> vector<2x64xf32>
    %46 = arith.addf %45, %14 : vector<2x64xf32>
    %47 = vector.extract_strided_slice %46 {offsets = [0, 0], sizes = [2, 48], strides = [1, 1]} : vector<2x64xf32> to vector<2x48xf32>
    %48 = arith.negf %47 : vector<2x48xf32>
    %49 = math.exp %48 : vector<2x48xf32>
    %cst_21 = arith.constant 1.000000e+00 : f32
    %50 = vector.broadcast %cst_21 : f32 to vector<2x48xf32>
    %51 = arith.addf %50, %49 : vector<2x48xf32>
    %52 = arith.divf %50, %51 : vector<2x48xf32>
    %53 = vector.extract_strided_slice %46 {offsets = [0, 48], sizes = [2, 16], strides = [1, 1]} : vector<2x64xf32> to vector<2x16xf32>
    %54 = math.tanh %53 : vector<2x16xf32>
    %55 = vector.extract_strided_slice %52 {offsets = [0, 0], sizes = [2, 16], strides = [1, 1]} : vector<2x48xf32> to vector<2x16xf32>
    %56 = vector.extract_strided_slice %52 {offsets = [0, 16], sizes = [2, 16], strides = [1, 1]} : vector<2x48xf32> to vector<2x16xf32>
    %57 = vector.extract_strided_slice %52 {offsets = [0, 32], sizes = [2, 16], strides = [1, 1]} : vector<2x48xf32> to vector<2x16xf32>
    %58 = arith.mulf %56, %4 : vector<2x16xf32>
    %59 = arith.mulf %55, %54 : vector<2x16xf32>
    %60 = arith.addf %58, %59 : vector<2x16xf32>
    %61 = math.tanh %60 : vector<2x16xf32>
    %62 = arith.mulf %57, %61 : vector<2x16xf32>
    %63 = vector.extract_strided_slice %24 {offsets = [2, 0], sizes = [2, 64], strides = [1, 1]} : vector<16x64xf32> to vector<2x64xf32>
    %cst_22 = arith.constant dense<0.000000e+00> : vector<2x64xf32>
    %64 = tpu.matmul %43, %6, %cst_22 {dimension_numbers = #tpu.dot_dimension_numbers<[1], [0], [0], [1], [0, 0, 1, 1], [], []>} : vector<2x16xf32>, vector<16x64xf32>, vector<2x64xf32> -> vector<2x64xf32>
    %65 = arith.addf %63, %64 : vector<2x64xf32>
    %66 = vector.extract_strided_slice %65 {offsets = [0, 0], sizes = [2, 48], strides = [1, 1]} : vector<2x64xf32> to vector<2x48xf32>
    %67 = arith.negf %66 : vector<2x48xf32>
    %68 = math.exp %67 : vector<2x48xf32>
    %cst_23 = arith.constant 1.000000e+00 : f32
    %69 = vector.broadcast %cst_23 : f32 to vector<2x48xf32>
    %70 = arith.addf %69, %68 : vector<2x48xf32>
    %71 = arith.divf %69, %70 : vector<2x48xf32>
    %72 = vector.extract_strided_slice %65 {offsets = [0, 48], sizes = [2, 16], strides = [1, 1]} : vector<2x64xf32> to vector<2x16xf32>
    %73 = math.tanh %72 : vector<2x16xf32>
    %74 = vector.extract_strided_slice %71 {offsets = [0, 0], sizes = [2, 16], strides = [1, 1]} : vector<2x48xf32> to vector<2x16xf32>
    %75 = vector.extract_strided_slice %71 {offsets = [0, 16], sizes = [2, 16], strides = [1, 1]} : vector<2x48xf32> to vector<2x16xf32>
    %76 = vector.extract_strided_slice %71 {offsets = [0, 32], sizes = [2, 16], strides = [1, 1]} : vector<2x48xf32> to vector<2x16xf32>
    %77 = arith.mulf %75, %41 : vector<2x16xf32>
    %78 = arith.mulf %74, %73 : vector<2x16xf32>
    %79 = arith.addf %77, %78 : vector<2x16xf32>
    %80 = math.tanh %79 : vector<2x16xf32>
    %81 = arith.mulf %76, %80 : vector<2x16xf32>
    %82 = tpu.concatenate %81, %62 in 1 : vector<2x16xf32>, vector<2x16xf32> -> vector<2x32xf32>
    %cst_24 = arith.constant dense<0.000000e+00> : vector<2x64xf32>
    %83 = tpu.matmul %82, %7, %cst_24 {dimension_numbers = #tpu.dot_dimension_numbers<[1], [0], [0], [1], [0, 0, 1, 1], [], []>} : vector<2x32xf32>, vector<32x64xf32>, vector<2x64xf32> -> vector<2x64xf32>
    %84 = arith.addf %83, %14 : vector<2x64xf32>
    %85 = vector.extract_strided_slice %84 {offsets = [0, 0], sizes = [2, 48], strides = [1, 1]} : vector<2x64xf32> to vector<2x48xf32>
    %86 = arith.negf %85 : vector<2x48xf32>
    %87 = math.exp %86 : vector<2x48xf32>
    %cst_25 = arith.constant 1.000000e+00 : f32
    %88 = vector.broadcast %cst_25 : f32 to vector<2x48xf32>
    %89 = arith.addf %88, %87 : vector<2x48xf32>
    %90 = arith.divf %88, %89 : vector<2x48xf32>
    %91 = vector.extract_strided_slice %84 {offsets = [0, 48], sizes = [2, 16], strides = [1, 1]} : vector<2x64xf32> to vector<2x16xf32>
    %92 = math.tanh %91 : vector<2x16xf32>
    %93 = vector.extract_strided_slice %90 {offsets = [0, 0], sizes = [2, 16], strides = [1, 1]} : vector<2x48xf32> to vector<2x16xf32>
    %94 = vector.extract_strided_slice %90 {offsets = [0, 16], sizes = [2, 16], strides = [1, 1]} : vector<2x48xf32> to vector<2x16xf32>
    %95 = vector.extract_strided_slice %90 {offsets = [0, 32], sizes = [2, 16], strides = [1, 1]} : vector<2x48xf32> to vector<2x16xf32>
    %96 = arith.mulf %94, %60 : vector<2x16xf32>
    %97 = arith.mulf %93, %92 : vector<2x16xf32>
    %98 = arith.addf %96, %97 : vector<2x16xf32>
    %99 = math.tanh %98 : vector<2x16xf32>
    %100 = arith.mulf %95, %99 : vector<2x16xf32>
    %101 = vector.extract_strided_slice %24 {offsets = [4, 0], sizes = [2, 64], strides = [1, 1]} : vector<16x64xf32> to vector<2x64xf32>
    %cst_26 = arith.constant dense<0.000000e+00> : vector<2x64xf32>
    %102 = tpu.matmul %81, %6, %cst_26 {dimension_numbers = #tpu.dot_dimension_numbers<[1], [0], [0], [1], [0, 0, 1, 1], [], []>} : vector<2x16xf32>, vector<16x64xf32>, vector<2x64xf32> -> vector<2x64xf32>
    %103 = arith.addf %101, %102 : vector<2x64xf32>
    %104 = vector.extract_strided_slice %103 {offsets = [0, 0], sizes = [2, 48], strides = [1, 1]} : vector<2x64xf32> to vector<2x48xf32>
    %105 = arith.negf %104 : vector<2x48xf32>
    %106 = math.exp %105 : vector<2x48xf32>
    %cst_27 = arith.constant 1.000000e+00 : f32
    %107 = vector.broadcast %cst_27 : f32 to vector<2x48xf32>
    %108 = arith.addf %107, %106 : vector<2x48xf32>
    %109 = arith.divf %107, %108 : vector<2x48xf32>
    %110 = vector.extract_strided_slice %103 {offsets = [0, 48], sizes = [2, 16], strides = [1, 1]} : vector<2x64xf32> to vector<2x16xf32>
    %111 = math.tanh %110 : vector<2x16xf32>
    %112 = vector.extract_strided_slice %109 {offsets = [0, 0], sizes = [2, 16], strides = [1, 1]} : vector<2x48xf32> to vector<2x16xf32>
    %113 = vector.extract_strided_slice %109 {offsets = [0, 16], sizes = [2, 16], strides = [1, 1]} : vector<2x48xf32> to vector<2x16xf32>
    %114 = vector.extract_strided_slice %109 {offsets = [0, 32], sizes = [2, 16], strides = [1, 1]} : vector<2x48xf32> to vector<2x16xf32>
    %115 = arith.mulf %113, %79 : vector<2x16xf32>
    %116 = arith.mulf %112, %111 : vector<2x16xf32>
    %117 = arith.addf %115, %116 : vector<2x16xf32>
    %118 = math.tanh %117 : vector<2x16xf32>
    %119 = arith.mulf %114, %118 : vector<2x16xf32>
    %120 = tpu.concatenate %119, %100 in 1 : vector<2x16xf32>, vector<2x16xf32> -> vector<2x32xf32>
    %cst_28 = arith.constant dense<0.000000e+00> : vector<2x64xf32>
    %121 = tpu.matmul %120, %7, %cst_28 {dimension_numbers = #tpu.dot_dimension_numbers<[1], [0], [0], [1], [0, 0, 1, 1], [], []>} : vector<2x32xf32>, vector<32x64xf32>, vector<2x64xf32> -> vector<2x64xf32>
    %122 = arith.addf %121, %14 : vector<2x64xf32>
    %123 = vector.extract_strided_slice %122 {offsets = [0, 0], sizes = [2, 48], strides = [1, 1]} : vector<2x64xf32> to vector<2x48xf32>
    %124 = arith.negf %123 : vector<2x48xf32>
    %125 = math.exp %124 : vector<2x48xf32>
    %cst_29 = arith.constant 1.000000e+00 : f32
    %126 = vector.broadcast %cst_29 : f32 to vector<2x48xf32>
    %127 = arith.addf %126, %125 : vector<2x48xf32>
    %128 = arith.divf %126, %127 : vector<2x48xf32>
    %129 = vector.extract_strided_slice %122 {offsets = [0, 48], sizes = [2, 16], strides = [1, 1]} : vector<2x64xf32> to vector<2x16xf32>
    %130 = math.tanh %129 : vector<2x16xf32>
    %131 = vector.extract_strided_slice %128 {offsets = [0, 0], sizes = [2, 16], strides = [1, 1]} : vector<2x48xf32> to vector<2x16xf32>
    %132 = vector.extract_strided_slice %128 {offsets = [0, 16], sizes = [2, 16], strides = [1, 1]} : vector<2x48xf32> to vector<2x16xf32>
    %133 = vector.extract_strided_slice %128 {offsets = [0, 32], sizes = [2, 16], strides = [1, 1]} : vector<2x48xf32> to vector<2x16xf32>
    %134 = arith.mulf %132, %98 : vector<2x16xf32>
    %135 = arith.mulf %131, %130 : vector<2x16xf32>
    %136 = arith.addf %134, %135 : vector<2x16xf32>
    %137 = math.tanh %136 : vector<2x16xf32>
    %138 = arith.mulf %133, %137 : vector<2x16xf32>
    %139 = vector.extract_strided_slice %24 {offsets = [6, 0], sizes = [2, 64], strides = [1, 1]} : vector<16x64xf32> to vector<2x64xf32>
    %cst_30 = arith.constant dense<0.000000e+00> : vector<2x64xf32>
    %140 = tpu.matmul %119, %6, %cst_30 {dimension_numbers = #tpu.dot_dimension_numbers<[1], [0], [0], [1], [0, 0, 1, 1], [], []>} : vector<2x16xf32>, vector<16x64xf32>, vector<2x64xf32> -> vector<2x64xf32>
    %141 = arith.addf %139, %140 : vector<2x64xf32>
    %142 = vector.extract_strided_slice %141 {offsets = [0, 0], sizes = [2, 48], strides = [1, 1]} : vector<2x64xf32> to vector<2x48xf32>
    %143 = arith.negf %142 : vector<2x48xf32>
    %144 = math.exp %143 : vector<2x48xf32>
    %cst_31 = arith.constant 1.000000e+00 : f32
    %145 = vector.broadcast %cst_31 : f32 to vector<2x48xf32>
    %146 = arith.addf %145, %144 : vector<2x48xf32>
    %147 = arith.divf %145, %146 : vector<2x48xf32>
    %148 = vector.extract_strided_slice %141 {offsets = [0, 48], sizes = [2, 16], strides = [1, 1]} : vector<2x64xf32> to vector<2x16xf32>
    %149 = math.tanh %148 : vector<2x16xf32>
    %150 = vector.extract_strided_slice %147 {offsets = [0, 0], sizes = [2, 16], strides = [1, 1]} : vector<2x48xf32> to vector<2x16xf32>
    %151 = vector.extract_strided_slice %147 {offsets = [0, 16], sizes = [2, 16], strides = [1, 1]} : vector<2x48xf32> to vector<2x16xf32>
    %152 = vector.extract_strided_slice %147 {offsets = [0, 32], sizes = [2, 16], strides = [1, 1]} : vector<2x48xf32> to vector<2x16xf32>
    %153 = arith.mulf %151, %117 : vector<2x16xf32>
    %154 = arith.mulf %150, %149 : vector<2x16xf32>
    %155 = arith.addf %153, %154 : vector<2x16xf32>
    %156 = math.tanh %155 : vector<2x16xf32>
    %157 = arith.mulf %152, %156 : vector<2x16xf32>
    %158 = tpu.concatenate %157, %138 in 1 : vector<2x16xf32>, vector<2x16xf32> -> vector<2x32xf32>
    %cst_32 = arith.constant dense<0.000000e+00> : vector<2x64xf32>
    %159 = tpu.matmul %158, %7, %cst_32 {dimension_numbers = #tpu.dot_dimension_numbers<[1], [0], [0], [1], [0, 0, 1, 1], [], []>} : vector<2x32xf32>, vector<32x64xf32>, vector<2x64xf32> -> vector<2x64xf32>
    %160 = arith.addf %159, %14 : vector<2x64xf32>
    %161 = vector.extract_strided_slice %160 {offsets = [0, 0], sizes = [2, 48], strides = [1, 1]} : vector<2x64xf32> to vector<2x48xf32>
    %162 = arith.negf %161 : vector<2x48xf32>
    %163 = math.exp %162 : vector<2x48xf32>
    %cst_33 = arith.constant 1.000000e+00 : f32
    %164 = vector.broadcast %cst_33 : f32 to vector<2x48xf32>
    %165 = arith.addf %164, %163 : vector<2x48xf32>
    %166 = arith.divf %164, %165 : vector<2x48xf32>
    %167 = vector.extract_strided_slice %160 {offsets = [0, 48], sizes = [2, 16], strides = [1, 1]} : vector<2x64xf32> to vector<2x16xf32>
    %168 = math.tanh %167 : vector<2x16xf32>
    %169 = vector.extract_strided_slice %166 {offsets = [0, 0], sizes = [2, 16], strides = [1, 1]} : vector<2x48xf32> to vector<2x16xf32>
    %170 = vector.extract_strided_slice %166 {offsets = [0, 16], sizes = [2, 16], strides = [1, 1]} : vector<2x48xf32> to vector<2x16xf32>
    %171 = vector.extract_strided_slice %166 {offsets = [0, 32], sizes = [2, 16], strides = [1, 1]} : vector<2x48xf32> to vector<2x16xf32>
    %172 = arith.mulf %170, %136 : vector<2x16xf32>
    %173 = arith.mulf %169, %168 : vector<2x16xf32>
    %174 = arith.addf %172, %173 : vector<2x16xf32>
    %175 = math.tanh %174 : vector<2x16xf32>
    %176 = arith.mulf %171, %175 : vector<2x16xf32>
    %177 = vector.extract_strided_slice %24 {offsets = [8, 0], sizes = [2, 64], strides = [1, 1]} : vector<16x64xf32> to vector<2x64xf32>
    %cst_34 = arith.constant dense<0.000000e+00> : vector<2x64xf32>
    %178 = tpu.matmul %157, %6, %cst_34 {dimension_numbers = #tpu.dot_dimension_numbers<[1], [0], [0], [1], [0, 0, 1, 1], [], []>} : vector<2x16xf32>, vector<16x64xf32>, vector<2x64xf32> -> vector<2x64xf32>
    %179 = arith.addf %177, %178 : vector<2x64xf32>
    %180 = vector.extract_strided_slice %179 {offsets = [0, 0], sizes = [2, 48], strides = [1, 1]} : vector<2x64xf32> to vector<2x48xf32>
    %181 = arith.negf %180 : vector<2x48xf32>
    %182 = math.exp %181 : vector<2x48xf32>
    %cst_35 = arith.constant 1.000000e+00 : f32
    %183 = vector.broadcast %cst_35 : f32 to vector<2x48xf32>
    %184 = arith.addf %183, %182 : vector<2x48xf32>
    %185 = arith.divf %183, %184 : vector<2x48xf32>
    %186 = vector.extract_strided_slice %179 {offsets = [0, 48], sizes = [2, 16], strides = [1, 1]} : vector<2x64xf32> to vector<2x16xf32>
    %187 = math.tanh %186 : vector<2x16xf32>
    %188 = vector.extract_strided_slice %185 {offsets = [0, 0], sizes = [2, 16], strides = [1, 1]} : vector<2x48xf32> to vector<2x16xf32>
    %189 = vector.extract_strided_slice %185 {offsets = [0, 16], sizes = [2, 16], strides = [1, 1]} : vector<2x48xf32> to vector<2x16xf32>
    %190 = vector.extract_strided_slice %185 {offsets = [0, 32], sizes = [2, 16], strides = [1, 1]} : vector<2x48xf32> to vector<2x16xf32>
    %191 = arith.mulf %189, %155 : vector<2x16xf32>
    %192 = arith.mulf %188, %187 : vector<2x16xf32>
    %193 = arith.addf %191, %192 : vector<2x16xf32>
    %194 = math.tanh %193 : vector<2x16xf32>
    %195 = arith.mulf %190, %194 : vector<2x16xf32>
    %196 = tpu.concatenate %195, %176 in 1 : vector<2x16xf32>, vector<2x16xf32> -> vector<2x32xf32>
    %cst_36 = arith.constant dense<0.000000e+00> : vector<2x64xf32>
    %197 = tpu.matmul %196, %7, %cst_36 {dimension_numbers = #tpu.dot_dimension_numbers<[1], [0], [0], [1], [0, 0, 1, 1], [], []>} : vector<2x32xf32>, vector<32x64xf32>, vector<2x64xf32> -> vector<2x64xf32>
    %198 = arith.addf %197, %14 : vector<2x64xf32>
    %199 = vector.extract_strided_slice %198 {offsets = [0, 0], sizes = [2, 48], strides = [1, 1]} : vector<2x64xf32> to vector<2x48xf32>
    %200 = arith.negf %199 : vector<2x48xf32>
    %201 = math.exp %200 : vector<2x48xf32>
    %cst_37 = arith.constant 1.000000e+00 : f32
    %202 = vector.broadcast %cst_37 : f32 to vector<2x48xf32>
    %203 = arith.addf %202, %201 : vector<2x48xf32>
    %204 = arith.divf %202, %203 : vector<2x48xf32>
    %205 = vector.extract_strided_slice %198 {offsets = [0, 48], sizes = [2, 16], strides = [1, 1]} : vector<2x64xf32> to vector<2x16xf32>
    %206 = math.tanh %205 : vector<2x16xf32>
    %207 = vector.extract_strided_slice %204 {offsets = [0, 0], sizes = [2, 16], strides = [1, 1]} : vector<2x48xf32> to vector<2x16xf32>
    %208 = vector.extract_strided_slice %204 {offsets = [0, 16], sizes = [2, 16], strides = [1, 1]} : vector<2x48xf32> to vector<2x16xf32>
    %209 = vector.extract_strided_slice %204 {offsets = [0, 32], sizes = [2, 16], strides = [1, 1]} : vector<2x48xf32> to vector<2x16xf32>
    %210 = arith.mulf %208, %174 : vector<2x16xf32>
    %211 = arith.mulf %207, %206 : vector<2x16xf32>
    %212 = arith.addf %210, %211 : vector<2x16xf32>
    %213 = math.tanh %212 : vector<2x16xf32>
    %214 = arith.mulf %209, %213 : vector<2x16xf32>
    %215 = vector.extract_strided_slice %24 {offsets = [10, 0], sizes = [2, 64], strides = [1, 1]} : vector<16x64xf32> to vector<2x64xf32>
    %cst_38 = arith.constant dense<0.000000e+00> : vector<2x64xf32>
    %216 = tpu.matmul %195, %6, %cst_38 {dimension_numbers = #tpu.dot_dimension_numbers<[1], [0], [0], [1], [0, 0, 1, 1], [], []>} : vector<2x16xf32>, vector<16x64xf32>, vector<2x64xf32> -> vector<2x64xf32>
    %217 = arith.addf %215, %216 : vector<2x64xf32>
    %218 = vector.extract_strided_slice %217 {offsets = [0, 0], sizes = [2, 48], strides = [1, 1]} : vector<2x64xf32> to vector<2x48xf32>
    %219 = arith.negf %218 : vector<2x48xf32>
    %220 = math.exp %219 : vector<2x48xf32>
    %cst_39 = arith.constant 1.000000e+00 : f32
    %221 = vector.broadcast %cst_39 : f32 to vector<2x48xf32>
    %222 = arith.addf %221, %220 : vector<2x48xf32>
    %223 = arith.divf %221, %222 : vector<2x48xf32>
    %224 = vector.extract_strided_slice %217 {offsets = [0, 48], sizes = [2, 16], strides = [1, 1]} : vector<2x64xf32> to vector<2x16xf32>
    %225 = math.tanh %224 : vector<2x16xf32>
    %226 = vector.extract_strided_slice %223 {offsets = [0, 0], sizes = [2, 16], strides = [1, 1]} : vector<2x48xf32> to vector<2x16xf32>
    %227 = vector.extract_strided_slice %223 {offsets = [0, 16], sizes = [2, 16], strides = [1, 1]} : vector<2x48xf32> to vector<2x16xf32>
    %228 = vector.extract_strided_slice %223 {offsets = [0, 32], sizes = [2, 16], strides = [1, 1]} : vector<2x48xf32> to vector<2x16xf32>
    %229 = arith.mulf %227, %193 : vector<2x16xf32>
    %230 = arith.mulf %226, %225 : vector<2x16xf32>
    %231 = arith.addf %229, %230 : vector<2x16xf32>
    %232 = math.tanh %231 : vector<2x16xf32>
    %233 = arith.mulf %228, %232 : vector<2x16xf32>
    %234 = tpu.concatenate %233, %214 in 1 : vector<2x16xf32>, vector<2x16xf32> -> vector<2x32xf32>
    %cst_40 = arith.constant dense<0.000000e+00> : vector<2x64xf32>
    %235 = tpu.matmul %234, %7, %cst_40 {dimension_numbers = #tpu.dot_dimension_numbers<[1], [0], [0], [1], [0, 0, 1, 1], [], []>} : vector<2x32xf32>, vector<32x64xf32>, vector<2x64xf32> -> vector<2x64xf32>
    %236 = arith.addf %235, %14 : vector<2x64xf32>
    %237 = vector.extract_strided_slice %236 {offsets = [0, 0], sizes = [2, 48], strides = [1, 1]} : vector<2x64xf32> to vector<2x48xf32>
    %238 = arith.negf %237 : vector<2x48xf32>
    %239 = math.exp %238 : vector<2x48xf32>
    %cst_41 = arith.constant 1.000000e+00 : f32
    %240 = vector.broadcast %cst_41 : f32 to vector<2x48xf32>
    %241 = arith.addf %240, %239 : vector<2x48xf32>
    %242 = arith.divf %240, %241 : vector<2x48xf32>
    %243 = vector.extract_strided_slice %236 {offsets = [0, 48], sizes = [2, 16], strides = [1, 1]} : vector<2x64xf32> to vector<2x16xf32>
    %244 = math.tanh %243 : vector<2x16xf32>
    %245 = vector.extract_strided_slice %242 {offsets = [0, 0], sizes = [2, 16], strides = [1, 1]} : vector<2x48xf32> to vector<2x16xf32>
    %246 = vector.extract_strided_slice %242 {offsets = [0, 16], sizes = [2, 16], strides = [1, 1]} : vector<2x48xf32> to vector<2x16xf32>
    %247 = vector.extract_strided_slice %242 {offsets = [0, 32], sizes = [2, 16], strides = [1, 1]} : vector<2x48xf32> to vector<2x16xf32>
    %248 = arith.mulf %246, %212 : vector<2x16xf32>
    %249 = arith.mulf %245, %244 : vector<2x16xf32>
    %250 = arith.addf %248, %249 : vector<2x16xf32>
    %251 = math.tanh %250 : vector<2x16xf32>
    %252 = arith.mulf %247, %251 : vector<2x16xf32>
    %253 = vector.extract_strided_slice %24 {offsets = [12, 0], sizes = [2, 64], strides = [1, 1]} : vector<16x64xf32> to vector<2x64xf32>
    %cst_42 = arith.constant dense<0.000000e+00> : vector<2x64xf32>
    %254 = tpu.matmul %233, %6, %cst_42 {dimension_numbers = #tpu.dot_dimension_numbers<[1], [0], [0], [1], [0, 0, 1, 1], [], []>} : vector<2x16xf32>, vector<16x64xf32>, vector<2x64xf32> -> vector<2x64xf32>
    %255 = arith.addf %253, %254 : vector<2x64xf32>
    %256 = vector.extract_strided_slice %255 {offsets = [0, 0], sizes = [2, 48], strides = [1, 1]} : vector<2x64xf32> to vector<2x48xf32>
    %257 = arith.negf %256 : vector<2x48xf32>
    %258 = math.exp %257 : vector<2x48xf32>
    %cst_43 = arith.constant 1.000000e+00 : f32
    %259 = vector.broadcast %cst_43 : f32 to vector<2x48xf32>
    %260 = arith.addf %259, %258 : vector<2x48xf32>
    %261 = arith.divf %259, %260 : vector<2x48xf32>
    %262 = vector.extract_strided_slice %255 {offsets = [0, 48], sizes = [2, 16], strides = [1, 1]} : vector<2x64xf32> to vector<2x16xf32>
    %263 = math.tanh %262 : vector<2x16xf32>
    %264 = vector.extract_strided_slice %261 {offsets = [0, 0], sizes = [2, 16], strides = [1, 1]} : vector<2x48xf32> to vector<2x16xf32>
    %265 = vector.extract_strided_slice %261 {offsets = [0, 16], sizes = [2, 16], strides = [1, 1]} : vector<2x48xf32> to vector<2x16xf32>
    %266 = vector.extract_strided_slice %261 {offsets = [0, 32], sizes = [2, 16], strides = [1, 1]} : vector<2x48xf32> to vector<2x16xf32>
    %267 = arith.mulf %265, %231 : vector<2x16xf32>
    %268 = arith.mulf %264, %263 : vector<2x16xf32>
    %269 = arith.addf %267, %268 : vector<2x16xf32>
    %270 = math.tanh %269 : vector<2x16xf32>
    %271 = arith.mulf %266, %270 : vector<2x16xf32>
    %272 = tpu.concatenate %271, %252 in 1 : vector<2x16xf32>, vector<2x16xf32> -> vector<2x32xf32>
    %cst_44 = arith.constant dense<0.000000e+00> : vector<2x64xf32>
    %273 = tpu.matmul %272, %7, %cst_44 {dimension_numbers = #tpu.dot_dimension_numbers<[1], [0], [0], [1], [0, 0, 1, 1], [], []>} : vector<2x32xf32>, vector<32x64xf32>, vector<2x64xf32> -> vector<2x64xf32>
    %274 = arith.addf %273, %14 : vector<2x64xf32>
    %275 = vector.extract_strided_slice %274 {offsets = [0, 0], sizes = [2, 48], strides = [1, 1]} : vector<2x64xf32> to vector<2x48xf32>
    %276 = arith.negf %275 : vector<2x48xf32>
    %277 = math.exp %276 : vector<2x48xf32>
    %cst_45 = arith.constant 1.000000e+00 : f32
    %278 = vector.broadcast %cst_45 : f32 to vector<2x48xf32>
    %279 = arith.addf %278, %277 : vector<2x48xf32>
    %280 = arith.divf %278, %279 : vector<2x48xf32>
    %281 = vector.extract_strided_slice %274 {offsets = [0, 48], sizes = [2, 16], strides = [1, 1]} : vector<2x64xf32> to vector<2x16xf32>
    %282 = math.tanh %281 : vector<2x16xf32>
    %283 = vector.extract_strided_slice %280 {offsets = [0, 0], sizes = [2, 16], strides = [1, 1]} : vector<2x48xf32> to vector<2x16xf32>
    %284 = vector.extract_strided_slice %280 {offsets = [0, 16], sizes = [2, 16], strides = [1, 1]} : vector<2x48xf32> to vector<2x16xf32>
    %285 = vector.extract_strided_slice %280 {offsets = [0, 32], sizes = [2, 16], strides = [1, 1]} : vector<2x48xf32> to vector<2x16xf32>
    %286 = arith.mulf %284, %250 : vector<2x16xf32>
    %287 = arith.mulf %283, %282 : vector<2x16xf32>
    %288 = arith.addf %286, %287 : vector<2x16xf32>
    %289 = math.tanh %288 : vector<2x16xf32>
    %290 = arith.mulf %285, %289 : vector<2x16xf32>
    %291 = vector.extract_strided_slice %24 {offsets = [14, 0], sizes = [2, 64], strides = [1, 1]} : vector<16x64xf32> to vector<2x64xf32>
    %cst_46 = arith.constant dense<0.000000e+00> : vector<2x64xf32>
    %292 = tpu.matmul %271, %6, %cst_46 {dimension_numbers = #tpu.dot_dimension_numbers<[1], [0], [0], [1], [0, 0, 1, 1], [], []>} : vector<2x16xf32>, vector<16x64xf32>, vector<2x64xf32> -> vector<2x64xf32>
    %293 = arith.addf %291, %292 : vector<2x64xf32>
    %294 = vector.extract_strided_slice %293 {offsets = [0, 0], sizes = [2, 48], strides = [1, 1]} : vector<2x64xf32> to vector<2x48xf32>
    %295 = arith.negf %294 : vector<2x48xf32>
    %296 = math.exp %295 : vector<2x48xf32>
    %cst_47 = arith.constant 1.000000e+00 : f32
    %297 = vector.broadcast %cst_47 : f32 to vector<2x48xf32>
    %298 = arith.addf %297, %296 : vector<2x48xf32>
    %299 = arith.divf %297, %298 : vector<2x48xf32>
    %300 = vector.extract_strided_slice %293 {offsets = [0, 48], sizes = [2, 16], strides = [1, 1]} : vector<2x64xf32> to vector<2x16xf32>
    %301 = math.tanh %300 : vector<2x16xf32>
    %302 = vector.extract_strided_slice %299 {offsets = [0, 0], sizes = [2, 16], strides = [1, 1]} : vector<2x48xf32> to vector<2x16xf32>
    %303 = vector.extract_strided_slice %299 {offsets = [0, 16], sizes = [2, 16], strides = [1, 1]} : vector<2x48xf32> to vector<2x16xf32>
    %304 = vector.extract_strided_slice %299 {offsets = [0, 32], sizes = [2, 16], strides = [1, 1]} : vector<2x48xf32> to vector<2x16xf32>
    %305 = arith.mulf %303, %269 : vector<2x16xf32>
    %306 = arith.mulf %302, %301 : vector<2x16xf32>
    %307 = arith.addf %305, %306 : vector<2x16xf32>
    %308 = math.tanh %307 : vector<2x16xf32>
    %309 = arith.mulf %304, %308 : vector<2x16xf32>
    %310 = tpu.concatenate %309, %290 in 1 : vector<2x16xf32>, vector<2x16xf32> -> vector<2x32xf32>
    %cst_48 = arith.constant dense<0.000000e+00> : vector<2x64xf32>
    %311 = tpu.matmul %310, %7, %cst_48 {dimension_numbers = #tpu.dot_dimension_numbers<[1], [0], [0], [1], [0, 0, 1, 1], [], []>} : vector<2x32xf32>, vector<32x64xf32>, vector<2x64xf32> -> vector<2x64xf32>
    %312 = arith.addf %311, %14 : vector<2x64xf32>
    %313 = vector.extract_strided_slice %312 {offsets = [0, 0], sizes = [2, 48], strides = [1, 1]} : vector<2x64xf32> to vector<2x48xf32>
    %314 = arith.negf %313 : vector<2x48xf32>
    %315 = math.exp %314 : vector<2x48xf32>
    %cst_49 = arith.constant 1.000000e+00 : f32
    %316 = vector.broadcast %cst_49 : f32 to vector<2x48xf32>
    %317 = arith.addf %316, %315 : vector<2x48xf32>
    %318 = arith.divf %316, %317 : vector<2x48xf32>
    %319 = vector.extract_strided_slice %312 {offsets = [0, 48], sizes = [2, 16], strides = [1, 1]} : vector<2x64xf32> to vector<2x16xf32>
    %320 = math.tanh %319 : vector<2x16xf32>
    %321 = vector.extract_strided_slice %318 {offsets = [0, 0], sizes = [2, 16], strides = [1, 1]} : vector<2x48xf32> to vector<2x16xf32>
    %322 = vector.extract_strided_slice %318 {offsets = [0, 16], sizes = [2, 16], strides = [1, 1]} : vector<2x48xf32> to vector<2x16xf32>
    %323 = vector.extract_strided_slice %318 {offsets = [0, 32], sizes = [2, 16], strides = [1, 1]} : vector<2x48xf32> to vector<2x16xf32>
    %324 = arith.mulf %322, %288 : vector<2x16xf32>
    %325 = arith.mulf %321, %320 : vector<2x16xf32>
    %326 = arith.addf %324, %325 : vector<2x16xf32>
    %327 = math.tanh %326 : vector<2x16xf32>
    %328 = arith.mulf %323, %327 : vector<2x16xf32>
    %329 = vector.extract_strided_slice %0 {offsets = [14, 0], sizes = [2, 16], strides = [1, 1]} : vector<16x16xf32> to vector<2x16xf32>
    %cst_50 = arith.constant dense<0.000000e+00> : vector<2x64xf32>
    %330 = tpu.matmul %329, %10, %cst_50 {dimension_numbers = #tpu.dot_dimension_numbers<[1], [0], [0], [1], [0, 0, 1, 1], [], []>} : vector<2x16xf32>, vector<16x64xf32>, vector<2x64xf32> -> vector<2x64xf32>
    %331 = vector.broadcast %21 : vector<1x64xf32> to vector<2x64xf32>
    %332 = arith.addf %330, %331 : vector<2x64xf32>
    %333 = vector.extract_strided_slice %332 {offsets = [0, 0], sizes = [2, 16], strides = [1, 1]} : vector<2x64xf32> to vector<2x16xf32>
    %334 = tpu.concatenate %333, %309 in 1 : vector<2x16xf32>, vector<2x16xf32> -> vector<2x32xf32>
    %cst_51 = arith.constant dense<0.000000e+00> : vector<2x64xf32>
    %335 = tpu.matmul %334, %8, %cst_51 {dimension_numbers = #tpu.dot_dimension_numbers<[1], [0], [0], [1], [0, 0, 1, 1], [], []>} : vector<2x32xf32>, vector<32x64xf32>, vector<2x64xf32> -> vector<2x64xf32>
    %336 = arith.addf %335, %17 : vector<2x64xf32>
    %337 = vector.extract_strided_slice %336 {offsets = [0, 0], sizes = [2, 48], strides = [1, 1]} : vector<2x64xf32> to vector<2x48xf32>
    %338 = arith.negf %337 : vector<2x48xf32>
    %339 = math.exp %338 : vector<2x48xf32>
    %cst_52 = arith.constant 1.000000e+00 : f32
    %340 = vector.broadcast %cst_52 : f32 to vector<2x48xf32>
    %341 = arith.addf %340, %339 : vector<2x48xf32>
    %342 = arith.divf %340, %341 : vector<2x48xf32>
    %343 = vector.extract_strided_slice %336 {offsets = [0, 48], sizes = [2, 16], strides = [1, 1]} : vector<2x64xf32> to vector<2x16xf32>
    %344 = math.tanh %343 : vector<2x16xf32>
    %345 = vector.extract_strided_slice %342 {offsets = [0, 0], sizes = [2, 16], strides = [1, 1]} : vector<2x48xf32> to vector<2x16xf32>
    %346 = vector.extract_strided_slice %342 {offsets = [0, 16], sizes = [2, 16], strides = [1, 1]} : vector<2x48xf32> to vector<2x16xf32>
    %347 = vector.extract_strided_slice %342 {offsets = [0, 32], sizes = [2, 16], strides = [1, 1]} : vector<2x48xf32> to vector<2x16xf32>
    %348 = arith.mulf %346, %307 : vector<2x16xf32>
    %349 = arith.mulf %345, %344 : vector<2x16xf32>
    %350 = arith.addf %348, %349 : vector<2x16xf32>
    %351 = math.tanh %350 : vector<2x16xf32>
    %352 = arith.mulf %347, %351 : vector<2x16xf32>
    %353 = tpu.concatenate %352, %328 in 1 : vector<2x16xf32>, vector<2x16xf32> -> vector<2x32xf32>
    %cst_53 = arith.constant dense<0.000000e+00> : vector<2x64xf32>
    %354 = tpu.matmul %353, %9, %cst_53 {dimension_numbers = #tpu.dot_dimension_numbers<[1], [0], [0], [1], [0, 0, 1, 1], [], []>} : vector<2x32xf32>, vector<32x64xf32>, vector<2x64xf32> -> vector<2x64xf32>
    %355 = arith.addf %354, %20 : vector<2x64xf32>
    %356 = vector.extract_strided_slice %355 {offsets = [0, 0], sizes = [2, 48], strides = [1, 1]} : vector<2x64xf32> to vector<2x48xf32>
    %357 = arith.negf %356 : vector<2x48xf32>
    %358 = math.exp %357 : vector<2x48xf32>
    %cst_54 = arith.constant 1.000000e+00 : f32
    %359 = vector.broadcast %cst_54 : f32 to vector<2x48xf32>
    %360 = arith.addf %359, %358 : vector<2x48xf32>
    %361 = arith.divf %359, %360 : vector<2x48xf32>
    %362 = vector.extract_strided_slice %355 {offsets = [0, 48], sizes = [2, 16], strides = [1, 1]} : vector<2x64xf32> to vector<2x16xf32>
    %363 = math.tanh %362 : vector<2x16xf32>
    %364 = vector.extract_strided_slice %361 {offsets = [0, 0], sizes = [2, 16], strides = [1, 1]} : vector<2x48xf32> to vector<2x16xf32>
    %365 = vector.extract_strided_slice %361 {offsets = [0, 16], sizes = [2, 16], strides = [1, 1]} : vector<2x48xf32> to vector<2x16xf32>
    %366 = vector.extract_strided_slice %361 {offsets = [0, 32], sizes = [2, 16], strides = [1, 1]} : vector<2x48xf32> to vector<2x16xf32>
    %367 = arith.mulf %365, %326 : vector<2x16xf32>
    %368 = arith.mulf %364, %363 : vector<2x16xf32>
    %369 = arith.addf %367, %368 : vector<2x16xf32>
    %370 = math.tanh %369 : vector<2x16xf32>
    %371 = arith.mulf %366, %370 : vector<2x16xf32>
    %372 = tpu.concatenate %371, %352 in 1 : vector<2x16xf32>, vector<2x16xf32> -> vector<2x32xf32>
    %cst_55 = arith.constant dense<0.000000e+00> : vector<2x64xf32>
    %373 = tpu.matmul %372, %8, %cst_55 {dimension_numbers = #tpu.dot_dimension_numbers<[1], [0], [0], [1], [0, 0, 1, 1], [], []>} : vector<2x32xf32>, vector<32x64xf32>, vector<2x64xf32> -> vector<2x64xf32>
    %374 = arith.addf %373, %17 : vector<2x64xf32>
    %375 = vector.extract_strided_slice %374 {offsets = [0, 0], sizes = [2, 48], strides = [1, 1]} : vector<2x64xf32> to vector<2x48xf32>
    %376 = arith.negf %375 : vector<2x48xf32>
    %377 = math.exp %376 : vector<2x48xf32>
    %cst_56 = arith.constant 1.000000e+00 : f32
    %378 = vector.broadcast %cst_56 : f32 to vector<2x48xf32>
    %379 = arith.addf %378, %377 : vector<2x48xf32>
    %380 = arith.divf %378, %379 : vector<2x48xf32>
    %381 = vector.extract_strided_slice %374 {offsets = [0, 48], sizes = [2, 16], strides = [1, 1]} : vector<2x64xf32> to vector<2x16xf32>
    %382 = math.tanh %381 : vector<2x16xf32>
    %383 = vector.extract_strided_slice %380 {offsets = [0, 0], sizes = [2, 16], strides = [1, 1]} : vector<2x48xf32> to vector<2x16xf32>
    %384 = vector.extract_strided_slice %380 {offsets = [0, 16], sizes = [2, 16], strides = [1, 1]} : vector<2x48xf32> to vector<2x16xf32>
    %385 = vector.extract_strided_slice %380 {offsets = [0, 32], sizes = [2, 16], strides = [1, 1]} : vector<2x48xf32> to vector<2x16xf32>
    %386 = arith.mulf %384, %350 : vector<2x16xf32>
    %387 = arith.mulf %383, %382 : vector<2x16xf32>
    %388 = arith.addf %386, %387 : vector<2x16xf32>
    %389 = math.tanh %388 : vector<2x16xf32>
    %390 = arith.mulf %385, %389 : vector<2x16xf32>
    %391 = tpu.concatenate %390, %371 in 1 : vector<2x16xf32>, vector<2x16xf32> -> vector<2x32xf32>
    %cst_57 = arith.constant dense<0.000000e+00> : vector<2x64xf32>
    %392 = tpu.matmul %391, %9, %cst_57 {dimension_numbers = #tpu.dot_dimension_numbers<[1], [0], [0], [1], [0, 0, 1, 1], [], []>} : vector<2x32xf32>, vector<32x64xf32>, vector<2x64xf32> -> vector<2x64xf32>
    %393 = arith.addf %392, %20 : vector<2x64xf32>
    %394 = vector.extract_strided_slice %393 {offsets = [0, 0], sizes = [2, 48], strides = [1, 1]} : vector<2x64xf32> to vector<2x48xf32>
    %395 = arith.negf %394 : vector<2x48xf32>
    %396 = math.exp %395 : vector<2x48xf32>
    %cst_58 = arith.constant 1.000000e+00 : f32
    %397 = vector.broadcast %cst_58 : f32 to vector<2x48xf32>
    %398 = arith.addf %397, %396 : vector<2x48xf32>
    %399 = arith.divf %397, %398 : vector<2x48xf32>
    %400 = vector.extract_strided_slice %393 {offsets = [0, 48], sizes = [2, 16], strides = [1, 1]} : vector<2x64xf32> to vector<2x16xf32>
    %401 = math.tanh %400 : vector<2x16xf32>
    %402 = vector.extract_strided_slice %399 {offsets = [0, 0], sizes = [2, 16], strides = [1, 1]} : vector<2x48xf32> to vector<2x16xf32>
    %403 = vector.extract_strided_slice %399 {offsets = [0, 16], sizes = [2, 16], strides = [1, 1]} : vector<2x48xf32> to vector<2x16xf32>
    %404 = vector.extract_strided_slice %399 {offsets = [0, 32], sizes = [2, 16], strides = [1, 1]} : vector<2x48xf32> to vector<2x16xf32>
    %405 = arith.mulf %403, %369 : vector<2x16xf32>
    %406 = arith.mulf %402, %401 : vector<2x16xf32>
    %407 = arith.addf %405, %406 : vector<2x16xf32>
    %408 = math.tanh %407 : vector<2x16xf32>
    %409 = arith.mulf %404, %408 : vector<2x16xf32>
    %410 = tpu.concatenate %409, %390 in 1 : vector<2x16xf32>, vector<2x16xf32> -> vector<2x32xf32>
    %cst_59 = arith.constant dense<0.000000e+00> : vector<2x64xf32>
    %411 = tpu.matmul %410, %8, %cst_59 {dimension_numbers = #tpu.dot_dimension_numbers<[1], [0], [0], [1], [0, 0, 1, 1], [], []>} : vector<2x32xf32>, vector<32x64xf32>, vector<2x64xf32> -> vector<2x64xf32>
    %412 = arith.addf %411, %17 : vector<2x64xf32>
    %413 = vector.extract_strided_slice %412 {offsets = [0, 0], sizes = [2, 48], strides = [1, 1]} : vector<2x64xf32> to vector<2x48xf32>
    %414 = arith.negf %413 : vector<2x48xf32>
    %415 = math.exp %414 : vector<2x48xf32>
    %cst_60 = arith.constant 1.000000e+00 : f32
    %416 = vector.broadcast %cst_60 : f32 to vector<2x48xf32>
    %417 = arith.addf %416, %415 : vector<2x48xf32>
    %418 = arith.divf %416, %417 : vector<2x48xf32>
    %419 = vector.extract_strided_slice %412 {offsets = [0, 48], sizes = [2, 16], strides = [1, 1]} : vector<2x64xf32> to vector<2x16xf32>
    %420 = math.tanh %419 : vector<2x16xf32>
    %421 = vector.extract_strided_slice %418 {offsets = [0, 0], sizes = [2, 16], strides = [1, 1]} : vector<2x48xf32> to vector<2x16xf32>
    %422 = vector.extract_strided_slice %418 {offsets = [0, 16], sizes = [2, 16], strides = [1, 1]} : vector<2x48xf32> to vector<2x16xf32>
    %423 = vector.extract_strided_slice %418 {offsets = [0, 32], sizes = [2, 16], strides = [1, 1]} : vector<2x48xf32> to vector<2x16xf32>
    %424 = arith.mulf %422, %388 : vector<2x16xf32>
    %425 = arith.mulf %421, %420 : vector<2x16xf32>
    %426 = arith.addf %424, %425 : vector<2x16xf32>
    %427 = math.tanh %426 : vector<2x16xf32>
    %428 = arith.mulf %423, %427 : vector<2x16xf32>
    %429 = tpu.concatenate %428, %409 in 1 : vector<2x16xf32>, vector<2x16xf32> -> vector<2x32xf32>
    %cst_61 = arith.constant dense<0.000000e+00> : vector<2x64xf32>
    %430 = tpu.matmul %429, %9, %cst_61 {dimension_numbers = #tpu.dot_dimension_numbers<[1], [0], [0], [1], [0, 0, 1, 1], [], []>} : vector<2x32xf32>, vector<32x64xf32>, vector<2x64xf32> -> vector<2x64xf32>
    %431 = arith.addf %430, %20 : vector<2x64xf32>
    %432 = vector.extract_strided_slice %431 {offsets = [0, 0], sizes = [2, 48], strides = [1, 1]} : vector<2x64xf32> to vector<2x48xf32>
    %433 = arith.negf %432 : vector<2x48xf32>
    %434 = math.exp %433 : vector<2x48xf32>
    %cst_62 = arith.constant 1.000000e+00 : f32
    %435 = vector.broadcast %cst_62 : f32 to vector<2x48xf32>
    %436 = arith.addf %435, %434 : vector<2x48xf32>
    %437 = arith.divf %435, %436 : vector<2x48xf32>
    %438 = vector.extract_strided_slice %431 {offsets = [0, 48], sizes = [2, 16], strides = [1, 1]} : vector<2x64xf32> to vector<2x16xf32>
    %439 = math.tanh %438 : vector<2x16xf32>
    %440 = vector.extract_strided_slice %437 {offsets = [0, 0], sizes = [2, 16], strides = [1, 1]} : vector<2x48xf32> to vector<2x16xf32>
    %441 = vector.extract_strided_slice %437 {offsets = [0, 16], sizes = [2, 16], strides = [1, 1]} : vector<2x48xf32> to vector<2x16xf32>
    %442 = vector.extract_strided_slice %437 {offsets = [0, 32], sizes = [2, 16], strides = [1, 1]} : vector<2x48xf32> to vector<2x16xf32>
    %443 = arith.mulf %441, %407 : vector<2x16xf32>
    %444 = arith.mulf %440, %439 : vector<2x16xf32>
    %445 = arith.addf %443, %444 : vector<2x16xf32>
    %446 = math.tanh %445 : vector<2x16xf32>
    %447 = arith.mulf %442, %446 : vector<2x16xf32>
    %448 = tpu.concatenate %447, %428 in 1 : vector<2x16xf32>, vector<2x16xf32> -> vector<2x32xf32>
    %cst_63 = arith.constant dense<0.000000e+00> : vector<2x64xf32>
    %449 = tpu.matmul %448, %8, %cst_63 {dimension_numbers = #tpu.dot_dimension_numbers<[1], [0], [0], [1], [0, 0, 1, 1], [], []>} : vector<2x32xf32>, vector<32x64xf32>, vector<2x64xf32> -> vector<2x64xf32>
    %450 = arith.addf %449, %17 : vector<2x64xf32>
    %451 = vector.extract_strided_slice %450 {offsets = [0, 0], sizes = [2, 48], strides = [1, 1]} : vector<2x64xf32> to vector<2x48xf32>
    %452 = arith.negf %451 : vector<2x48xf32>
    %453 = math.exp %452 : vector<2x48xf32>
    %cst_64 = arith.constant 1.000000e+00 : f32
    %454 = vector.broadcast %cst_64 : f32 to vector<2x48xf32>
    %455 = arith.addf %454, %453 : vector<2x48xf32>
    %456 = arith.divf %454, %455 : vector<2x48xf32>
    %457 = vector.extract_strided_slice %450 {offsets = [0, 48], sizes = [2, 16], strides = [1, 1]} : vector<2x64xf32> to vector<2x16xf32>
    %458 = math.tanh %457 : vector<2x16xf32>
    %459 = vector.extract_strided_slice %456 {offsets = [0, 0], sizes = [2, 16], strides = [1, 1]} : vector<2x48xf32> to vector<2x16xf32>
    %460 = vector.extract_strided_slice %456 {offsets = [0, 16], sizes = [2, 16], strides = [1, 1]} : vector<2x48xf32> to vector<2x16xf32>
    %461 = vector.extract_strided_slice %456 {offsets = [0, 32], sizes = [2, 16], strides = [1, 1]} : vector<2x48xf32> to vector<2x16xf32>
    %462 = arith.mulf %460, %426 : vector<2x16xf32>
    %463 = arith.mulf %459, %458 : vector<2x16xf32>
    %464 = arith.addf %462, %463 : vector<2x16xf32>
    %465 = math.tanh %464 : vector<2x16xf32>
    %466 = arith.mulf %461, %465 : vector<2x16xf32>
    %467 = tpu.concatenate %466, %447 in 1 : vector<2x16xf32>, vector<2x16xf32> -> vector<2x32xf32>
    %cst_65 = arith.constant dense<0.000000e+00> : vector<2x64xf32>
    %468 = tpu.matmul %467, %9, %cst_65 {dimension_numbers = #tpu.dot_dimension_numbers<[1], [0], [0], [1], [0, 0, 1, 1], [], []>} : vector<2x32xf32>, vector<32x64xf32>, vector<2x64xf32> -> vector<2x64xf32>
    %469 = arith.addf %468, %20 : vector<2x64xf32>
    %470 = vector.extract_strided_slice %469 {offsets = [0, 0], sizes = [2, 48], strides = [1, 1]} : vector<2x64xf32> to vector<2x48xf32>
    %471 = arith.negf %470 : vector<2x48xf32>
    %472 = math.exp %471 : vector<2x48xf32>
    %cst_66 = arith.constant 1.000000e+00 : f32
    %473 = vector.broadcast %cst_66 : f32 to vector<2x48xf32>
    %474 = arith.addf %473, %472 : vector<2x48xf32>
    %475 = arith.divf %473, %474 : vector<2x48xf32>
    %476 = vector.extract_strided_slice %469 {offsets = [0, 48], sizes = [2, 16], strides = [1, 1]} : vector<2x64xf32> to vector<2x16xf32>
    %477 = math.tanh %476 : vector<2x16xf32>
    %478 = vector.extract_strided_slice %475 {offsets = [0, 0], sizes = [2, 16], strides = [1, 1]} : vector<2x48xf32> to vector<2x16xf32>
    %479 = vector.extract_strided_slice %475 {offsets = [0, 16], sizes = [2, 16], strides = [1, 1]} : vector<2x48xf32> to vector<2x16xf32>
    %480 = vector.extract_strided_slice %475 {offsets = [0, 32], sizes = [2, 16], strides = [1, 1]} : vector<2x48xf32> to vector<2x16xf32>
    %481 = arith.mulf %479, %445 : vector<2x16xf32>
    %482 = arith.mulf %478, %477 : vector<2x16xf32>
    %483 = arith.addf %481, %482 : vector<2x16xf32>
    %484 = math.tanh %483 : vector<2x16xf32>
    %485 = arith.mulf %480, %484 : vector<2x16xf32>
    %486 = tpu.concatenate %371, %409, %447, %485 in 0 : vector<2x16xf32>, vector<2x16xf32>, vector<2x16xf32>, vector<2x16xf32> -> vector<8x16xf32>
    %c0_67 = arith.constant 0 : index
    %c0_68 = arith.constant 0 : index
    %487 = vector.load %arg2[%c0_67, %c0_68] : memref<24x128xf32, #tpu.memory_space<vmem>>, vector<16x128xf32>
    %cst_69 = arith.constant dense<0.000000e+00> : vector<8x128xf32>
    %488 = tpu.matmul %486, %487, %cst_69 {dimension_numbers = #tpu.dot_dimension_numbers<[1], [0], [0], [1], [0, 0, 1, 1], [], []>} : vector<8x16xf32>, vector<16x128xf32>, vector<8x128xf32> -> vector<8x128xf32>
    %c16_70 = arith.constant 16 : index
    %c0_71 = arith.constant 0 : index
    %489 = vector.load %arg2[%c16_70, %c0_71] : memref<24x128xf32, #tpu.memory_space<vmem>>, vector<1x128xf32>
    %490 = vector.broadcast %489 : vector<1x128xf32> to vector<8x128xf32>
    %491 = arith.addf %488, %490 : vector<8x128xf32>
    %c0_72 = arith.constant 0 : index
    %c0_73 = arith.constant 0 : index
    %492 = vector.load %arg3[%c0_72, %c0_73] : memref<8x128xf32, #tpu.memory_space<vmem>>, vector<8x128xf32>
    tpu.vector_store %arg3[%c0_72, %c0_73], %491 {strides = array<i32>} : memref<8x128xf32, #tpu.memory_space<vmem>>, vector<8x128xf32>,
    return
  }
}

</mosaic_0001>

<llo_original>
// kernel: seq2seq_forward.1
$region0: #{seq2seq_forward.1}
  #allocation0 [shape = 'u32[]', space=smem, size = 0x4, offset = 0x4, fixed_abs, tag = 'smem constant byte address 0x4 - core index']
  #allocation1 [shape = 'u32[144,128]{1,0:T(1,128)}', space=vmem, size = 0x12000, scoped, tag = 'internal scratch']
  %s0 = inlined_call_operand.vmem [shape: f32[24,16], index: 0, kind: input, shape index: {}]
  %s1 = inlined_call_operand.vmem [shape: f32[152,64], index: 1, kind: input, shape index: {}]
  %s2 = inlined_call_operand.vmem [shape: f32[24,128], index: 2, kind: input, shape index: {}]
  %s3 = inlined_call_operand.vmem [shape: f32[8,128], index: 3, kind: output, shape index: {}]
  %s4 = sld [smem:[#allocation0]]
  $region22: #{seq2seq_forward.1} parent=0
    _
  %s6 = ssub.s32 1, %s4
  %s7 = scalar_select 0, %s6, %s4
  // Predicated region
  $region2: #{seq2seq_forward.1} parent=0 // pred_check
    _
  $region3: #{seq2seq_forward.1} parent=0 // pred_check_branch
    %9 = sbr.rel (0) target = $region5
  $region4: #{seq2seq_forward.1} parent=0 // pred_region
    _
  $region5: #{seq2seq_forward.1} parent=0 // pred_fallthru
    _
  // Predicated region
  $region6: #{seq2seq_forward.1} parent=0 // pred_check
    _
  $region7: #{seq2seq_forward.1} parent=0 // pred_check_branch
    %11 = sbr.rel (0) target = $region9
  $region8: #{seq2seq_forward.1} parent=0 // pred_region
    _
  $region9: #{seq2seq_forward.1} parent=0 // pred_fallthru
    _
  // Predicated region
  $region10: #{seq2seq_forward.1} parent=0 // pred_check
    _
  $region11: #{seq2seq_forward.1} parent=0 // pred_check_branch
    %13 = sbr.rel (0) target = $region13
  $region12: #{seq2seq_forward.1} parent=0 // pred_region
    _
  $region13: #{seq2seq_forward.1} parent=0 // pred_fallthru
    _
  %v14 = vld [vmem:[%s0] sm:$0xff]
  %v15 = vld [vmem:[%s0 + $0x8] sm:$0xff]
  %v16 = vld [vmem:[%s0 + $0x10] sm:$0x3]
  %v17 = vld [vmem:[%s0 + $0x12] sm:$0x3]
  %v18 = vld [vmem:[%s0 + $0x14] sm:$0x3]
  %v19 = vld [vmem:[%s0 + $0x16] sm:$0x3]
  %v20 = vld [vmem:[%s1] sm:$0xff]
  %v21 = vld [vmem:[%s1 + $0x8] sm:$0xff]
  %v22 = vld [vmem:[%s1 + $0x10] sm:$0xff]
  %v23 = vld [vmem:[%s1 + $0x18] sm:$0xff]
  %v24 = vld [vmem:[%s1 + $0x20] sm:$0xff]
  %v25 = vld [vmem:[%s1 + $0x28] sm:$0xff]
  %v26 = vld [vmem:[%s1 + $0x30] sm:$0xff]
  %v27 = vld [vmem:[%s1 + $0x38] sm:$0xff]
  %v28 = vld [vmem:[%s1 + $0x40] sm:$0xff]
  %v29 = vld [vmem:[%s1 + $0x48] sm:$0xff]
  %v30 = vld [vmem:[%s1 + $0x50] sm:$0xff]
  %v31 = vld [vmem:[%s1 + $0x58] sm:$0xff]
  %v32 = vld [vmem:[%s1 + $0x60] sm:$0xff]
  %v33 = vld [vmem:[%s1 + $0x68] sm:$0xff]
  %v34 = vld [vmem:[%s1 + $0x70] sm:$0xff]
  %v35 = vld [vmem:[%s1 + $0x78] sm:$0xff]
  %v36 = vld [vmem:[%s1 + $0x80] sm:$0xff]
  %v37 = vld [vmem:[%s1 + $0x88] sm:$0xff]
  %v38 = vld [vmem:[%s1 + $0x90] sm:$0x1]
  %v39 = vld [vmem:[%s1 + $0x91] sm:$0x1]
  %v40 = vlaneseq
  %v41 = vshrl.u32 %v40, 7
  %v42 = vsub.s32 0, %v41
  %v43 = vrot.slane %v39, %v42
  %v44 = vld [vmem:[%s1 + $0x92] sm:$0x1]
  %v45 = vlaneseq
  %v46 = vshrl.u32 %v45, 7
  %v47 = vsub.s32 0, %v46
  %v48 = vrot.slane %v44, %v47
  %v49 = vld [vmem:[%s1 + $0x93] sm:$0x1]
  %v50 = vlaneseq
  %v51 = vshrl.u32 %v50, 7
  %v52 = vsub.s32 0, %v51
  %v53 = vrot.slane %v49, %v52
  %v54 = vld [vmem:[%s1 + $0x94] sm:$0x1]
  %v55 = vlaneseq
  %v56 = vshrl.u32 %v55, 7
  %v57 = vsub.s32 0, %v56
  %v58 = vrot.slane %v38, %v57
  %vm59 = vcmask 130048
  %v61 = vsel %vm59, %v14, 0
  %v64 = vsel %vm59, %v15, 0
  %66 = vmatprep.subr.mxu0 0.0
  %67 = vmatpush1.msra.mxu0 %v20
  %68 = vmatprep.subr.mxu0 0.0
  %69 = vmatpush1.msra.mxu0 %v21
  %70 = vmatprep.subr.mxu0 0.0
  %71 = vmatpush1.msra.mxu0 0.0
  %72 = vmatprep.subr.mxu0 0.0
  %73 = vmatpush1.msra.mxu0 0.0
  %74 = vmatprep.subr.mxu0 0.0
  %75 = vmatpush1.msra.mxu0 0.0
  %76 = vmatprep.subr.mxu0 0.0
  %77 = vmatpush1.msra.mxu0 0.0
  %78 = vmatprep.subr.mxu0 0.0
  %79 = vmatpush1.msra.mxu0 0.0
  %80 = vmatprep.subr.mxu0 0.0
  %81 = vmatpush1.msra.mxu0 0.0
  %82 = vmatprep.subr.mxu0 0.0
  %83 = vmatpush1.msra.mxu0 0.0
  %84 = vmatprep.subr.mxu0 0.0
  %85 = vmatpush1.msra.mxu0 0.0
  %86 = vmatprep.subr.mxu0 0.0
  %87 = vmatpush1.msra.mxu0 0.0
  %88 = vmatprep.subr.mxu0 0.0
  %89 = vmatpush1.msra.mxu0 0.0
  %90 = vmatprep.subr.mxu0 0.0
  %91 = vmatpush1.msra.mxu0 0.0
  %92 = vmatprep.subr.mxu0 0.0
  %93 = vmatpush1.msra.mxu0 0.0
  %94 = vmatprep.subr.mxu0 0.0
  %95 = vmatpush1.msra.mxu0 0.0
  %96 = vmatprep.subr.mxu0 0.0
  %97 = vmatpush1.msra.mxu0 0.0
  %98 = vmatprep.subr.mxu0 0.0
  %99 = vmatpush1.msra.mxu0 0.0
  %100 = vmatprep.subr.mxu0 0.0
  %101 = vmatpush1.msra.mxu0 0.0
  %102 = vmatprep.subr.mxu0 0.0
  %103 = vmatpush1.msra.mxu0 0.0
  %104 = vmatprep.subr.mxu0 0.0
  %105 = vmatpush1.msra.mxu0 0.0
  %106 = vmatprep.subr.mxu0 0.0
  %107 = vmatpush1.msra.mxu0 0.0
  %108 = vmatprep.subr.mxu0 0.0
  %109 = vmatpush1.msra.mxu0 0.0
  %110 = vmatprep.subr.mxu0 0.0
  %111 = vmatpush1.msra.mxu0 0.0
  %112 = vmatprep.subr.mxu0 0.0
  %113 = vmatpush1.msra.mxu0 0.0
  %114 = vmatprep.subr.mxu0 0.0
  %115 = vmatpush1.msra.mxu0 0.0
  %116 = vmatprep.subr.mxu0 0.0
  %117 = vmatpush1.msra.mxu0 0.0
  %118 = vmatprep.subr.mxu0 0.0
  %119 = vmatpush1.msra.mxu0 0.0
  %120 = vmatprep.subr.mxu0 0.0
  %121 = vmatpush1.msra.mxu0 0.0
  %122 = vmatprep.subr.mxu0 0.0
  %123 = vmatpush1.msra.mxu0 0.0
  %124 = vmatprep.subr.mxu0 0.0
  %125 = vmatpush1.msra.mxu0 0.0
  %126 = vmatprep.subr.mxu0 0.0
  %127 = vmatpush1.msra.mxu0 0.0
  %128 = vmatprep.subr.mxu0 0.0
  %129 = vmatpush1.msra.mxu0 0.0
  %130 = vmatprep.mubr.f32.mxu0 0.0
  %131 = vmatmul.mubr.f32.gmra.mrb[0].mxu0 %v61
  %v132 = vpop.f32.mrb[0].mxu0
  %v133 = vadd.f32 %v58, %v132
  %v134 = vpop.f32.mrb[0].mxu0
  %135 = vmatprep.mubr.f32.mxu0 0.0
  %136 = vmatmul.mubr.f32.gmra.mrb[0].mxu0 %v64
  %v137 = vpop.f32.mrb[0].mxu0
  %v138 = vadd.f32 %v58, %v137
  %v139 = vpop.f32.mrb[0].mxu0
  %140 = vdwg.mxu0
  %v142 = vsel %vm59, %v16, 0
  %144 = vmatprep.subr.mxu0 0.0
  %145 = vmatpush1.msra.mxu0 %v22
  %146 = vmatprep.subr.mxu0 0.0
  %147 = vmatpush1.msra.mxu0 %v23
  %148 = vmatprep.subr.mxu0 0.0
  %149 = vmatpush1.msra.mxu0 0.0
  %150 = vmatprep.subr.mxu0 0.0
  %151 = vmatpush1.msra.mxu0 0.0
  %152 = vmatprep.subr.mxu0 0.0
  %153 = vmatpush1.msra.mxu0 0.0
  %154 = vmatprep.subr.mxu0 0.0
  %155 = vmatpush1.msra.mxu0 0.0
  %156 = vmatprep.subr.mxu0 0.0
  %157 = vmatpush1.msra.mxu0 0.0
  %158 = vmatprep.subr.mxu0 0.0
  %159 = vmatpush1.msra.mxu0 0.0
  %160 = vmatprep.subr.mxu0 0.0
  %161 = vmatpush1.msra.mxu0 0.0
  %162 = vmatprep.subr.mxu0 0.0
  %163 = vmatpush1.msra.mxu0 0.0
  %164 = vmatprep.subr.mxu0 0.0
  %165 = vmatpush1.msra.mxu0 0.0
  %166 = vmatprep.subr.mxu0 0.0
  %167 = vmatpush1.msra.mxu0 0.0
  %168 = vmatprep.subr.mxu0 0.0
  %169 = vmatpush1.msra.mxu0 0.0
  %170 = vmatprep.subr.mxu0 0.0
  %171 = vmatpush1.msra.mxu0 0.0
  %172 = vmatprep.subr.mxu0 0.0
  %173 = vmatpush1.msra.mxu0 0.0
  %174 = vmatprep.subr.mxu0 0.0
  %175 = vmatpush1.msra.mxu0 0.0
  %176 = vmatprep.subr.mxu0 0.0
  %177 = vmatpush1.msra.mxu0 0.0
  %178 = vmatprep.subr.mxu0 0.0
  %179 = vmatpush1.msra.mxu0 0.0
  %180 = vmatprep.subr.mxu0 0.0
  %181 = vmatpush1.msra.mxu0 0.0
  %182 = vmatprep.subr.mxu0 0.0
  %183 = vmatpush1.msra.mxu0 0.0
  %184 = vmatprep.subr.mxu0 0.0
  %185 = vmatpush1.msra.mxu0 0.0
  %186 = vmatprep.subr.mxu0 0.0
  %187 = vmatpush1.msra.mxu0 0.0
  %188 = vmatprep.subr.mxu0 0.0
  %189 = vmatpush1.msra.mxu0 0.0
  %190 = vmatprep.subr.mxu0 0.0
  %191 = vmatpush1.msra.mxu0 0.0
  %192 = vmatprep.subr.mxu0 0.0
  %193 = vmatpush1.msra.mxu0 0.0
  %194 = vmatprep.subr.mxu0 0.0
  %195 = vmatpush1.msra.mxu0 0.0
  %196 = vmatprep.subr.mxu0 0.0
  %197 = vmatpush1.msra.mxu0 0.0
  %198 = vmatprep.subr.mxu0 0.0
  %199 = vmatpush1.msra.mxu0 0.0
  %200 = vmatprep.subr.mxu0 0.0
  %201 = vmatpush1.msra.mxu0 0.0
  %202 = vmatprep.subr.mxu0 0.0
  %203 = vmatpush1.msra.mxu0 0.0
  %204 = vmatprep.subr.mxu0 0.0
  %205 = vmatpush1.msra.mxu0 0.0
  %206 = vmatprep.subr.mxu0 0.0
  %207 = vmatpush1.msra.mxu0 0.0
  %208 = vmatprep.mubr.f32.mxu0 0.0
  %209 = vmatmul.mubr.f32.gmra.mrb[0].mxu0 %v142
  %v210 = vpop.f32.mrb[0].mxu0
  %v211 = vadd.f32 0.0, %v210
  %v212 = vpop.f32.mrb[0].mxu0
  %213 = vdwg.mxu0
  %v214 = vadd.f32 %v133, %v211
  %v215 = vxor.u32 %v214, 2147483648
  %v216 = vmul.f32 %v215, 1.442695
  %v217 = vpow.pop %v216
  %v218 = vadd.f32 %v217, 1.0
  %v219 = vrcp.pop %v218
  %v220 = vmul.f32 1.0, %v219
  %v221 = vtanh.pop %v214
  %223 = vrot.lane.b32.xlu0 %v18, 16
  %v224 = vpop.permute.xlu0 %223
  %v226 = vmul.f32 %v220, %v224
  %228 = vrot.lane.b32.xlu0 %v221, 80
  %v229 = vpop.permute.xlu0 %228
  %v231 = vmul.f32 %v220, %v229
  %233 = vrot.lane.b32.xlu0 %v231, 16
  %v234 = vpop.permute.xlu0 %233
  %v236 = vadd.f32 %v226, %v234
  %v237 = vtanh.pop %v236
  %239 = vrot.lane.b32.xlu0 %v237, 16
  %v240 = vpop.permute.xlu0 %239
  %v242 = vmul.f32 %v220, %v240
  %244 = vrot.lane.b32.xlu0 %v242, 96
  %v245 = vpop.permute.xlu0 %244
  %248 = vrot.lane.b32.xlu0 %v17, 16
  %v249 = vpop.permute.xlu0 %248
  %v251 = vsel %vm59, %v245, %v249
  %vm252 = vcmask 261120
  %v254 = vsel %vm252, %v251, 0
  %256 = vmatprep.subr.mxu0 0.0
  %257 = vmatpush1.msra.mxu0 %v24
  %258 = vmatprep.subr.mxu0 0.0
  %259 = vmatpush1.msra.mxu0 %v25
  %260 = vmatprep.subr.mxu0 0.0
  %261 = vmatpush1.msra.mxu0 %v26
  %262 = vmatprep.subr.mxu0 0.0
  %263 = vmatpush1.msra.mxu0 %v27
  %264 = vmatprep.subr.mxu0 0.0
  %265 = vmatpush1.msra.mxu0 0.0
  %266 = vmatprep.subr.mxu0 0.0
  %267 = vmatpush1.msra.mxu0 0.0
  %268 = vmatprep.subr.mxu0 0.0
  %269 = vmatpush1.msra.mxu0 0.0
  %270 = vmatprep.subr.mxu0 0.0
  %271 = vmatpush1.msra.mxu0 0.0
  %272 = vmatprep.subr.mxu0 0.0
  %273 = vmatpush1.msra.mxu0 0.0
  %274 = vmatprep.subr.mxu0 0.0
  %275 = vmatpush1.msra.mxu0 0.0
  %276 = vmatprep.subr.mxu0 0.0
  %277 = vmatpush1.msra.mxu0 0.0
  %278 = vmatprep.subr.mxu0 0.0
  %279 = vmatpush1.msra.mxu0 0.0
  %280 = vmatprep.subr.mxu0 0.0
  %281 = vmatpush1.msra.mxu0 0.0
  %282 = vmatprep.subr.mxu0 0.0
  %283 = vmatpush1.msra.mxu0 0.0
  %284 = vmatprep.subr.mxu0 0.0
  %285 = vmatpush1.msra.mxu0 0.0
  %286 = vmatprep.subr.mxu0 0.0
  %287 = vmatpush1.msra.mxu0 0.0
  %288 = vmatprep.subr.mxu0 0.0
  %289 = vmatpush1.msra.mxu0 0.0
  %290 = vmatprep.subr.mxu0 0.0
  %291 = vmatpush1.msra.mxu0 0.0
  %292 = vmatprep.subr.mxu0 0.0
  %293 = vmatpush1.msra.mxu0 0.0
  %294 = vmatprep.subr.mxu0 0.0
  %295 = vmatpush1.msra.mxu0 0.0
  %296 = vmatprep.subr.mxu0 0.0
  %297 = vmatpush1.msra.mxu0 0.0
  %298 = vmatprep.subr.mxu0 0.0
  %299 = vmatpush1.msra.mxu0 0.0
  %300 = vmatprep.subr.mxu0 0.0
  %301 = vmatpush1.msra.mxu0 0.0
  %302 = vmatprep.subr.mxu0 0.0
  %303 = vmatpush1.msra.mxu0 0.0
  %304 = vmatprep.subr.mxu0 0.0
  %305 = vmatpush1.msra.mxu0 0.0
  %306 = vmatprep.subr.mxu0 0.0
  %307 = vmatpush1.msra.mxu0 0.0
  %308 = vmatprep.subr.mxu0 0.0
  %309 = vmatpush1.msra.mxu0 0.0
  %310 = vmatprep.subr.mxu0 0.0
  %311 = vmatpush1.msra.mxu0 0.0
  %312 = vmatprep.subr.mxu0 0.0
  %313 = vmatpush1.msra.mxu0 0.0
  %314 = vmatprep.subr.mxu0 0.0
  %315 = vmatpush1.msra.mxu0 0.0
  %316 = vmatprep.subr.mxu0 0.0
  %317 = vmatpush1.msra.mxu0 0.0
  %318 = vmatprep.subr.mxu0 0.0
  %319 = vmatpush1.msra.mxu0 0.0
  %320 = vmatprep.mubr.f32.mxu0 0.0
  %321 = vmatmul.mubr.f32.gmra.mrb[0].mxu0 %v254
  %v322 = vpop.f32.mrb[0].mxu0
  %v323 = vadd.f32 %v43, %v322
  %v324 = vpop.f32.mrb[0].mxu0
  %325 = vdwg.mxu0
  %v326 = vxor.u32 %v323, 2147483648
  %v327 = vmul.f32 %v326, 1.442695
  %v328 = vpow.pop %v327
  %v329 = vadd.f32 %v328, 1.0
  %v330 = vrcp.pop %v329
  %v331 = vmul.f32 1.0, %v330
  %v332 = vtanh.pop %v323
  %334 = vrot.lane.b32.xlu0 %v19, 16
  %v335 = vpop.permute.xlu0 %334
  %v337 = vmul.f32 %v331, %v335
  %339 = vrot.lane.b32.xlu0 %v332, 80
  %v340 = vpop.permute.xlu0 %339
  %v342 = vmul.f32 %v331, %v340
  %344 = vrot.lane.b32.xlu0 %v342, 16
  %v345 = vpop.permute.xlu0 %344
  %v347 = vadd.f32 %v337, %v345
  %v348 = vtanh.pop %v347
  %350 = vrot.lane.b32.xlu0 %v348, 16
  %v351 = vpop.permute.xlu0 %350
  %v353 = vmul.f32 %v331, %v351
  %v354 = vsel %vm59, %v245, 0
  %356 = vmatprep.subr.mxu0 0.0
  %357 = vmatpush1.msra.mxu0 %v22
  %358 = vmatprep.subr.mxu0 0.0
  %359 = vmatpush1.msra.mxu0 %v23
  %360 = vmatprep.subr.mxu0 0.0
  %361 = vmatpush1.msra.mxu0 0.0
  %362 = vmatprep.subr.mxu0 0.0
  %363 = vmatpush1.msra.mxu0 0.0
  %364 = vmatprep.subr.mxu0 0.0
  %365 = vmatpush1.msra.mxu0 0.0
  %366 = vmatprep.subr.mxu0 0.0
  %367 = vmatpush1.msra.mxu0 0.0
  %368 = vmatprep.subr.mxu0 0.0
  %369 = vmatpush1.msra.mxu0 0.0
  %370 = vmatprep.subr.mxu0 0.0
  %371 = vmatpush1.msra.mxu0 0.0
  %372 = vmatprep.subr.mxu0 0.0
  %373 = vmatpush1.msra.mxu0 0.0
  %374 = vmatprep.subr.mxu0 0.0
  %375 = vmatpush1.msra.mxu0 0.0
  %376 = vmatprep.subr.mxu0 0.0
  %377 = vmatpush1.msra.mxu0 0.0
  %378 = vmatprep.subr.mxu0 0.0
  %379 = vmatpush1.msra.mxu0 0.0
  %380 = vmatprep.subr.mxu0 0.0
  %381 = vmatpush1.msra.mxu0 0.0
  %382 = vmatprep.subr.mxu0 0.0
  %383 = vmatpush1.msra.mxu0 0.0
  %384 = vmatprep.subr.mxu0 0.0
  %385 = vmatpush1.msra.mxu0 0.0
  %386 = vmatprep.subr.mxu0 0.0
  %387 = vmatpush1.msra.mxu0 0.0
  %388 = vmatprep.subr.mxu0 0.0
  %389 = vmatpush1.msra.mxu0 0.0
  %390 = vmatprep.subr.mxu0 0.0
  %391 = vmatpush1.msra.mxu0 0.0
  %392 = vmatprep.subr.mxu0 0.0
  %393 = vmatpush1.msra.mxu0 0.0
  %394 = vmatprep.subr.mxu0 0.0
  %395 = vmatpush1.msra.mxu0 0.0
  %396 = vmatprep.subr.mxu0 0.0
  %397 = vmatpush1.msra.mxu0 0.0
  %398 = vmatprep.subr.mxu0 0.0
  %399 = vmatpush1.msra.mxu0 0.0
  %400 = vmatprep.subr.mxu0 0.0
  %401 = vmatpush1.msra.mxu0 0.0
  %402 = vmatprep.subr.mxu0 0.0
  %403 = vmatpush1.msra.mxu0 0.0
  %404 = vmatprep.subr.mxu0 0.0
  %405 = vmatpush1.msra.mxu0 0.0
  %406 = vmatprep.subr.mxu0 0.0
  %407 = vmatpush1.msra.mxu0 0.0
  %408 = vmatprep.subr.mxu0 0.0
  %409 = vmatpush1.msra.mxu0 0.0
  %410 = vmatprep.subr.mxu0 0.0
  %411 = vmatpush1.msra.mxu0 0.0
  %412 = vmatprep.subr.mxu0 0.0
  %413 = vmatpush1.msra.mxu0 0.0
  %414 = vmatprep.subr.mxu0 0.0
  %415 = vmatpush1.msra.mxu0 0.0
  %416 = vmatprep.subr.mxu0 0.0
  %417 = vmatpush1.msra.mxu0 0.0
  %418 = vmatprep.subr.mxu0 0.0
  %419 = vmatpush1.msra.mxu0 0.0
  %420 = vmatprep.mubr.f32.mxu0 0.0
  %421 = vmatmul.mubr.f32.gmra.mrb[0].mxu0 %v354
  %v422 = vpop.f32.mrb[0].mxu0
  %v423 = vadd.f32 0.0, %v422
  %v424 = vpop.f32.mrb[0].mxu0
  %425 = vdwg.mxu0
  %v427 = vrot.slane %v423, 6
  %v429 = vadd.f32 %v133, %v427
  %v430 = vxor.u32 %v429, 2147483648
  %v431 = vmul.f32 %v430, 1.442695
  %v432 = vpow.pop %v431
  %v433 = vadd.f32 %v432, 1.0
  %v434 = vrcp.pop %v433
  %v435 = vmul.f32 1.0, %v434
  %v436 = vtanh.pop %v429
  %v438 = vrot.slane %v236, 6
  %v440 = vmul.f32 %v435, %v438
  %442 = vrot.lane.b32.xlu0 %v436, 80
  %v443 = vpop.permute.xlu0 %442
  %v445 = vmul.f32 %v435, %v443
  %447 = vrot.lane.b32.xlu0 %v445, 16
  %v448 = vpop.permute.xlu0 %447
  %v450 = vadd.f32 %v440, %v448
  %v451 = vtanh.pop %v450
  %453 = vrot.lane.b32.xlu0 %v451, 16
  %v454 = vpop.permute.xlu0 %453
  %v456 = vmul.f32 %v435, %v454
  %458 = vrot.lane.b32.xlu0 %v456, 96
  %v459 = vpop.permute.xlu0 %458
  %v462 = vrot.slane %v353, 6
  %463 = vrot.lane.b32.xlu0 %v462, 112
  %v464 = vpop.permute.xlu0 %463
  %v466 = vsel %vm59, %v459, %v464
  %v468 = vrot.slane %v466, 2
  %v469 = vsel %vm252, %v468, 0
  %471 = vmatprep.subr.mxu0 0.0
  %472 = vmatpush1.msra.mxu0 %v24
  %473 = vmatprep.subr.mxu0 0.0
  %474 = vmatpush1.msra.mxu0 %v25
  %475 = vmatprep.subr.mxu0 0.0
  %476 = vmatpush1.msra.mxu0 %v26
  %477 = vmatprep.subr.mxu0 0.0
  %478 = vmatpush1.msra.mxu0 %v27
  %479 = vmatprep.subr.mxu0 0.0
  %480 = vmatpush1.msra.mxu0 0.0
  %481 = vmatprep.subr.mxu0 0.0
  %482 = vmatpush1.msra.mxu0 0.0
  %483 = vmatprep.subr.mxu0 0.0
  %484 = vmatpush1.msra.mxu0 0.0
  %485 = vmatprep.subr.mxu0 0.0
  %486 = vmatpush1.msra.mxu0 0.0
  %487 = vmatprep.subr.mxu0 0.0
  %488 = vmatpush1.msra.mxu0 0.0
  %489 = vmatprep.subr.mxu0 0.0
  %490 = vmatpush1.msra.mxu0 0.0
  %491 = vmatprep.subr.mxu0 0.0
  %492 = vmatpush1.msra.mxu0 0.0
  %493 = vmatprep.subr.mxu0 0.0
  %494 = vmatpush1.msra.mxu0 0.0
  %495 = vmatprep.subr.mxu0 0.0
  %496 = vmatpush1.msra.mxu0 0.0
  %497 = vmatprep.subr.mxu0 0.0
  %498 = vmatpush1.msra.mxu0 0.0
  %499 = vmatprep.subr.mxu0 0.0
  %500 = vmatpush1.msra.mxu0 0.0
  %501 = vmatprep.subr.mxu0 0.0
  %502 = vmatpush1.msra.mxu0 0.0
  %503 = vmatprep.subr.mxu0 0.0
  %504 = vmatpush1.msra.mxu0 0.0
  %505 = vmatprep.subr.mxu0 0.0
  %506 = vmatpush1.msra.mxu0 0.0
  %507 = vmatprep.subr.mxu0 0.0
  %508 = vmatpush1.msra.mxu0 0.0
  %509 = vmatprep.subr.mxu0 0.0
  %510 = vmatpush1.msra.mxu0 0.0
  %511 = vmatprep.subr.mxu0 0.0
  %512 = vmatpush1.msra.mxu0 0.0
  %513 = vmatprep.subr.mxu0 0.0
  %514 = vmatpush1.msra.mxu0 0.0
  %515 = vmatprep.subr.mxu0 0.0
  %516 = vmatpush1.msra.mxu0 0.0
  %517 = vmatprep.subr.mxu0 0.0
  %518 = vmatpush1.msra.mxu0 0.0
  %519 = vmatprep.subr.mxu0 0.0
  %520 = vmatpush1.msra.mxu0 0.0
  %521 = vmatprep.subr.mxu0 0.0
  %522 = vmatpush1.msra.mxu0 0.0
  %523 = vmatprep.subr.mxu0 0.0
  %524 = vmatpush1.msra.mxu0 0.0
  %525 = vmatprep.subr.mxu0 0.0
  %526 = vmatpush1.msra.mxu0 0.0
  %527 = vmatprep.subr.mxu0 0.0
  %528 = vmatpush1.msra.mxu0 0.0
  %529 = vmatprep.subr.mxu0 0.0
  %530 = vmatpush1.msra.mxu0 0.0
  %531 = vmatprep.subr.mxu0 0.0
  %532 = vmatpush1.msra.mxu0 0.0
  %533 = vmatprep.subr.mxu0 0.0
  %534 = vmatpush1.msra.mxu0 0.0
  %535 = vmatprep.mubr.f32.mxu0 0.0
  %536 = vmatmul.mubr.f32.gmra.mrb[0].mxu0 %v469
  %v537 = vpop.f32.mrb[0].mxu0
  %v538 = vadd.f32 %v43, %v537
  %v539 = vpop.f32.mrb[0].mxu0
  %540 = vdwg.mxu0
  %v541 = vxor.u32 %v538, 2147483648
  %v542 = vmul.f32 %v541, 1.442695
  %v543 = vpow.pop %v542
  %v544 = vadd.f32 %v543, 1.0
  %v545 = vrcp.pop %v544
  %v546 = vmul.f32 1.0, %v545
  %v547 = vtanh.pop %v538
  %v548 = vmul.f32 %v546, %v347
  %550 = vrot.lane.b32.xlu0 %v547, 80
  %v551 = vpop.permute.xlu0 %550
  %v553 = vmul.f32 %v546, %v551
  %555 = vrot.lane.b32.xlu0 %v553, 16
  %v556 = vpop.permute.xlu0 %555
  %v558 = vadd.f32 %v548, %v556
  %v559 = vtanh.pop %v558
  %561 = vrot.lane.b32.xlu0 %v559, 16
  %v562 = vpop.permute.xlu0 %561
  %v564 = vmul.f32 %v546, %v562
  %v565 = vrot.slane %v456, 2
  %566 = vrot.lane.b32.xlu0 %v565, 96
  %v567 = vpop.permute.xlu0 %566
  %v568 = vsel %vm59, %v567, 0
  %570 = vmatprep.subr.mxu0 0.0
  %571 = vmatpush1.msra.mxu0 %v22
  %572 = vmatprep.subr.mxu0 0.0
  %573 = vmatpush1.msra.mxu0 %v23
  %574 = vmatprep.subr.mxu0 0.0
  %575 = vmatpush1.msra.mxu0 0.0
  %576 = vmatprep.subr.mxu0 0.0
  %577 = vmatpush1.msra.mxu0 0.0
  %578 = vmatprep.subr.mxu0 0.0
  %579 = vmatpush1.msra.mxu0 0.0
  %580 = vmatprep.subr.mxu0 0.0
  %581 = vmatpush1.msra.mxu0 0.0
  %582 = vmatprep.subr.mxu0 0.0
  %583 = vmatpush1.msra.mxu0 0.0
  %584 = vmatprep.subr.mxu0 0.0
  %585 = vmatpush1.msra.mxu0 0.0
  %586 = vmatprep.subr.mxu0 0.0
  %587 = vmatpush1.msra.mxu0 0.0
  %588 = vmatprep.subr.mxu0 0.0
  %589 = vmatpush1.msra.mxu0 0.0
  %590 = vmatprep.subr.mxu0 0.0
  %591 = vmatpush1.msra.mxu0 0.0
  %592 = vmatprep.subr.mxu0 0.0
  %593 = vmatpush1.msra.mxu0 0.0
  %594 = vmatprep.subr.mxu0 0.0
  %595 = vmatpush1.msra.mxu0 0.0
  %596 = vmatprep.subr.mxu0 0.0
  %597 = vmatpush1.msra.mxu0 0.0
  %598 = vmatprep.subr.mxu0 0.0
  %599 = vmatpush1.msra.mxu0 0.0
  %600 = vmatprep.subr.mxu0 0.0
  %601 = vmatpush1.msra.mxu0 0.0
  %602 = vmatprep.subr.mxu0 0.0
  %603 = vmatpush1.msra.mxu0 0.0
  %604 = vmatprep.subr.mxu0 0.0
  %605 = vmatpush1.msra.mxu0 0.0
  %606 = vmatprep.subr.mxu0 0.0
  %607 = vmatpush1.msra.mxu0 0.0
  %608 = vmatprep.subr.mxu0 0.0
  %609 = vmatpush1.msra.mxu0 0.0
  %610 = vmatprep.subr.mxu0 0.0
  %611 = vmatpush1.msra.mxu0 0.0
  %612 = vmatprep.subr.mxu0 0.0
  %613 = vmatpush1.msra.mxu0 0.0
  %614 = vmatprep.subr.mxu0 0.0
  %615 = vmatpush1.msra.mxu0 0.0
  %616 = vmatprep.subr.mxu0 0.0
  %617 = vmatpush1.msra.mxu0 0.0
  %618 = vmatprep.subr.mxu0 0.0
  %619 = vmatpush1.msra.mxu0 0.0
  %620 = vmatprep.subr.mxu0 0.0
  %621 = vmatpush1.msra.mxu0 0.0
  %622 = vmatprep.subr.mxu0 0.0
  %623 = vmatpush1.msra.mxu0 0.0
  %624 = vmatprep.subr.mxu0 0.0
  %625 = vmatpush1.msra.mxu0 0.0
  %626 = vmatprep.subr.mxu0 0.0
  %627 = vmatpush1.msra.mxu0 0.0
  %628 = vmatprep.subr.mxu0 0.0
  %629 = vmatpush1.msra.mxu0 0.0
  %630 = vmatprep.subr.mxu0 0.0
  %631 = vmatpush1.msra.mxu0 0.0
  %632 = vmatprep.subr.mxu0 0.0
  %633 = vmatpush1.msra.mxu0 0.0
  %634 = vmatprep.mubr.f32.mxu0 0.0
  %635 = vmatmul.mubr.f32.gmra.mrb[0].mxu0 %v568
  %v636 = vpop.f32.mrb[0].mxu0
  %v637 = vadd.f32 0.0, %v636
  %v638 = vpop.f32.mrb[0].mxu0
  %639 = vdwg.mxu0
  %v641 = vrot.slane %v637, 4
  %v643 = vadd.f32 %v133, %v641
  %v644 = vxor.u32 %v643, 2147483648
  %v645 = vmul.f32 %v644, 1.442695
  %v646 = vpow.pop %v645
  %v647 = vadd.f32 %v646, 1.0
  %v648 = vrcp.pop %v647
  %v649 = vmul.f32 1.0, %v648
  %v650 = vtanh.pop %v643
  %v652 = vrot.slane %v450, 6
  %v654 = vmul.f32 %v649, %v652
  %656 = vrot.lane.b32.xlu0 %v650, 80
  %v657 = vpop.permute.xlu0 %656
  %v659 = vmul.f32 %v649, %v657
  %661 = vrot.lane.b32.xlu0 %v659, 16
  %v662 = vpop.permute.xlu0 %661
  %v664 = vadd.f32 %v654, %v662
  %v665 = vtanh.pop %v664
  %667 = vrot.lane.b32.xlu0 %v665, 16
  %v668 = vpop.permute.xlu0 %667
  %v670 = vmul.f32 %v649, %v668
  %672 = vrot.lane.b32.xlu0 %v670, 96
  %v673 = vpop.permute.xlu0 %672
  %v676 = vrot.slane %v564, 4
  %677 = vrot.lane.b32.xlu0 %v676, 112
  %v678 = vpop.permute.xlu0 %677
  %v680 = vsel %vm59, %v673, %v678
  %v682 = vrot.slane %v680, 4
  %v683 = vsel %vm252, %v682, 0
  %685 = vmatprep.subr.mxu0 0.0
  %686 = vmatpush1.msra.mxu0 %v24
  %687 = vmatprep.subr.mxu0 0.0
  %688 = vmatpush1.msra.mxu0 %v25
  %689 = vmatprep.subr.mxu0 0.0
  %690 = vmatpush1.msra.mxu0 %v26
  %691 = vmatprep.subr.mxu0 0.0
  %692 = vmatpush1.msra.mxu0 %v27
  %693 = vmatprep.subr.mxu0 0.0
  %694 = vmatpush1.msra.mxu0 0.0
  %695 = vmatprep.subr.mxu0 0.0
  %696 = vmatpush1.msra.mxu0 0.0
  %697 = vmatprep.subr.mxu0 0.0
  %698 = vmatpush1.msra.mxu0 0.0
  %699 = vmatprep.subr.mxu0 0.0
  %700 = vmatpush1.msra.mxu0 0.0
  %701 = vmatprep.subr.mxu0 0.0
  %702 = vmatpush1.msra.mxu0 0.0
  %703 = vmatprep.subr.mxu0 0.0
  %704 = vmatpush1.msra.mxu0 0.0
  %705 = vmatprep.subr.mxu0 0.0
  %706 = vmatpush1.msra.mxu0 0.0
  %707 = vmatprep.subr.mxu0 0.0
  %708 = vmatpush1.msra.mxu0 0.0
  %709 = vmatprep.subr.mxu0 0.0
  %710 = vmatpush1.msra.mxu0 0.0
  %711 = vmatprep.subr.mxu0 0.0
  %712 = vmatpush1.msra.mxu0 0.0
  %713 = vmatprep.subr.mxu0 0.0
  %714 = vmatpush1.msra.mxu0 0.0
  %715 = vmatprep.subr.mxu0 0.0
  %716 = vmatpush1.msra.mxu0 0.0
  %717 = vmatprep.subr.mxu0 0.0
  %718 = vmatpush1.msra.mxu0 0.0
  %719 = vmatprep.subr.mxu0 0.0
  %720 = vmatpush1.msra.mxu0 0.0
  %721 = vmatprep.subr.mxu0 0.0
  %722 = vmatpush1.msra.mxu0 0.0
  %723 = vmatprep.subr.mxu0 0.0
  %724 = vmatpush1.msra.mxu0 0.0
  %725 = vmatprep.subr.mxu0 0.0
  %726 = vmatpush1.msra.mxu0 0.0
  %727 = vmatprep.subr.mxu0 0.0
  %728 = vmatpush1.msra.mxu0 0.0
  %729 = vmatprep.subr.mxu0 0.0
  %730 = vmatpush1.msra.mxu0 0.0
  %731 = vmatprep.subr.mxu0 0.0
  %732 = vmatpush1.msra.mxu0 0.0
  %733 = vmatprep.subr.mxu0 0.0
  %734 = vmatpush1.msra.mxu0 0.0
  %735 = vmatprep.subr.mxu0 0.0
  %736 = vmatpush1.msra.mxu0 0.0
  %737 = vmatprep.subr.mxu0 0.0
  %738 = vmatpush1.msra.mxu0 0.0
  %739 = vmatprep.subr.mxu0 0.0
  %740 = vmatpush1.msra.mxu0 0.0
  %741 = vmatprep.subr.mxu0 0.0
  %742 = vmatpush1.msra.mxu0 0.0
  %743 = vmatprep.subr.mxu0 0.0
  %744 = vmatpush1.msra.mxu0 0.0
  %745 = vmatprep.subr.mxu0 0.0
  %746 = vmatpush1.msra.mxu0 0.0
  %747 = vmatprep.subr.mxu0 0.0
  %748 = vmatpush1.msra.mxu0 0.0
  %749 = vmatprep.mubr.f32.mxu0 0.0
  %750 = vmatmul.mubr.f32.gmra.mrb[0].mxu0 %v683
  %v751 = vpop.f32.mrb[0].mxu0
  %v752 = vadd.f32 %v43, %v751
  %v753 = vpop.f32.mrb[0].mxu0
  %754 = vdwg.mxu0
  %v755 = vxor.u32 %v752, 2147483648
  %v756 = vmul.f32 %v755, 1.442695
  %v757 = vpow.pop %v756
  %v758 = vadd.f32 %v757, 1.0
  %v759 = vrcp.pop %v758
  %v760 = vmul.f32 1.0, %v759
  %v761 = vtanh.pop %v752
  %v762 = vmul.f32 %v760, %v558
  %764 = vrot.lane.b32.xlu0 %v761, 80
  %v765 = vpop.permute.xlu0 %764
  %v767 = vmul.f32 %v760, %v765
  %769 = vrot.lane.b32.xlu0 %v767, 16
  %v770 = vpop.permute.xlu0 %769
  %v772 = vadd.f32 %v762, %v770
  %v773 = vtanh.pop %v772
  %775 = vrot.lane.b32.xlu0 %v773, 16
  %v776 = vpop.permute.xlu0 %775
  %v778 = vmul.f32 %v760, %v776
  %v779 = vrot.slane %v670, 4
  %780 = vrot.lane.b32.xlu0 %v779, 96
  %v781 = vpop.permute.xlu0 %780
  %v782 = vsel %vm59, %v781, 0
  %784 = vmatprep.subr.mxu0 0.0
  %785 = vmatpush1.msra.mxu0 %v22
  %786 = vmatprep.subr.mxu0 0.0
  %787 = vmatpush1.msra.mxu0 %v23
  %788 = vmatprep.subr.mxu0 0.0
  %789 = vmatpush1.msra.mxu0 0.0
  %790 = vmatprep.subr.mxu0 0.0
  %791 = vmatpush1.msra.mxu0 0.0
  %792 = vmatprep.subr.mxu0 0.0
  %793 = vmatpush1.msra.mxu0 0.0
  %794 = vmatprep.subr.mxu0 0.0
  %795 = vmatpush1.msra.mxu0 0.0
  %796 = vmatprep.subr.mxu0 0.0
  %797 = vmatpush1.msra.mxu0 0.0
  %798 = vmatprep.subr.mxu0 0.0
  %799 = vmatpush1.msra.mxu0 0.0
  %800 = vmatprep.subr.mxu0 0.0
  %801 = vmatpush1.msra.mxu0 0.0
  %802 = vmatprep.subr.mxu0 0.0
  %803 = vmatpush1.msra.mxu0 0.0
  %804 = vmatprep.subr.mxu0 0.0
  %805 = vmatpush1.msra.mxu0 0.0
  %806 = vmatprep.subr.mxu0 0.0
  %807 = vmatpush1.msra.mxu0 0.0
  %808 = vmatprep.subr.mxu0 0.0
  %809 = vmatpush1.msra.mxu0 0.0
  %810 = vmatprep.subr.mxu0 0.0
  %811 = vmatpush1.msra.mxu0 0.0
  %812 = vmatprep.subr.mxu0 0.0
  %813 = vmatpush1.msra.mxu0 0.0
  %814 = vmatprep.subr.mxu0 0.0
  %815 = vmatpush1.msra.mxu0 0.0
  %816 = vmatprep.subr.mxu0 0.0
  %817 = vmatpush1.msra.mxu0 0.0
  %818 = vmatprep.subr.mxu0 0.0
  %819 = vmatpush1.msra.mxu0 0.0
  %820 = vmatprep.subr.mxu0 0.0
  %821 = vmatpush1.msra.mxu0 0.0
  %822 = vmatprep.subr.mxu0 0.0
  %823 = vmatpush1.msra.mxu0 0.0
  %824 = vmatprep.subr.mxu0 0.0
  %825 = vmatpush1.msra.mxu0 0.0
  %826 = vmatprep.subr.mxu0 0.0
  %827 = vmatpush1.msra.mxu0 0.0
  %828 = vmatprep.subr.mxu0 0.0
  %829 = vmatpush1.msra.mxu0 0.0
  %830 = vmatprep.subr.mxu0 0.0
  %831 = vmatpush1.msra.mxu0 0.0
  %832 = vmatprep.subr.mxu0 0.0
  %833 = vmatpush1.msra.mxu0 0.0
  %834 = vmatprep.subr.mxu0 0.0
  %835 = vmatpush1.msra.mxu0 0.0
  %836 = vmatprep.subr.mxu0 0.0
  %837 = vmatpush1.msra.mxu0 0.0
  %838 = vmatprep.subr.mxu0 0.0
  %839 = vmatpush1.msra.mxu0 0.0
  %840 = vmatprep.subr.mxu0 0.0
  %841 = vmatpush1.msra.mxu0 0.0
  %842 = vmatprep.subr.mxu0 0.0
  %843 = vmatpush1.msra.mxu0 0.0
  %844 = vmatprep.subr.mxu0 0.0
  %845 = vmatpush1.msra.mxu0 0.0
  %846 = vmatprep.subr.mxu0 0.0
  %847 = vmatpush1.msra.mxu0 0.0
  %848 = vmatprep.mubr.f32.mxu0 0.0
  %849 = vmatmul.mubr.f32.gmra.mrb[0].mxu0 %v782
  %v850 = vpop.f32.mrb[0].mxu0
  %v851 = vadd.f32 0.0, %v850
  %v852 = vpop.f32.mrb[0].mxu0
  %853 = vdwg.mxu0
  %v855 = vrot.slane %v851, 2
  %v857 = vadd.f32 %v133, %v855
  %v858 = vxor.u32 %v857, 2147483648
  %v859 = vmul.f32 %v858, 1.442695
  %v860 = vpow.pop %v859
  %v861 = vadd.f32 %v860, 1.0
  %v862 = vrcp.pop %v861
  %v863 = vmul.f32 1.0, %v862
  %v864 = vtanh.pop %v857
  %v866 = vrot.slane %v664, 6
  %v868 = vmul.f32 %v863, %v866
  %870 = vrot.lane.b32.xlu0 %v864, 80
  %v871 = vpop.permute.xlu0 %870
  %v873 = vmul.f32 %v863, %v871
  %875 = vrot.lane.b32.xlu0 %v873, 16
  %v876 = vpop.permute.xlu0 %875
  %v878 = vadd.f32 %v868, %v876
  %v879 = vtanh.pop %v878
  %881 = vrot.lane.b32.xlu0 %v879, 16
  %v882 = vpop.permute.xlu0 %881
  %v884 = vmul.f32 %v863, %v882
  %886 = vrot.lane.b32.xlu0 %v884, 96
  %v887 = vpop.permute.xlu0 %886
  %v890 = vrot.slane %v778, 2
  %891 = vrot.lane.b32.xlu0 %v890, 112
  %v892 = vpop.permute.xlu0 %891
  %v894 = vsel %vm59, %v887, %v892
  %v896 = vrot.slane %v894, 6
  %v897 = vsel %vm252, %v896, 0
  %899 = vmatprep.subr.mxu0 0.0
  %900 = vmatpush1.msra.mxu0 %v24
  %901 = vmatprep.subr.mxu0 0.0
  %902 = vmatpush1.msra.mxu0 %v25
  %903 = vmatprep.subr.mxu0 0.0
  %904 = vmatpush1.msra.mxu0 %v26
  %905 = vmatprep.subr.mxu0 0.0
  %906 = vmatpush1.msra.mxu0 %v27
  %907 = vmatprep.subr.mxu0 0.0
  %908 = vmatpush1.msra.mxu0 0.0
  %909 = vmatprep.subr.mxu0 0.0
  %910 = vmatpush1.msra.mxu0 0.0
  %911 = vmatprep.subr.mxu0 0.0
  %912 = vmatpush1.msra.mxu0 0.0
  %913 = vmatprep.subr.mxu0 0.0
  %914 = vmatpush1.msra.mxu0 0.0
  %915 = vmatprep.subr.mxu0 0.0
  %916 = vmatpush1.msra.mxu0 0.0
  %917 = vmatprep.subr.mxu0 0.0
  %918 = vmatpush1.msra.mxu0 0.0
  %919 = vmatprep.subr.mxu0 0.0
  %920 = vmatpush1.msra.mxu0 0.0
  %921 = vmatprep.subr.mxu0 0.0
  %922 = vmatpush1.msra.mxu0 0.0
  %923 = vmatprep.subr.mxu0 0.0
  %924 = vmatpush1.msra.mxu0 0.0
  %925 = vmatprep.subr.mxu0 0.0
  %926 = vmatpush1.msra.mxu0 0.0
  %927 = vmatprep.subr.mxu0 0.0
  %928 = vmatpush1.msra.mxu0 0.0
  %929 = vmatprep.subr.mxu0 0.0
  %930 = vmatpush1.msra.mxu0 0.0
  %931 = vmatprep.subr.mxu0 0.0
  %932 = vmatpush1.msra.mxu0 0.0
  %933 = vmatprep.subr.mxu0 0.0
  %934 = vmatpush1.msra.mxu0 0.0
  %935 = vmatprep.subr.mxu0 0.0
  %936 = vmatpush1.msra.mxu0 0.0
  %937 = vmatprep.subr.mxu0 0.0
  %938 = vmatpush1.msra.mxu0 0.0
  %939 = vmatprep.subr.mxu0 0.0
  %940 = vmatpush1.msra.mxu0 0.0
  %941 = vmatprep.subr.mxu0 0.0
  %942 = vmatpush1.msra.mxu0 0.0
  %943 = vmatprep.subr.mxu0 0.0
  %944 = vmatpush1.msra.mxu0 0.0
  %945 = vmatprep.subr.mxu0 0.0
  %946 = vmatpush1.msra.mxu0 0.0
  %947 = vmatprep.subr.mxu0 0.0
  %948 = vmatpush1.msra.mxu0 0.0
  %949 = vmatprep.subr.mxu0 0.0
  %950 = vmatpush1.msra.mxu0 0.0
  %951 = vmatprep.subr.mxu0 0.0
  %952 = vmatpush1.msra.mxu0 0.0
  %953 = vmatprep.subr.mxu0 0.0
  %954 = vmatpush1.msra.mxu0 0.0
  %955 = vmatprep.subr.mxu0 0.0
  %956 = vmatpush1.msra.mxu0 0.0
  %957 = vmatprep.subr.mxu0 0.0
  %958 = vmatpush1.msra.mxu0 0.0
  %959 = vmatprep.subr.mxu0 0.0
  %960 = vmatpush1.msra.mxu0 0.0
  %961 = vmatprep.subr.mxu0 0.0
  %962 = vmatpush1.msra.mxu0 0.0
  %963 = vmatprep.mubr.f32.mxu0 0.0
  %964 = vmatmul.mubr.f32.gmra.mrb[0].mxu0 %v897
  %v965 = vpop.f32.mrb[0].mxu0
  %v966 = vadd.f32 %v43, %v965
  %v967 = vpop.f32.mrb[0].mxu0
  %968 = vdwg.mxu0
  %v969 = vxor.u32 %v966, 2147483648
  %v970 = vmul.f32 %v969, 1.442695
  %v971 = vpow.pop %v970
  %v972 = vadd.f32 %v971, 1.0
  %v973 = vrcp.pop %v972
  %v974 = vmul.f32 1.0, %v973
  %v975 = vtanh.pop %v966
  %v976 = vmul.f32 %v974, %v772
  %978 = vrot.lane.b32.xlu0 %v975, 80
  %v979 = vpop.permute.xlu0 %978
  %v981 = vmul.f32 %v974, %v979
  %983 = vrot.lane.b32.xlu0 %v981, 16
  %v984 = vpop.permute.xlu0 %983
  %v986 = vadd.f32 %v976, %v984
  %v987 = vtanh.pop %v986
  %989 = vrot.lane.b32.xlu0 %v987, 16
  %v990 = vpop.permute.xlu0 %989
  %v992 = vmul.f32 %v974, %v990
  %v993 = vrot.slane %v884, 6
  %994 = vrot.lane.b32.xlu0 %v993, 96
  %v995 = vpop.permute.xlu0 %994
  %v996 = vsel %vm59, %v995, 0
  %998 = vmatprep.subr.mxu0 0.0
  %999 = vmatpush1.msra.mxu0 %v22
  %1000 = vmatprep.subr.mxu0 0.0
  %1001 = vmatpush1.msra.mxu0 %v23
  %1002 = vmatprep.subr.mxu0 0.0
  %1003 = vmatpush1.msra.mxu0 0.0
  %1004 = vmatprep.subr.mxu0 0.0
  %1005 = vmatpush1.msra.mxu0 0.0
  %1006 = vmatprep.subr.mxu0 0.0
  %1007 = vmatpush1.msra.mxu0 0.0
  %1008 = vmatprep.subr.mxu0 0.0
  %1009 = vmatpush1.msra.mxu0 0.0
  %1010 = vmatprep.subr.mxu0 0.0
  %1011 = vmatpush1.msra.mxu0 0.0
  %1012 = vmatprep.subr.mxu0 0.0
  %1013 = vmatpush1.msra.mxu0 0.0
  %1014 = vmatprep.subr.mxu0 0.0
  %1015 = vmatpush1.msra.mxu0 0.0
  %1016 = vmatprep.subr.mxu0 0.0
  %1017 = vmatpush1.msra.mxu0 0.0
  %1018 = vmatprep.subr.mxu0 0.0
  %1019 = vmatpush1.msra.mxu0 0.0
  %1020 = vmatprep.subr.mxu0 0.0
  %1021 = vmatpush1.msra.mxu0 0.0
  %1022 = vmatprep.subr.mxu0 0.0
  %1023 = vmatpush1.msra.mxu0 0.0
  %1024 = vmatprep.subr.mxu0 0.0
  %1025 = vmatpush1.msra.mxu0 0.0
  %1026 = vmatprep.subr.mxu0 0.0
  %1027 = vmatpush1.msra.mxu0 0.0
  %1028 = vmatprep.subr.mxu0 0.0
  %1029 = vmatpush1.msra.mxu0 0.0
  %1030 = vmatprep.subr.mxu0 0.0
  %1031 = vmatpush1.msra.mxu0 0.0
  %1032 = vmatprep.subr.mxu0 0.0
  %1033 = vmatpush1.msra.mxu0 0.0
  %1034 = vmatprep.subr.mxu0 0.0
  %1035 = vmatpush1.msra.mxu0 0.0
  %1036 = vmatprep.subr.mxu0 0.0
  %1037 = vmatpush1.msra.mxu0 0.0
  %1038 = vmatprep.subr.mxu0 0.0
  %1039 = vmatpush1.msra.mxu0 0.0
  %1040 = vmatprep.subr.mxu0 0.0
  %1041 = vmatpush1.msra.mxu0 0.0
  %1042 = vmatprep.subr.mxu0 0.0
  %1043 = vmatpush1.msra.mxu0 0.0
  %1044 = vmatprep.subr.mxu0 0.0
  %1045 = vmatpush1.msra.mxu0 0.0
  %1046 = vmatprep.subr.mxu0 0.0
  %1047 = vmatpush1.msra.mxu0 0.0
  %1048 = vmatprep.subr.mxu0 0.0
  %1049 = vmatpush1.msra.mxu0 0.0
  %1050 = vmatprep.subr.mxu0 0.0
  %1051 = vmatpush1.msra.mxu0 0.0
  %1052 = vmatprep.subr.mxu0 0.0
  %1053 = vmatpush1.msra.mxu0 0.0
  %1054 = vmatprep.subr.mxu0 0.0
  %1055 = vmatpush1.msra.mxu0 0.0
  %1056 = vmatprep.subr.mxu0 0.0
  %1057 = vmatpush1.msra.mxu0 0.0
  %1058 = vmatprep.subr.mxu0 0.0
  %1059 = vmatpush1.msra.mxu0 0.0
  %1060 = vmatprep.subr.mxu0 0.0
  %1061 = vmatpush1.msra.mxu0 0.0
  %1062 = vmatprep.mubr.f32.mxu0 0.0
  %1063 = vmatmul.mubr.f32.gmra.mrb[0].mxu0 %v996
  %v1064 = vpop.f32.mrb[0].mxu0
  %v1065 = vadd.f32 0.0, %v1064
  %v1066 = vpop.f32.mrb[0].mxu0
  %1067 = vdwg.mxu0
  %v1068 = vadd.f32 %v138, %v1065
  %v1069 = vxor.u32 %v1068, 2147483648
  %v1070 = vmul.f32 %v1069, 1.442695
  %v1071 = vpow.pop %v1070
  %v1072 = vadd.f32 %v1071, 1.0
  %v1073 = vrcp.pop %v1072
  %v1074 = vmul.f32 1.0, %v1073
  %v1075 = vtanh.pop %v1068
  %v1077 = vrot.slane %v878, 6
  %v1079 = vmul.f32 %v1074, %v1077
  %1081 = vrot.lane.b32.xlu0 %v1075, 80
  %v1082 = vpop.permute.xlu0 %1081
  %v1084 = vmul.f32 %v1074, %v1082
  %1086 = vrot.lane.b32.xlu0 %v1084, 16
  %v1087 = vpop.permute.xlu0 %1086
  %v1089 = vadd.f32 %v1079, %v1087
  %v1090 = vtanh.pop %v1089
  %1092 = vrot.lane.b32.xlu0 %v1090, 16
  %v1093 = vpop.permute.xlu0 %1092
  %v1095 = vmul.f32 %v1074, %v1093
  %1097 = vrot.lane.b32.xlu0 %v1095, 96
  %v1098 = vpop.permute.xlu0 %1097
  %1101 = vrot.lane.b32.xlu0 %v992, 112
  %v1102 = vpop.permute.xlu0 %1101
  %v1104 = vsel %vm59, %v1098, %v1102
  %v1106 = vsel %vm252, %v1104, 0
  %1108 = vmatprep.subr.mxu0 0.0
  %1109 = vmatpush1.msra.mxu0 %v24
  %1110 = vmatprep.subr.mxu0 0.0
  %1111 = vmatpush1.msra.mxu0 %v25
  %1112 = vmatprep.subr.mxu0 0.0
  %1113 = vmatpush1.msra.mxu0 %v26
  %1114 = vmatprep.subr.mxu0 0.0
  %1115 = vmatpush1.msra.mxu0 %v27
  %1116 = vmatprep.subr.mxu0 0.0
  %1117 = vmatpush1.msra.mxu0 0.0
  %1118 = vmatprep.subr.mxu0 0.0
  %1119 = vmatpush1.msra.mxu0 0.0
  %1120 = vmatprep.subr.mxu0 0.0
  %1121 = vmatpush1.msra.mxu0 0.0
  %1122 = vmatprep.subr.mxu0 0.0
  %1123 = vmatpush1.msra.mxu0 0.0
  %1124 = vmatprep.subr.mxu0 0.0
  %1125 = vmatpush1.msra.mxu0 0.0
  %1126 = vmatprep.subr.mxu0 0.0
  %1127 = vmatpush1.msra.mxu0 0.0
  %1128 = vmatprep.subr.mxu0 0.0
  %1129 = vmatpush1.msra.mxu0 0.0
  %1130 = vmatprep.subr.mxu0 0.0
  %1131 = vmatpush1.msra.mxu0 0.0
  %1132 = vmatprep.subr.mxu0 0.0
  %1133 = vmatpush1.msra.mxu0 0.0
  %1134 = vmatprep.subr.mxu0 0.0
  %1135 = vmatpush1.msra.mxu0 0.0
  %1136 = vmatprep.subr.mxu0 0.0
  %1137 = vmatpush1.msra.mxu0 0.0
  %1138 = vmatprep.subr.mxu0 0.0
  %1139 = vmatpush1.msra.mxu0 0.0
  %1140 = vmatprep.subr.mxu0 0.0
  %1141 = vmatpush1.msra.mxu0 0.0
  %1142 = vmatprep.subr.mxu0 0.0
  %1143 = vmatpush1.msra.mxu0 0.0
  %1144 = vmatprep.subr.mxu0 0.0
  %1145 = vmatpush1.msra.mxu0 0.0
  %1146 = vmatprep.subr.mxu0 0.0
  %1147 = vmatpush1.msra.mxu0 0.0
  %1148 = vmatprep.subr.mxu0 0.0
  %1149 = vmatpush1.msra.mxu0 0.0
  %1150 = vmatprep.subr.mxu0 0.0
  %1151 = vmatpush1.msra.mxu0 0.0
  %1152 = vmatprep.subr.mxu0 0.0
  %1153 = vmatpush1.msra.mxu0 0.0
  %1154 = vmatprep.subr.mxu0 0.0
  %1155 = vmatpush1.msra.mxu0 0.0
  %1156 = vmatprep.subr.mxu0 0.0
  %1157 = vmatpush1.msra.mxu0 0.0
  %1158 = vmatprep.subr.mxu0 0.0
  %1159 = vmatpush1.msra.mxu0 0.0
  %1160 = vmatprep.subr.mxu0 0.0
  %1161 = vmatpush1.msra.mxu0 0.0
  %1162 = vmatprep.subr.mxu0 0.0
  %1163 = vmatpush1.msra.mxu0 0.0
  %1164 = vmatprep.subr.mxu0 0.0
  %1165 = vmatpush1.msra.mxu0 0.0
  %1166 = vmatprep.subr.mxu0 0.0
  %1167 = vmatpush1.msra.mxu0 0.0
  %1168 = vmatprep.subr.mxu0 0.0
  %1169 = vmatpush1.msra.mxu0 0.0
  %1170 = vmatprep.subr.mxu0 0.0
  %1171 = vmatpush1.msra.mxu0 0.0
  %1172 = vmatprep.mubr.f32.mxu0 0.0
  %1173 = vmatmul.mubr.f32.gmra.mrb[0].mxu0 %v1106
  %v1174 = vpop.f32.mrb[0].mxu0
  %v1175 = vadd.f32 %v43, %v1174
  %v1176 = vpop.f32.mrb[0].mxu0
  %1177 = vdwg.mxu0
  %v1178 = vxor.u32 %v1175, 2147483648
  %v1179 = vmul.f32 %v1178, 1.442695
  %v1180 = vpow.pop %v1179
  %v1181 = vadd.f32 %v1180, 1.0
  %v1182 = vrcp.pop %v1181
  %v1183 = vmul.f32 1.0, %v1182
  %v1184 = vtanh.pop %v1175
  %v1185 = vmul.f32 %v1183, %v986
  %1187 = vrot.lane.b32.xlu0 %v1184, 80
  %v1188 = vpop.permute.xlu0 %1187
  %v1190 = vmul.f32 %v1183, %v1188
  %1192 = vrot.lane.b32.xlu0 %v1190, 16
  %v1193 = vpop.permute.xlu0 %1192
  %v1195 = vadd.f32 %v1185, %v1193
  %v1196 = vtanh.pop %v1195
  %1198 = vrot.lane.b32.xlu0 %v1196, 16
  %v1199 = vpop.permute.xlu0 %1198
  %v1201 = vmul.f32 %v1183, %v1199
  %v1202 = vsel %vm59, %v1098, 0
  %1204 = vmatprep.subr.mxu0 0.0
  %1205 = vmatpush1.msra.mxu0 %v22
  %1206 = vmatprep.subr.mxu0 0.0
  %1207 = vmatpush1.msra.mxu0 %v23
  %1208 = vmatprep.subr.mxu0 0.0
  %1209 = vmatpush1.msra.mxu0 0.0
  %1210 = vmatprep.subr.mxu0 0.0
  %1211 = vmatpush1.msra.mxu0 0.0
  %1212 = vmatprep.subr.mxu0 0.0
  %1213 = vmatpush1.msra.mxu0 0.0
  %1214 = vmatprep.subr.mxu0 0.0
  %1215 = vmatpush1.msra.mxu0 0.0
  %1216 = vmatprep.subr.mxu0 0.0
  %1217 = vmatpush1.msra.mxu0 0.0
  %1218 = vmatprep.subr.mxu0 0.0
  %1219 = vmatpush1.msra.mxu0 0.0
  %1220 = vmatprep.subr.mxu0 0.0
  %1221 = vmatpush1.msra.mxu0 0.0
  %1222 = vmatprep.subr.mxu0 0.0
  %1223 = vmatpush1.msra.mxu0 0.0
  %1224 = vmatprep.subr.mxu0 0.0
  %1225 = vmatpush1.msra.mxu0 0.0
  %1226 = vmatprep.subr.mxu0 0.0
  %1227 = vmatpush1.msra.mxu0 0.0
  %1228 = vmatprep.subr.mxu0 0.0
  %1229 = vmatpush1.msra.mxu0 0.0
  %1230 = vmatprep.subr.mxu0 0.0
  %1231 = vmatpush1.msra.mxu0 0.0
  %1232 = vmatprep.subr.mxu0 0.0
  %1233 = vmatpush1.msra.mxu0 0.0
  %1234 = vmatprep.subr.mxu0 0.0
  %1235 = vmatpush1.msra.mxu0 0.0
  %1236 = vmatprep.subr.mxu0 0.0
  %1237 = vmatpush1.msra.mxu0 0.0
  %1238 = vmatprep.subr.mxu0 0.0
  %1239 = vmatpush1.msra.mxu0 0.0
  %1240 = vmatprep.subr.mxu0 0.0
  %1241 = vmatpush1.msra.mxu0 0.0
  %1242 = vmatprep.subr.mxu0 0.0
  %1243 = vmatpush1.msra.mxu0 0.0
  %1244 = vmatprep.subr.mxu0 0.0
  %1245 = vmatpush1.msra.mxu0 0.0
  %1246 = vmatprep.subr.mxu0 0.0
  %1247 = vmatpush1.msra.mxu0 0.0
  %1248 = vmatprep.subr.mxu0 0.0
  %1249 = vmatpush1.msra.mxu0 0.0
  %1250 = vmatprep.subr.mxu0 0.0
  %1251 = vmatpush1.msra.mxu0 0.0
  %1252 = vmatprep.subr.mxu0 0.0
  %1253 = vmatpush1.msra.mxu0 0.0
  %1254 = vmatprep.subr.mxu0 0.0
  %1255 = vmatpush1.msra.mxu0 0.0
  %1256 = vmatprep.subr.mxu0 0.0
  %1257 = vmatpush1.msra.mxu0 0.0
  %1258 = vmatprep.subr.mxu0 0.0
  %1259 = vmatpush1.msra.mxu0 0.0
  %1260 = vmatprep.subr.mxu0 0.0
  %1261 = vmatpush1.msra.mxu0 0.0
  %1262 = vmatprep.subr.mxu0 0.0
  %1263 = vmatpush1.msra.mxu0 0.0
  %1264 = vmatprep.subr.mxu0 0.0
  %1265 = vmatpush1.msra.mxu0 0.0
  %1266 = vmatprep.subr.mxu0 0.0
  %1267 = vmatpush1.msra.mxu0 0.0
  %1268 = vmatprep.mubr.f32.mxu0 0.0
  %1269 = vmatmul.mubr.f32.gmra.mrb[0].mxu0 %v1202
  %v1270 = vpop.f32.mrb[0].mxu0
  %v1271 = vadd.f32 0.0, %v1270
  %v1272 = vpop.f32.mrb[0].mxu0
  %1273 = vdwg.mxu0
  %v1275 = vrot.slane %v1271, 6
  %v1277 = vadd.f32 %v138, %v1275
  %v1278 = vxor.u32 %v1277, 2147483648
  %v1279 = vmul.f32 %v1278, 1.442695
  %v1280 = vpow.pop %v1279
  %v1281 = vadd.f32 %v1280, 1.0
  %v1282 = vrcp.pop %v1281
  %v1283 = vmul.f32 1.0, %v1282
  %v1284 = vtanh.pop %v1277
  %v1286 = vrot.slane %v1089, 6
  %v1288 = vmul.f32 %v1283, %v1286
  %1290 = vrot.lane.b32.xlu0 %v1284, 80
  %v1291 = vpop.permute.xlu0 %1290
  %v1293 = vmul.f32 %v1283, %v1291
  %1295 = vrot.lane.b32.xlu0 %v1293, 16
  %v1296 = vpop.permute.xlu0 %1295
  %v1298 = vadd.f32 %v1288, %v1296
  %v1299 = vtanh.pop %v1298
  %1301 = vrot.lane.b32.xlu0 %v1299, 16
  %v1302 = vpop.permute.xlu0 %1301
  %v1304 = vmul.f32 %v1283, %v1302
  %1306 = vrot.lane.b32.xlu0 %v1304, 96
  %v1307 = vpop.permute.xlu0 %1306
  %v1310 = vrot.slane %v1201, 6
  %1311 = vrot.lane.b32.xlu0 %v1310, 112
  %v1312 = vpop.permute.xlu0 %1311
  %v1314 = vsel %vm59, %v1307, %v1312
  %v1316 = vrot.slane %v1314, 2
  %v1317 = vsel %vm252, %v1316, 0
  %1319 = vmatprep.subr.mxu0 0.0
  %1320 = vmatpush1.msra.mxu0 %v24
  %1321 = vmatprep.subr.mxu0 0.0
  %1322 = vmatpush1.msra.mxu0 %v25
  %1323 = vmatprep.subr.mxu0 0.0
  %1324 = vmatpush1.msra.mxu0 %v26
  %1325 = vmatprep.subr.mxu0 0.0
  %1326 = vmatpush1.msra.mxu0 %v27
  %1327 = vmatprep.subr.mxu0 0.0
  %1328 = vmatpush1.msra.mxu0 0.0
  %1329 = vmatprep.subr.mxu0 0.0
  %1330 = vmatpush1.msra.mxu0 0.0
  %1331 = vmatprep.subr.mxu0 0.0
  %1332 = vmatpush1.msra.mxu0 0.0
  %1333 = vmatprep.subr.mxu0 0.0
  %1334 = vmatpush1.msra.mxu0 0.0
  %1335 = vmatprep.subr.mxu0 0.0
  %1336 = vmatpush1.msra.mxu0 0.0
  %1337 = vmatprep.subr.mxu0 0.0
  %1338 = vmatpush1.msra.mxu0 0.0
  %1339 = vmatprep.subr.mxu0 0.0
  %1340 = vmatpush1.msra.mxu0 0.0
  %1341 = vmatprep.subr.mxu0 0.0
  %1342 = vmatpush1.msra.mxu0 0.0
  %1343 = vmatprep.subr.mxu0 0.0
  %1344 = vmatpush1.msra.mxu0 0.0
  %1345 = vmatprep.subr.mxu0 0.0
  %1346 = vmatpush1.msra.mxu0 0.0
  %1347 = vmatprep.subr.mxu0 0.0
  %1348 = vmatpush1.msra.mxu0 0.0
  %1349 = vmatprep.subr.mxu0 0.0
  %1350 = vmatpush1.msra.mxu0 0.0
  %1351 = vmatprep.subr.mxu0 0.0
  %1352 = vmatpush1.msra.mxu0 0.0
  %1353 = vmatprep.subr.mxu0 0.0
  %1354 = vmatpush1.msra.mxu0 0.0
  %1355 = vmatprep.subr.mxu0 0.0
  %1356 = vmatpush1.msra.mxu0 0.0
  %1357 = vmatprep.subr.mxu0 0.0
  %1358 = vmatpush1.msra.mxu0 0.0
  %1359 = vmatprep.subr.mxu0 0.0
  %1360 = vmatpush1.msra.mxu0 0.0
  %1361 = vmatprep.subr.mxu0 0.0
  %1362 = vmatpush1.msra.mxu0 0.0
  %1363 = vmatprep.subr.mxu0 0.0
  %1364 = vmatpush1.msra.mxu0 0.0
  %1365 = vmatprep.subr.mxu0 0.0
  %1366 = vmatpush1.msra.mxu0 0.0
  %1367 = vmatprep.subr.mxu0 0.0
  %1368 = vmatpush1.msra.mxu0 0.0
  %1369 = vmatprep.subr.mxu0 0.0
  %1370 = vmatpush1.msra.mxu0 0.0
  %1371 = vmatprep.subr.mxu0 0.0
  %1372 = vmatpush1.msra.mxu0 0.0
  %1373 = vmatprep.subr.mxu0 0.0
  %1374 = vmatpush1.msra.mxu0 0.0
  %1375 = vmatprep.subr.mxu0 0.0
  %1376 = vmatpush1.msra.mxu0 0.0
  %1377 = vmatprep.subr.mxu0 0.0
  %1378 = vmatpush1.msra.mxu0 0.0
  %1379 = vmatprep.subr.mxu0 0.0
  %1380 = vmatpush1.msra.mxu0 0.0
  %1381 = vmatprep.subr.mxu0 0.0
  %1382 = vmatpush1.msra.mxu0 0.0
  %1383 = vmatprep.mubr.f32.mxu0 0.0
  %1384 = vmatmul.mubr.f32.gmra.mrb[0].mxu0 %v1317
  %v1385 = vpop.f32.mrb[0].mxu0
  %v1386 = vadd.f32 %v43, %v1385
  %v1387 = vpop.f32.mrb[0].mxu0
  %1388 = vdwg.mxu0
  %v1389 = vxor.u32 %v1386, 2147483648
  %v1390 = vmul.f32 %v1389, 1.442695
  %v1391 = vpow.pop %v1390
  %v1392 = vadd.f32 %v1391, 1.0
  %v1393 = vrcp.pop %v1392
  %v1394 = vmul.f32 1.0, %v1393
  %v1395 = vtanh.pop %v1386
  %v1396 = vmul.f32 %v1394, %v1195
  %1398 = vrot.lane.b32.xlu0 %v1395, 80
  %v1399 = vpop.permute.xlu0 %1398
  %v1401 = vmul.f32 %v1394, %v1399
  %1403 = vrot.lane.b32.xlu0 %v1401, 16
  %v1404 = vpop.permute.xlu0 %1403
  %v1406 = vadd.f32 %v1396, %v1404
  %v1407 = vtanh.pop %v1406
  %1409 = vrot.lane.b32.xlu0 %v1407, 16
  %v1410 = vpop.permute.xlu0 %1409
  %v1412 = vmul.f32 %v1394, %v1410
  %v1413 = vrot.slane %v1304, 2
  %1414 = vrot.lane.b32.xlu0 %v1413, 96
  %v1415 = vpop.permute.xlu0 %1414
  %v1416 = vsel %vm59, %v1415, 0
  %1418 = vmatprep.subr.mxu0 0.0
  %1419 = vmatpush1.msra.mxu0 %v22
  %1420 = vmatprep.subr.mxu0 0.0
  %1421 = vmatpush1.msra.mxu0 %v23
  %1422 = vmatprep.subr.mxu0 0.0
  %1423 = vmatpush1.msra.mxu0 0.0
  %1424 = vmatprep.subr.mxu0 0.0
  %1425 = vmatpush1.msra.mxu0 0.0
  %1426 = vmatprep.subr.mxu0 0.0
  %1427 = vmatpush1.msra.mxu0 0.0
  %1428 = vmatprep.subr.mxu0 0.0
  %1429 = vmatpush1.msra.mxu0 0.0
  %1430 = vmatprep.subr.mxu0 0.0
  %1431 = vmatpush1.msra.mxu0 0.0
  %1432 = vmatprep.subr.mxu0 0.0
  %1433 = vmatpush1.msra.mxu0 0.0
  %1434 = vmatprep.subr.mxu0 0.0
  %1435 = vmatpush1.msra.mxu0 0.0
  %1436 = vmatprep.subr.mxu0 0.0
  %1437 = vmatpush1.msra.mxu0 0.0
  %1438 = vmatprep.subr.mxu0 0.0
  %1439 = vmatpush1.msra.mxu0 0.0
  %1440 = vmatprep.subr.mxu0 0.0
  %1441 = vmatpush1.msra.mxu0 0.0
  %1442 = vmatprep.subr.mxu0 0.0
  %1443 = vmatpush1.msra.mxu0 0.0
  %1444 = vmatprep.subr.mxu0 0.0
  %1445 = vmatpush1.msra.mxu0 0.0
  %1446 = vmatprep.subr.mxu0 0.0
  %1447 = vmatpush1.msra.mxu0 0.0
  %1448 = vmatprep.subr.mxu0 0.0
  %1449 = vmatpush1.msra.mxu0 0.0
  %1450 = vmatprep.subr.mxu0 0.0
  %1451 = vmatpush1.msra.mxu0 0.0
  %1452 = vmatprep.subr.mxu0 0.0
  %1453 = vmatpush1.msra.mxu0 0.0
  %1454 = vmatprep.subr.mxu0 0.0
  %1455 = vmatpush1.msra.mxu0 0.0
  %1456 = vmatprep.subr.mxu0 0.0
  %1457 = vmatpush1.msra.mxu0 0.0
  %1458 = vmatprep.subr.mxu0 0.0
  %1459 = vmatpush1.msra.mxu0 0.0
  %1460 = vmatprep.subr.mxu0 0.0
  %1461 = vmatpush1.msra.mxu0 0.0
  %1462 = vmatprep.subr.mxu0 0.0
  %1463 = vmatpush1.msra.mxu0 0.0
  %1464 = vmatprep.subr.mxu0 0.0
  %1465 = vmatpush1.msra.mxu0 0.0
  %1466 = vmatprep.subr.mxu0 0.0
  %1467 = vmatpush1.msra.mxu0 0.0
  %1468 = vmatprep.subr.mxu0 0.0
  %1469 = vmatpush1.msra.mxu0 0.0
  %1470 = vmatprep.subr.mxu0 0.0
  %1471 = vmatpush1.msra.mxu0 0.0
  %1472 = vmatprep.subr.mxu0 0.0
  %1473 = vmatpush1.msra.mxu0 0.0
  %1474 = vmatprep.subr.mxu0 0.0
  %1475 = vmatpush1.msra.mxu0 0.0
  %1476 = vmatprep.subr.mxu0 0.0
  %1477 = vmatpush1.msra.mxu0 0.0
  %1478 = vmatprep.subr.mxu0 0.0
  %1479 = vmatpush1.msra.mxu0 0.0
  %1480 = vmatprep.subr.mxu0 0.0
  %1481 = vmatpush1.msra.mxu0 0.0
  %1482 = vmatprep.mubr.f32.mxu0 0.0
  %1483 = vmatmul.mubr.f32.gmra.mrb[0].mxu0 %v1416
  %v1484 = vpop.f32.mrb[0].mxu0
  %v1485 = vadd.f32 0.0, %v1484
  %v1486 = vpop.f32.mrb[0].mxu0
  %1487 = vdwg.mxu0
  %v1489 = vrot.slane %v1485, 4
  %v1491 = vadd.f32 %v138, %v1489
  %v1492 = vxor.u32 %v1491, 2147483648
  %v1493 = vmul.f32 %v1492, 1.442695
  %v1494 = vpow.pop %v1493
  %v1495 = vadd.f32 %v1494, 1.0
  %v1496 = vrcp.pop %v1495
  %v1497 = vmul.f32 1.0, %v1496
  %v1498 = vtanh.pop %v1491
  %v1500 = vrot.slane %v1298, 6
  %v1502 = vmul.f32 %v1497, %v1500
  %1504 = vrot.lane.b32.xlu0 %v1498, 80
  %v1505 = vpop.permute.xlu0 %1504
  %v1507 = vmul.f32 %v1497, %v1505
  %1509 = vrot.lane.b32.xlu0 %v1507, 16
  %v1510 = vpop.permute.xlu0 %1509
  %v1512 = vadd.f32 %v1502, %v1510
  %v1513 = vtanh.pop %v1512
  %1515 = vrot.lane.b32.xlu0 %v1513, 16
  %v1516 = vpop.permute.xlu0 %1515
  %v1518 = vmul.f32 %v1497, %v1516
  %1520 = vrot.lane.b32.xlu0 %v1518, 96
  %v1521 = vpop.permute.xlu0 %1520
  %v1524 = vrot.slane %v1412, 4
  %1525 = vrot.lane.b32.xlu0 %v1524, 112
  %v1526 = vpop.permute.xlu0 %1525
  %v1528 = vsel %vm59, %v1521, %v1526
  %v1530 = vrot.slane %v1528, 4
  %v1531 = vsel %vm252, %v1530, 0
  %1533 = vmatprep.subr.mxu0 0.0
  %1534 = vmatpush1.msra.mxu0 %v24
  %1535 = vmatprep.subr.mxu0 0.0
  %1536 = vmatpush1.msra.mxu0 %v25
  %1537 = vmatprep.subr.mxu0 0.0
  %1538 = vmatpush1.msra.mxu0 %v26
  %1539 = vmatprep.subr.mxu0 0.0
  %1540 = vmatpush1.msra.mxu0 %v27
  %1541 = vmatprep.subr.mxu0 0.0
  %1542 = vmatpush1.msra.mxu0 0.0
  %1543 = vmatprep.subr.mxu0 0.0
  %1544 = vmatpush1.msra.mxu0 0.0
  %1545 = vmatprep.subr.mxu0 0.0
  %1546 = vmatpush1.msra.mxu0 0.0
  %1547 = vmatprep.subr.mxu0 0.0
  %1548 = vmatpush1.msra.mxu0 0.0
  %1549 = vmatprep.subr.mxu0 0.0
  %1550 = vmatpush1.msra.mxu0 0.0
  %1551 = vmatprep.subr.mxu0 0.0
  %1552 = vmatpush1.msra.mxu0 0.0
  %1553 = vmatprep.subr.mxu0 0.0
  %1554 = vmatpush1.msra.mxu0 0.0
  %1555 = vmatprep.subr.mxu0 0.0
  %1556 = vmatpush1.msra.mxu0 0.0
  %1557 = vmatprep.subr.mxu0 0.0
  %1558 = vmatpush1.msra.mxu0 0.0
  %1559 = vmatprep.subr.mxu0 0.0
  %1560 = vmatpush1.msra.mxu0 0.0
  %1561 = vmatprep.subr.mxu0 0.0
  %1562 = vmatpush1.msra.mxu0 0.0
  %1563 = vmatprep.subr.mxu0 0.0
  %1564 = vmatpush1.msra.mxu0 0.0
  %1565 = vmatprep.subr.mxu0 0.0
  %1566 = vmatpush1.msra.mxu0 0.0
  %1567 = vmatprep.subr.mxu0 0.0
  %1568 = vmatpush1.msra.mxu0 0.0
  %1569 = vmatprep.subr.mxu0 0.0
  %1570 = vmatpush1.msra.mxu0 0.0
  %1571 = vmatprep.subr.mxu0 0.0
  %1572 = vmatpush1.msra.mxu0 0.0
  %1573 = vmatprep.subr.mxu0 0.0
  %1574 = vmatpush1.msra.mxu0 0.0
  %1575 = vmatprep.subr.mxu0 0.0
  %1576 = vmatpush1.msra.mxu0 0.0
  %1577 = vmatprep.subr.mxu0 0.0
  %1578 = vmatpush1.msra.mxu0 0.0
  %1579 = vmatprep.subr.mxu0 0.0
  %1580 = vmatpush1.msra.mxu0 0.0
  %1581 = vmatprep.subr.mxu0 0.0
  %1582 = vmatpush1.msra.mxu0 0.0
  %1583 = vmatprep.subr.mxu0 0.0
  %1584 = vmatpush1.msra.mxu0 0.0
  %1585 = vmatprep.subr.mxu0 0.0
  %1586 = vmatpush1.msra.mxu0 0.0
  %1587 = vmatprep.subr.mxu0 0.0
  %1588 = vmatpush1.msra.mxu0 0.0
  %1589 = vmatprep.subr.mxu0 0.0
  %1590 = vmatpush1.msra.mxu0 0.0
  %1591 = vmatprep.subr.mxu0 0.0
  %1592 = vmatpush1.msra.mxu0 0.0
  %1593 = vmatprep.subr.mxu0 0.0
  %1594 = vmatpush1.msra.mxu0 0.0
  %1595 = vmatprep.subr.mxu0 0.0
  %1596 = vmatpush1.msra.mxu0 0.0
  %1597 = vmatprep.mubr.f32.mxu0 0.0
  %1598 = vmatmul.mubr.f32.gmra.mrb[0].mxu0 %v1531
  %v1599 = vpop.f32.mrb[0].mxu0
  %v1600 = vadd.f32 %v43, %v1599
  %v1601 = vpop.f32.mrb[0].mxu0
  %1602 = vdwg.mxu0
  %v1603 = vxor.u32 %v1600, 2147483648
  %v1604 = vmul.f32 %v1603, 1.442695
  %v1605 = vpow.pop %v1604
  %v1606 = vadd.f32 %v1605, 1.0
  %v1607 = vrcp.pop %v1606
  %v1608 = vmul.f32 1.0, %v1607
  %v1609 = vtanh.pop %v1600
  %v1610 = vmul.f32 %v1608, %v1406
  %1612 = vrot.lane.b32.xlu0 %v1609, 80
  %v1613 = vpop.permute.xlu0 %1612
  %v1615 = vmul.f32 %v1608, %v1613
  %1617 = vrot.lane.b32.xlu0 %v1615, 16
  %v1618 = vpop.permute.xlu0 %1617
  %v1620 = vadd.f32 %v1610, %v1618
  %v1621 = vtanh.pop %v1620
  %1623 = vrot.lane.b32.xlu0 %v1621, 16
  %v1624 = vpop.permute.xlu0 %1623
  %v1626 = vmul.f32 %v1608, %v1624
  %v1627 = vrot.slane %v1518, 4
  %1628 = vrot.lane.b32.xlu0 %v1627, 96
  %v1629 = vpop.permute.xlu0 %1628
  %v1630 = vsel %vm59, %v1629, 0
  %1632 = vmatprep.subr.mxu0 0.0
  %1633 = vmatpush1.msra.mxu0 %v22
  %1634 = vmatprep.subr.mxu0 0.0
  %1635 = vmatpush1.msra.mxu0 %v23
  %1636 = vmatprep.subr.mxu0 0.0
  %1637 = vmatpush1.msra.mxu0 0.0
  %1638 = vmatprep.subr.mxu0 0.0
  %1639 = vmatpush1.msra.mxu0 0.0
  %1640 = vmatprep.subr.mxu0 0.0
  %1641 = vmatpush1.msra.mxu0 0.0
  %1642 = vmatprep.subr.mxu0 0.0
  %1643 = vmatpush1.msra.mxu0 0.0
  %1644 = vmatprep.subr.mxu0 0.0
  %1645 = vmatpush1.msra.mxu0 0.0
  %1646 = vmatprep.subr.mxu0 0.0
  %1647 = vmatpush1.msra.mxu0 0.0
  %1648 = vmatprep.subr.mxu0 0.0
  %1649 = vmatpush1.msra.mxu0 0.0
  %1650 = vmatprep.subr.mxu0 0.0
  %1651 = vmatpush1.msra.mxu0 0.0
  %1652 = vmatprep.subr.mxu0 0.0
  %1653 = vmatpush1.msra.mxu0 0.0
  %1654 = vmatprep.subr.mxu0 0.0
  %1655 = vmatpush1.msra.mxu0 0.0
  %1656 = vmatprep.subr.mxu0 0.0
  %1657 = vmatpush1.msra.mxu0 0.0
  %1658 = vmatprep.subr.mxu0 0.0
  %1659 = vmatpush1.msra.mxu0 0.0
  %1660 = vmatprep.subr.mxu0 0.0
  %1661 = vmatpush1.msra.mxu0 0.0
  %1662 = vmatprep.subr.mxu0 0.0
  %1663 = vmatpush1.msra.mxu0 0.0
  %1664 = vmatprep.subr.mxu0 0.0
  %1665 = vmatpush1.msra.mxu0 0.0
  %1666 = vmatprep.subr.mxu0 0.0
  %1667 = vmatpush1.msra.mxu0 0.0
  %1668 = vmatprep.subr.mxu0 0.0
  %1669 = vmatpush1.msra.mxu0 0.0
  %1670 = vmatprep.subr.mxu0 0.0
  %1671 = vmatpush1.msra.mxu0 0.0
  %1672 = vmatprep.subr.mxu0 0.0
  %1673 = vmatpush1.msra.mxu0 0.0
  %1674 = vmatprep.subr.mxu0 0.0
  %1675 = vmatpush1.msra.mxu0 0.0
  %1676 = vmatprep.subr.mxu0 0.0
  %1677 = vmatpush1.msra.mxu0 0.0
  %1678 = vmatprep.subr.mxu0 0.0
  %1679 = vmatpush1.msra.mxu0 0.0
  %1680 = vmatprep.subr.mxu0 0.0
  %1681 = vmatpush1.msra.mxu0 0.0
  %1682 = vmatprep.subr.mxu0 0.0
  %1683 = vmatpush1.msra.mxu0 0.0
  %1684 = vmatprep.subr.mxu0 0.0
  %1685 = vmatpush1.msra.mxu0 0.0
  %1686 = vmatprep.subr.mxu0 0.0
  %1687 = vmatpush1.msra.mxu0 0.0
  %1688 = vmatprep.subr.mxu0 0.0
  %1689 = vmatpush1.msra.mxu0 0.0
  %1690 = vmatprep.subr.mxu0 0.0
  %1691 = vmatpush1.msra.mxu0 0.0
  %1692 = vmatprep.subr.mxu0 0.0
  %1693 = vmatpush1.msra.mxu0 0.0
  %1694 = vmatprep.subr.mxu0 0.0
  %1695 = vmatpush1.msra.mxu0 0.0
  %1696 = vmatprep.mubr.f32.mxu0 0.0
  %1697 = vmatmul.mubr.f32.gmra.mrb[0].mxu0 %v1630
  %v1698 = vpop.f32.mrb[0].mxu0
  %v1699 = vadd.f32 0.0, %v1698
  %v1700 = vpop.f32.mrb[0].mxu0
  %1701 = vdwg.mxu0
  %v1703 = vrot.slane %v1699, 2
  %v1705 = vadd.f32 %v138, %v1703
  %v1706 = vxor.u32 %v1705, 2147483648
  %v1707 = vmul.f32 %v1706, 1.442695
  %v1708 = vpow.pop %v1707
  %v1709 = vadd.f32 %v1708, 1.0
  %v1710 = vrcp.pop %v1709
  %v1711 = vmul.f32 1.0, %v1710
  %v1712 = vtanh.pop %v1705
  %v1714 = vrot.slane %v1512, 6
  %v1716 = vmul.f32 %v1711, %v1714
  %1718 = vrot.lane.b32.xlu0 %v1712, 80
  %v1719 = vpop.permute.xlu0 %1718
  %v1721 = vmul.f32 %v1711, %v1719
  %1723 = vrot.lane.b32.xlu0 %v1721, 16
  %v1724 = vpop.permute.xlu0 %1723
  %v1726 = vadd.f32 %v1716, %v1724
  %v1727 = vtanh.pop %v1726
  %1729 = vrot.lane.b32.xlu0 %v1727, 16
  %v1730 = vpop.permute.xlu0 %1729
  %v1732 = vmul.f32 %v1711, %v1730
  %1734 = vrot.lane.b32.xlu0 %v1732, 96
  %v1735 = vpop.permute.xlu0 %1734
  %v1738 = vrot.slane %v1626, 2
  %1739 = vrot.lane.b32.xlu0 %v1738, 112
  %v1740 = vpop.permute.xlu0 %1739
  %v1742 = vsel %vm59, %v1735, %v1740
  %v1744 = vrot.slane %v1742, 6
  %v1745 = vsel %vm252, %v1744, 0
  %1747 = vmatprep.subr.mxu0 0.0
  %1748 = vmatpush1.msra.mxu0 %v24
  %1749 = vmatprep.subr.mxu0 0.0
  %1750 = vmatpush1.msra.mxu0 %v25
  %1751 = vmatprep.subr.mxu0 0.0
  %1752 = vmatpush1.msra.mxu0 %v26
  %1753 = vmatprep.subr.mxu0 0.0
  %1754 = vmatpush1.msra.mxu0 %v27
  %1755 = vmatprep.subr.mxu0 0.0
  %1756 = vmatpush1.msra.mxu0 0.0
  %1757 = vmatprep.subr.mxu0 0.0
  %1758 = vmatpush1.msra.mxu0 0.0
  %1759 = vmatprep.subr.mxu0 0.0
  %1760 = vmatpush1.msra.mxu0 0.0
  %1761 = vmatprep.subr.mxu0 0.0
  %1762 = vmatpush1.msra.mxu0 0.0
  %1763 = vmatprep.subr.mxu0 0.0
  %1764 = vmatpush1.msra.mxu0 0.0
  %1765 = vmatprep.subr.mxu0 0.0
  %1766 = vmatpush1.msra.mxu0 0.0
  %1767 = vmatprep.subr.mxu0 0.0
  %1768 = vmatpush1.msra.mxu0 0.0
  %1769 = vmatprep.subr.mxu0 0.0
  %1770 = vmatpush1.msra.mxu0 0.0
  %1771 = vmatprep.subr.mxu0 0.0
  %1772 = vmatpush1.msra.mxu0 0.0
  %1773 = vmatprep.subr.mxu0 0.0
  %1774 = vmatpush1.msra.mxu0 0.0
  %1775 = vmatprep.subr.mxu0 0.0
  %1776 = vmatpush1.msra.mxu0 0.0
  %1777 = vmatprep.subr.mxu0 0.0
  %1778 = vmatpush1.msra.mxu0 0.0
  %1779 = vmatprep.subr.mxu0 0.0
  %1780 = vmatpush1.msra.mxu0 0.0
  %1781 = vmatprep.subr.mxu0 0.0
  %1782 = vmatpush1.msra.mxu0 0.0
  %1783 = vmatprep.subr.mxu0 0.0
  %1784 = vmatpush1.msra.mxu0 0.0
  %1785 = vmatprep.subr.mxu0 0.0
  %1786 = vmatpush1.msra.mxu0 0.0
  %1787 = vmatprep.subr.mxu0 0.0
  %1788 = vmatpush1.msra.mxu0 0.0
  %1789 = vmatprep.subr.mxu0 0.0
  %1790 = vmatpush1.msra.mxu0 0.0
  %1791 = vmatprep.subr.mxu0 0.0
  %1792 = vmatpush1.msra.mxu0 0.0
  %1793 = vmatprep.subr.mxu0 0.0
  %1794 = vmatpush1.msra.mxu0 0.0
  %1795 = vmatprep.subr.mxu0 0.0
  %1796 = vmatpush1.msra.mxu0 0.0
  %1797 = vmatprep.subr.mxu0 0.0
  %1798 = vmatpush1.msra.mxu0 0.0
  %1799 = vmatprep.subr.mxu0 0.0
  %1800 = vmatpush1.msra.mxu0 0.0
  %1801 = vmatprep.subr.mxu0 0.0
  %1802 = vmatpush1.msra.mxu0 0.0
  %1803 = vmatprep.subr.mxu0 0.0
  %1804 = vmatpush1.msra.mxu0 0.0
  %1805 = vmatprep.subr.mxu0 0.0
  %1806 = vmatpush1.msra.mxu0 0.0
  %1807 = vmatprep.subr.mxu0 0.0
  %1808 = vmatpush1.msra.mxu0 0.0
  %1809 = vmatprep.subr.mxu0 0.0
  %1810 = vmatpush1.msra.mxu0 0.0
  %1811 = vmatprep.mubr.f32.mxu0 0.0
  %1812 = vmatmul.mubr.f32.gmra.mrb[0].mxu0 %v1745
  %v1813 = vpop.f32.mrb[0].mxu0
  %v1814 = vadd.f32 %v43, %v1813
  %v1815 = vpop.f32.mrb[0].mxu0
  %1816 = vdwg.mxu0
  %v1817 = vxor.u32 %v1814, 2147483648
  %v1818 = vmul.f32 %v1817, 1.442695
  %v1819 = vpow.pop %v1818
  %v1820 = vadd.f32 %v1819, 1.0
  %v1821 = vrcp.pop %v1820
  %v1822 = vmul.f32 1.0, %v1821
  %v1823 = vtanh.pop %v1814
  %v1824 = vmul.f32 %v1822, %v1620
  %1826 = vrot.lane.b32.xlu0 %v1823, 80
  %v1827 = vpop.permute.xlu0 %1826
  %v1829 = vmul.f32 %v1822, %v1827
  %1831 = vrot.lane.b32.xlu0 %v1829, 16
  %v1832 = vpop.permute.xlu0 %1831
  %v1834 = vadd.f32 %v1824, %v1832
  %v1835 = vtanh.pop %v1834
  %1837 = vrot.lane.b32.xlu0 %v1835, 16
  %v1838 = vpop.permute.xlu0 %1837
  %v1840 = vmul.f32 %v1822, %v1838
  %v1841 = vlaneseq
  %v1842 = vshrl.u32 %v1841, 7
  %v1843 = vsub.s32 0, %v1842
  %v1844 = vrot.slane %v54, %v1843
  %v1845 = vrot.slane %v15, 6
  %v1846 = vsel %vm59, %v1845, 0
  %1848 = vmatprep.subr.mxu0 0.0
  %1849 = vmatpush1.msra.mxu0 %v36
  %1850 = vmatprep.subr.mxu0 0.0
  %1851 = vmatpush1.msra.mxu0 %v37
  %1852 = vmatprep.subr.mxu0 0.0
  %1853 = vmatpush1.msra.mxu0 0.0
  %1854 = vmatprep.subr.mxu0 0.0
  %1855 = vmatpush1.msra.mxu0 0.0
  %1856 = vmatprep.subr.mxu0 0.0
  %1857 = vmatpush1.msra.mxu0 0.0
  %1858 = vmatprep.subr.mxu0 0.0
  %1859 = vmatpush1.msra.mxu0 0.0
  %1860 = vmatprep.subr.mxu0 0.0
  %1861 = vmatpush1.msra.mxu0 0.0
  %1862 = vmatprep.subr.mxu0 0.0
  %1863 = vmatpush1.msra.mxu0 0.0
  %1864 = vmatprep.subr.mxu0 0.0
  %1865 = vmatpush1.msra.mxu0 0.0
  %1866 = vmatprep.subr.mxu0 0.0
  %1867 = vmatpush1.msra.mxu0 0.0
  %1868 = vmatprep.subr.mxu0 0.0
  %1869 = vmatpush1.msra.mxu0 0.0
  %1870 = vmatprep.subr.mxu0 0.0
  %1871 = vmatpush1.msra.mxu0 0.0
  %1872 = vmatprep.subr.mxu0 0.0
  %1873 = vmatpush1.msra.mxu0 0.0
  %1874 = vmatprep.subr.mxu0 0.0
  %1875 = vmatpush1.msra.mxu0 0.0
  %1876 = vmatprep.subr.mxu0 0.0
  %1877 = vmatpush1.msra.mxu0 0.0
  %1878 = vmatprep.subr.mxu0 0.0
  %1879 = vmatpush1.msra.mxu0 0.0
  %1880 = vmatprep.subr.mxu0 0.0
  %1881 = vmatpush1.msra.mxu0 0.0
  %1882 = vmatprep.subr.mxu0 0.0
  %1883 = vmatpush1.msra.mxu0 0.0
  %1884 = vmatprep.subr.mxu0 0.0
  %1885 = vmatpush1.msra.mxu0 0.0
  %1886 = vmatprep.subr.mxu0 0.0
  %1887 = vmatpush1.msra.mxu0 0.0
  %1888 = vmatprep.subr.mxu0 0.0
  %1889 = vmatpush1.msra.mxu0 0.0
  %1890 = vmatprep.subr.mxu0 0.0
  %1891 = vmatpush1.msra.mxu0 0.0
  %1892 = vmatprep.subr.mxu0 0.0
  %1893 = vmatpush1.msra.mxu0 0.0
  %1894 = vmatprep.subr.mxu0 0.0
  %1895 = vmatpush1.msra.mxu0 0.0
  %1896 = vmatprep.subr.mxu0 0.0
  %1897 = vmatpush1.msra.mxu0 0.0
  %1898 = vmatprep.subr.mxu0 0.0
  %1899 = vmatpush1.msra.mxu0 0.0
  %1900 = vmatprep.subr.mxu0 0.0
  %1901 = vmatpush1.msra.mxu0 0.0
  %1902 = vmatprep.subr.mxu0 0.0
  %1903 = vmatpush1.msra.mxu0 0.0
  %1904 = vmatprep.subr.mxu0 0.0
  %1905 = vmatpush1.msra.mxu0 0.0
  %1906 = vmatprep.subr.mxu0 0.0
  %1907 = vmatpush1.msra.mxu0 0.0
  %1908 = vmatprep.subr.mxu0 0.0
  %1909 = vmatpush1.msra.mxu0 0.0
  %1910 = vmatprep.subr.mxu0 0.0
  %1911 = vmatpush1.msra.mxu0 0.0
  %1912 = vmatprep.mubr.f32.mxu0 0.0
  %1913 = vmatmul.mubr.f32.gmra.mrb[0].mxu0 %v1846
  %v1914 = vpop.f32.mrb[0].mxu0
  %v1915 = vadd.f32 %v1844, %v1914
  %v1916 = vpop.f32.mrb[0].mxu0
  %1917 = vdwg.mxu0
  %v1918 = vrot.slane %v1732, 6
  %1919 = vrot.lane.b32.xlu0 %v1918, 112
  %v1920 = vpop.permute.xlu0 %1919
  %v1922 = vsel %vm59, %v1915, %v1920
  %v1924 = vsel %vm252, %v1922, 0
  %1926 = vmatprep.subr.mxu0 0.0
  %1927 = vmatpush1.msra.mxu0 %v28
  %1928 = vmatprep.subr.mxu0 0.0
  %1929 = vmatpush1.msra.mxu0 %v29
  %1930 = vmatprep.subr.mxu0 0.0
  %1931 = vmatpush1.msra.mxu0 %v30
  %1932 = vmatprep.subr.mxu0 0.0
  %1933 = vmatpush1.msra.mxu0 %v31
  %1934 = vmatprep.subr.mxu0 0.0
  %1935 = vmatpush1.msra.mxu0 0.0
  %1936 = vmatprep.subr.mxu0 0.0
  %1937 = vmatpush1.msra.mxu0 0.0
  %1938 = vmatprep.subr.mxu0 0.0
  %1939 = vmatpush1.msra.mxu0 0.0
  %1940 = vmatprep.subr.mxu0 0.0
  %1941 = vmatpush1.msra.mxu0 0.0
  %1942 = vmatprep.subr.mxu0 0.0
  %1943 = vmatpush1.msra.mxu0 0.0
  %1944 = vmatprep.subr.mxu0 0.0
  %1945 = vmatpush1.msra.mxu0 0.0
  %1946 = vmatprep.subr.mxu0 0.0
  %1947 = vmatpush1.msra.mxu0 0.0
  %1948 = vmatprep.subr.mxu0 0.0
  %1949 = vmatpush1.msra.mxu0 0.0
  %1950 = vmatprep.subr.mxu0 0.0
  %1951 = vmatpush1.msra.mxu0 0.0
  %1952 = vmatprep.subr.mxu0 0.0
  %1953 = vmatpush1.msra.mxu0 0.0
  %1954 = vmatprep.subr.mxu0 0.0
  %1955 = vmatpush1.msra.mxu0 0.0
  %1956 = vmatprep.subr.mxu0 0.0
  %1957 = vmatpush1.msra.mxu0 0.0
  %1958 = vmatprep.subr.mxu0 0.0
  %1959 = vmatpush1.msra.mxu0 0.0
  %1960 = vmatprep.subr.mxu0 0.0
  %1961 = vmatpush1.msra.mxu0 0.0
  %1962 = vmatprep.subr.mxu0 0.0
  %1963 = vmatpush1.msra.mxu0 0.0
  %1964 = vmatprep.subr.mxu0 0.0
  %1965 = vmatpush1.msra.mxu0 0.0
  %1966 = vmatprep.subr.mxu0 0.0
  %1967 = vmatpush1.msra.mxu0 0.0
  %1968 = vmatprep.subr.mxu0 0.0
  %1969 = vmatpush1.msra.mxu0 0.0
  %1970 = vmatprep.subr.mxu0 0.0
  %1971 = vmatpush1.msra.mxu0 0.0
  %1972 = vmatprep.subr.mxu0 0.0
  %1973 = vmatpush1.msra.mxu0 0.0
  %1974 = vmatprep.subr.mxu0 0.0
  %1975 = vmatpush1.msra.mxu0 0.0
  %1976 = vmatprep.subr.mxu0 0.0
  %1977 = vmatpush1.msra.mxu0 0.0
  %1978 = vmatprep.subr.mxu0 0.0
  %1979 = vmatpush1.msra.mxu0 0.0
  %1980 = vmatprep.subr.mxu0 0.0
  %1981 = vmatpush1.msra.mxu0 0.0
  %1982 = vmatprep.subr.mxu0 0.0
  %1983 = vmatpush1.msra.mxu0 0.0
  %1984 = vmatprep.subr.mxu0 0.0
  %1985 = vmatpush1.msra.mxu0 0.0
  %1986 = vmatprep.subr.mxu0 0.0
  %1987 = vmatpush1.msra.mxu0 0.0
  %1988 = vmatprep.subr.mxu0 0.0
  %1989 = vmatpush1.msra.mxu0 0.0
  %1990 = vmatprep.mubr.f32.mxu0 0.0
  %1991 = vmatmul.mubr.f32.gmra.mrb[0].mxu0 %v1924
  %v1992 = vpop.f32.mrb[0].mxu0
  %v1993 = vadd.f32 %v48, %v1992
  %v1994 = vpop.f32.mrb[0].mxu0
  %1995 = vdwg.mxu0
  %v1996 = vxor.u32 %v1993, 2147483648
  %v1997 = vmul.f32 %v1996, 1.442695
  %v1998 = vpow.pop %v1997
  %v1999 = vadd.f32 %v1998, 1.0
  %v2000 = vrcp.pop %v1999
  %v2001 = vmul.f32 1.0, %v2000
  %v2002 = vtanh.pop %v1993
  %v2004 = vrot.slane %v1726, 6
  %v2006 = vmul.f32 %v2001, %v2004
  %2008 = vrot.lane.b32.xlu0 %v2002, 80
  %v2009 = vpop.permute.xlu0 %2008
  %v2011 = vmul.f32 %v2001, %v2009
  %2013 = vrot.lane.b32.xlu0 %v2011, 16
  %v2014 = vpop.permute.xlu0 %2013
  %v2016 = vadd.f32 %v2006, %v2014
  %v2017 = vtanh.pop %v2016
  %2019 = vrot.lane.b32.xlu0 %v2017, 16
  %v2020 = vpop.permute.xlu0 %2019
  %v2022 = vmul.f32 %v2001, %v2020
  %2024 = vrot.lane.b32.xlu0 %v2022, 96
  %v2025 = vpop.permute.xlu0 %2024
  %2028 = vrot.lane.b32.xlu0 %v1840, 112
  %v2029 = vpop.permute.xlu0 %2028
  %v2031 = vsel %vm59, %v2025, %v2029
  %v2033 = vsel %vm252, %v2031, 0
  %2035 = vmatprep.subr.mxu0 0.0
  %2036 = vmatpush1.msra.mxu0 %v32
  %2037 = vmatprep.subr.mxu0 0.0
  %2038 = vmatpush1.msra.mxu0 %v33
  %2039 = vmatprep.subr.mxu0 0.0
  %2040 = vmatpush1.msra.mxu0 %v34
  %2041 = vmatprep.subr.mxu0 0.0
  %2042 = vmatpush1.msra.mxu0 %v35
  %2043 = vmatprep.subr.mxu0 0.0
  %2044 = vmatpush1.msra.mxu0 0.0
  %2045 = vmatprep.subr.mxu0 0.0
  %2046 = vmatpush1.msra.mxu0 0.0
  %2047 = vmatprep.subr.mxu0 0.0
  %2048 = vmatpush1.msra.mxu0 0.0
  %2049 = vmatprep.subr.mxu0 0.0
  %2050 = vmatpush1.msra.mxu0 0.0
  %2051 = vmatprep.subr.mxu0 0.0
  %2052 = vmatpush1.msra.mxu0 0.0
  %2053 = vmatprep.subr.mxu0 0.0
  %2054 = vmatpush1.msra.mxu0 0.0
  %2055 = vmatprep.subr.mxu0 0.0
  %2056 = vmatpush1.msra.mxu0 0.0
  %2057 = vmatprep.subr.mxu0 0.0
  %2058 = vmatpush1.msra.mxu0 0.0
  %2059 = vmatprep.subr.mxu0 0.0
  %2060 = vmatpush1.msra.mxu0 0.0
  %2061 = vmatprep.subr.mxu0 0.0
  %2062 = vmatpush1.msra.mxu0 0.0
  %2063 = vmatprep.subr.mxu0 0.0
  %2064 = vmatpush1.msra.mxu0 0.0
  %2065 = vmatprep.subr.mxu0 0.0
  %2066 = vmatpush1.msra.mxu0 0.0
  %2067 = vmatprep.subr.mxu0 0.0
  %2068 = vmatpush1.msra.mxu0 0.0
  %2069 = vmatprep.subr.mxu0 0.0
  %2070 = vmatpush1.msra.mxu0 0.0
  %2071 = vmatprep.subr.mxu0 0.0
  %2072 = vmatpush1.msra.mxu0 0.0
  %2073 = vmatprep.subr.mxu0 0.0
  %2074 = vmatpush1.msra.mxu0 0.0
  %2075 = vmatprep.subr.mxu0 0.0
  %2076 = vmatpush1.msra.mxu0 0.0
  %2077 = vmatprep.subr.mxu0 0.0
  %2078 = vmatpush1.msra.mxu0 0.0
  %2079 = vmatprep.subr.mxu0 0.0
  %2080 = vmatpush1.msra.mxu0 0.0
  %2081 = vmatprep.subr.mxu0 0.0
  %2082 = vmatpush1.msra.mxu0 0.0
  %2083 = vmatprep.subr.mxu0 0.0
  %2084 = vmatpush1.msra.mxu0 0.0
  %2085 = vmatprep.subr.mxu0 0.0
  %2086 = vmatpush1.msra.mxu0 0.0
  %2087 = vmatprep.subr.mxu0 0.0
  %2088 = vmatpush1.msra.mxu0 0.0
  %2089 = vmatprep.subr.mxu0 0.0
  %2090 = vmatpush1.msra.mxu0 0.0
  %2091 = vmatprep.subr.mxu0 0.0
  %2092 = vmatpush1.msra.mxu0 0.0
  %2093 = vmatprep.subr.mxu0 0.0
  %2094 = vmatpush1.msra.mxu0 0.0
  %2095 = vmatprep.subr.mxu0 0.0
  %2096 = vmatpush1.msra.mxu0 0.0
  %2097 = vmatprep.subr.mxu0 0.0
  %2098 = vmatpush1.msra.mxu0 0.0
  %2099 = vmatprep.mubr.f32.mxu0 0.0
  %2100 = vmatmul.mubr.f32.gmra.mrb[0].mxu0 %v2033
  %v2101 = vpop.f32.mrb[0].mxu0
  %v2102 = vadd.f32 %v53, %v2101
  %v2103 = vpop.f32.mrb[0].mxu0
  %2104 = vdwg.mxu0
  %v2105 = vxor.u32 %v2102, 2147483648
  %v2106 = vmul.f32 %v2105, 1.442695
  %v2107 = vpow.pop %v2106
  %v2108 = vadd.f32 %v2107, 1.0
  %v2109 = vrcp.pop %v2108
  %v2110 = vmul.f32 1.0, %v2109
  %v2111 = vtanh.pop %v2102
  %v2112 = vmul.f32 %v2110, %v1834
  %2114 = vrot.lane.b32.xlu0 %v2111, 80
  %v2115 = vpop.permute.xlu0 %2114
  %v2117 = vmul.f32 %v2110, %v2115
  %2119 = vrot.lane.b32.xlu0 %v2117, 16
  %v2120 = vpop.permute.xlu0 %2119
  %v2122 = vadd.f32 %v2112, %v2120
  %v2123 = vtanh.pop %v2122
  %2125 = vrot.lane.b32.xlu0 %v2123, 16
  %v2126 = vpop.permute.xlu0 %2125
  %v2128 = vmul.f32 %v2110, %v2126
  %2130 = vrot.lane.b32.xlu0 %v2128, 96
  %v2131 = vpop.permute.xlu0 %2130
  %2133 = vrot.lane.b32.xlu0 %v2022, 112
  %v2134 = vpop.permute.xlu0 %2133
  %v2136 = vsel %vm59, %v2131, %v2134
  %v2138 = vsel %vm252, %v2136, 0
  %2140 = vmatprep.subr.mxu0 0.0
  %2141 = vmatpush1.msra.mxu0 %v28
  %2142 = vmatprep.subr.mxu0 0.0
  %2143 = vmatpush1.msra.mxu0 %v29
  %2144 = vmatprep.subr.mxu0 0.0
  %2145 = vmatpush1.msra.mxu0 %v30
  %2146 = vmatprep.subr.mxu0 0.0
  %2147 = vmatpush1.msra.mxu0 %v31
  %2148 = vmatprep.subr.mxu0 0.0
  %2149 = vmatpush1.msra.mxu0 0.0
  %2150 = vmatprep.subr.mxu0 0.0
  %2151 = vmatpush1.msra.mxu0 0.0
  %2152 = vmatprep.subr.mxu0 0.0
  %2153 = vmatpush1.msra.mxu0 0.0
  %2154 = vmatprep.subr.mxu0 0.0
  %2155 = vmatpush1.msra.mxu0 0.0
  %2156 = vmatprep.subr.mxu0 0.0
  %2157 = vmatpush1.msra.mxu0 0.0
  %2158 = vmatprep.subr.mxu0 0.0
  %2159 = vmatpush1.msra.mxu0 0.0
  %2160 = vmatprep.subr.mxu0 0.0
  %2161 = vmatpush1.msra.mxu0 0.0
  %2162 = vmatprep.subr.mxu0 0.0
  %2163 = vmatpush1.msra.mxu0 0.0
  %2164 = vmatprep.subr.mxu0 0.0
  %2165 = vmatpush1.msra.mxu0 0.0
  %2166 = vmatprep.subr.mxu0 0.0
  %2167 = vmatpush1.msra.mxu0 0.0
  %2168 = vmatprep.subr.mxu0 0.0
  %2169 = vmatpush1.msra.mxu0 0.0
  %2170 = vmatprep.subr.mxu0 0.0
  %2171 = vmatpush1.msra.mxu0 0.0
  %2172 = vmatprep.subr.mxu0 0.0
  %2173 = vmatpush1.msra.mxu0 0.0
  %2174 = vmatprep.subr.mxu0 0.0
  %2175 = vmatpush1.msra.mxu0 0.0
  %2176 = vmatprep.subr.mxu0 0.0
  %2177 = vmatpush1.msra.mxu0 0.0
  %2178 = vmatprep.subr.mxu0 0.0
  %2179 = vmatpush1.msra.mxu0 0.0
  %2180 = vmatprep.subr.mxu0 0.0
  %2181 = vmatpush1.msra.mxu0 0.0
  %2182 = vmatprep.subr.mxu0 0.0
  %2183 = vmatpush1.msra.mxu0 0.0
  %2184 = vmatprep.subr.mxu0 0.0
  %2185 = vmatpush1.msra.mxu0 0.0
  %2186 = vmatprep.subr.mxu0 0.0
  %2187 = vmatpush1.msra.mxu0 0.0
  %2188 = vmatprep.subr.mxu0 0.0
  %2189 = vmatpush1.msra.mxu0 0.0
  %2190 = vmatprep.subr.mxu0 0.0
  %2191 = vmatpush1.msra.mxu0 0.0
  %2192 = vmatprep.subr.mxu0 0.0
  %2193 = vmatpush1.msra.mxu0 0.0
  %2194 = vmatprep.subr.mxu0 0.0
  %2195 = vmatpush1.msra.mxu0 0.0
  %2196 = vmatprep.subr.mxu0 0.0
  %2197 = vmatpush1.msra.mxu0 0.0
  %2198 = vmatprep.subr.mxu0 0.0
  %2199 = vmatpush1.msra.mxu0 0.0
  %2200 = vmatprep.subr.mxu0 0.0
  %2201 = vmatpush1.msra.mxu0 0.0
  %2202 = vmatprep.subr.mxu0 0.0
  %2203 = vmatpush1.msra.mxu0 0.0
  %2204 = vmatprep.mubr.f32.mxu0 0.0
  %2205 = vmatmul.mubr.f32.gmra.mrb[0].mxu0 %v2138
  %v2206 = vpop.f32.mrb[0].mxu0
  %v2207 = vadd.f32 %v48, %v2206
  %v2208 = vpop.f32.mrb[0].mxu0
  %2209 = vdwg.mxu0
  %v2210 = vxor.u32 %v2207, 2147483648
  %v2211 = vmul.f32 %v2210, 1.442695
  %v2212 = vpow.pop %v2211
  %v2213 = vadd.f32 %v2212, 1.0
  %v2214 = vrcp.pop %v2213
  %v2215 = vmul.f32 1.0, %v2214
  %v2216 = vtanh.pop %v2207
  %v2217 = vmul.f32 %v2215, %v2016
  %2219 = vrot.lane.b32.xlu0 %v2216, 80
  %v2220 = vpop.permute.xlu0 %2219
  %v2222 = vmul.f32 %v2215, %v2220
  %2224 = vrot.lane.b32.xlu0 %v2222, 16
  %v2225 = vpop.permute.xlu0 %2224
  %v2227 = vadd.f32 %v2217, %v2225
  %v2228 = vtanh.pop %v2227
  %2230 = vrot.lane.b32.xlu0 %v2228, 16
  %v2231 = vpop.permute.xlu0 %2230
  %v2233 = vmul.f32 %v2215, %v2231
  %2235 = vrot.lane.b32.xlu0 %v2233, 96
  %v2236 = vpop.permute.xlu0 %2235
  %2238 = vrot.lane.b32.xlu0 %v2128, 112
  %v2239 = vpop.permute.xlu0 %2238
  %v2241 = vsel %vm59, %v2236, %v2239
  %v2243 = vsel %vm252, %v2241, 0
  %2245 = vmatprep.subr.mxu0 0.0
  %2246 = vmatpush1.msra.mxu0 %v32
  %2247 = vmatprep.subr.mxu0 0.0
  %2248 = vmatpush1.msra.mxu0 %v33
  %2249 = vmatprep.subr.mxu0 0.0
  %2250 = vmatpush1.msra.mxu0 %v34
  %2251 = vmatprep.subr.mxu0 0.0
  %2252 = vmatpush1.msra.mxu0 %v35
  %2253 = vmatprep.subr.mxu0 0.0
  %2254 = vmatpush1.msra.mxu0 0.0
  %2255 = vmatprep.subr.mxu0 0.0
  %2256 = vmatpush1.msra.mxu0 0.0
  %2257 = vmatprep.subr.mxu0 0.0
  %2258 = vmatpush1.msra.mxu0 0.0
  %2259 = vmatprep.subr.mxu0 0.0
  %2260 = vmatpush1.msra.mxu0 0.0
  %2261 = vmatprep.subr.mxu0 0.0
  %2262 = vmatpush1.msra.mxu0 0.0
  %2263 = vmatprep.subr.mxu0 0.0
  %2264 = vmatpush1.msra.mxu0 0.0
  %2265 = vmatprep.subr.mxu0 0.0
  %2266 = vmatpush1.msra.mxu0 0.0
  %2267 = vmatprep.subr.mxu0 0.0
  %2268 = vmatpush1.msra.mxu0 0.0
  %2269 = vmatprep.subr.mxu0 0.0
  %2270 = vmatpush1.msra.mxu0 0.0
  %2271 = vmatprep.subr.mxu0 0.0
  %2272 = vmatpush1.msra.mxu0 0.0
  %2273 = vmatprep.subr.mxu0 0.0
  %2274 = vmatpush1.msra.mxu0 0.0
  %2275 = vmatprep.subr.mxu0 0.0
  %2276 = vmatpush1.msra.mxu0 0.0
  %2277 = vmatprep.subr.mxu0 0.0
  %2278 = vmatpush1.msra.mxu0 0.0
  %2279 = vmatprep.subr.mxu0 0.0
  %2280 = vmatpush1.msra.mxu0 0.0
  %2281 = vmatprep.subr.mxu0 0.0
  %2282 = vmatpush1.msra.mxu0 0.0
  %2283 = vmatprep.subr.mxu0 0.0
  %2284 = vmatpush1.msra.mxu0 0.0
  %2285 = vmatprep.subr.mxu0 0.0
  %2286 = vmatpush1.msra.mxu0 0.0
  %2287 = vmatprep.subr.mxu0 0.0
  %2288 = vmatpush1.msra.mxu0 0.0
  %2289 = vmatprep.subr.mxu0 0.0
  %2290 = vmatpush1.msra.mxu0 0.0
  %2291 = vmatprep.subr.mxu0 0.0
  %2292 = vmatpush1.msra.mxu0 0.0
  %2293 = vmatprep.subr.mxu0 0.0
  %2294 = vmatpush1.msra.mxu0 0.0
  %2295 = vmatprep.subr.mxu0 0.0
  %2296 = vmatpush1.msra.mxu0 0.0
  %2297 = vmatprep.subr.mxu0 0.0
  %2298 = vmatpush1.msra.mxu0 0.0
  %2299 = vmatprep.subr.mxu0 0.0
  %2300 = vmatpush1.msra.mxu0 0.0
  %2301 = vmatprep.subr.mxu0 0.0
  %2302 = vmatpush1.msra.mxu0 0.0
  %2303 = vmatprep.subr.mxu0 0.0
  %2304 = vmatpush1.msra.mxu0 0.0
  %2305 = vmatprep.subr.mxu0 0.0
  %2306 = vmatpush1.msra.mxu0 0.0
  %2307 = vmatprep.subr.mxu0 0.0
  %2308 = vmatpush1.msra.mxu0 0.0
  %2309 = vmatprep.mubr.f32.mxu0 0.0
  %2310 = vmatmul.mubr.f32.gmra.mrb[0].mxu0 %v2243
  %v2311 = vpop.f32.mrb[0].mxu0
  %v2312 = vadd.f32 %v53, %v2311
  %v2313 = vpop.f32.mrb[0].mxu0
  %2314 = vdwg.mxu0
  %v2315 = vxor.u32 %v2312, 2147483648
  %v2316 = vmul.f32 %v2315, 1.442695
  %v2317 = vpow.pop %v2316
  %v2318 = vadd.f32 %v2317, 1.0
  %v2319 = vrcp.pop %v2318
  %v2320 = vmul.f32 1.0, %v2319
  %v2321 = vtanh.pop %v2312
  %v2322 = vmul.f32 %v2320, %v2122
  %2324 = vrot.lane.b32.xlu0 %v2321, 80
  %v2325 = vpop.permute.xlu0 %2324
  %v2327 = vmul.f32 %v2320, %v2325
  %2329 = vrot.lane.b32.xlu0 %v2327, 16
  %v2330 = vpop.permute.xlu0 %2329
  %v2332 = vadd.f32 %v2322, %v2330
  %v2333 = vtanh.pop %v2332
  %2335 = vrot.lane.b32.xlu0 %v2333, 16
  %v2336 = vpop.permute.xlu0 %2335
  %v2338 = vmul.f32 %v2320, %v2336
  %2340 = vrot.lane.b32.xlu0 %v2338, 96
  %v2341 = vpop.permute.xlu0 %2340
  %2343 = vrot.lane.b32.xlu0 %v2233, 112
  %v2344 = vpop.permute.xlu0 %2343
  %v2346 = vsel %vm59, %v2341, %v2344
  %v2348 = vsel %vm252, %v2346, 0
  %2350 = vmatprep.subr.mxu0 0.0
  %2351 = vmatpush1.msra.mxu0 %v28
  %2352 = vmatprep.subr.mxu0 0.0
  %2353 = vmatpush1.msra.mxu0 %v29
  %2354 = vmatprep.subr.mxu0 0.0
  %2355 = vmatpush1.msra.mxu0 %v30
  %2356 = vmatprep.subr.mxu0 0.0
  %2357 = vmatpush1.msra.mxu0 %v31
  %2358 = vmatprep.subr.mxu0 0.0
  %2359 = vmatpush1.msra.mxu0 0.0
  %2360 = vmatprep.subr.mxu0 0.0
  %2361 = vmatpush1.msra.mxu0 0.0
  %2362 = vmatprep.subr.mxu0 0.0
  %2363 = vmatpush1.msra.mxu0 0.0
  %2364 = vmatprep.subr.mxu0 0.0
  %2365 = vmatpush1.msra.mxu0 0.0
  %2366 = vmatprep.subr.mxu0 0.0
  %2367 = vmatpush1.msra.mxu0 0.0
  %2368 = vmatprep.subr.mxu0 0.0
  %2369 = vmatpush1.msra.mxu0 0.0
  %2370 = vmatprep.subr.mxu0 0.0
  %2371 = vmatpush1.msra.mxu0 0.0
  %2372 = vmatprep.subr.mxu0 0.0
  %2373 = vmatpush1.msra.mxu0 0.0
  %2374 = vmatprep.subr.mxu0 0.0
  %2375 = vmatpush1.msra.mxu0 0.0
  %2376 = vmatprep.subr.mxu0 0.0
  %2377 = vmatpush1.msra.mxu0 0.0
  %2378 = vmatprep.subr.mxu0 0.0
  %2379 = vmatpush1.msra.mxu0 0.0
  %2380 = vmatprep.subr.mxu0 0.0
  %2381 = vmatpush1.msra.mxu0 0.0
  %2382 = vmatprep.subr.mxu0 0.0
  %2383 = vmatpush1.msra.mxu0 0.0
  %2384 = vmatprep.subr.mxu0 0.0
  %2385 = vmatpush1.msra.mxu0 0.0
  %2386 = vmatprep.subr.mxu0 0.0
  %2387 = vmatpush1.msra.mxu0 0.0
  %2388 = vmatprep.subr.mxu0 0.0
  %2389 = vmatpush1.msra.mxu0 0.0
  %2390 = vmatprep.subr.mxu0 0.0
  %2391 = vmatpush1.msra.mxu0 0.0
  %2392 = vmatprep.subr.mxu0 0.0
  %2393 = vmatpush1.msra.mxu0 0.0
  %2394 = vmatprep.subr.mxu0 0.0
  %2395 = vmatpush1.msra.mxu0 0.0
  %2396 = vmatprep.subr.mxu0 0.0
  %2397 = vmatpush1.msra.mxu0 0.0
  %2398 = vmatprep.subr.mxu0 0.0
  %2399 = vmatpush1.msra.mxu0 0.0
  %2400 = vmatprep.subr.mxu0 0.0
  %2401 = vmatpush1.msra.mxu0 0.0
  %2402 = vmatprep.subr.mxu0 0.0
  %2403 = vmatpush1.msra.mxu0 0.0
  %2404 = vmatprep.subr.mxu0 0.0
  %2405 = vmatpush1.msra.mxu0 0.0
  %2406 = vmatprep.subr.mxu0 0.0
  %2407 = vmatpush1.msra.mxu0 0.0
  %2408 = vmatprep.subr.mxu0 0.0
  %2409 = vmatpush1.msra.mxu0 0.0
  %2410 = vmatprep.subr.mxu0 0.0
  %2411 = vmatpush1.msra.mxu0 0.0
  %2412 = vmatprep.subr.mxu0 0.0
  %2413 = vmatpush1.msra.mxu0 0.0
  %2414 = vmatprep.mubr.f32.mxu0 0.0
  %2415 = vmatmul.mubr.f32.gmra.mrb[0].mxu0 %v2348
  %v2416 = vpop.f32.mrb[0].mxu0
  %v2417 = vadd.f32 %v48, %v2416
  %v2418 = vpop.f32.mrb[0].mxu0
  %2419 = vdwg.mxu0
  %v2420 = vxor.u32 %v2417, 2147483648
  %v2421 = vmul.f32 %v2420, 1.442695
  %v2422 = vpow.pop %v2421
  %v2423 = vadd.f32 %v2422, 1.0
  %v2424 = vrcp.pop %v2423
  %v2425 = vmul.f32 1.0, %v2424
  %v2426 = vtanh.pop %v2417
  %v2427 = vmul.f32 %v2425, %v2227
  %2429 = vrot.lane.b32.xlu0 %v2426, 80
  %v2430 = vpop.permute.xlu0 %2429
  %v2432 = vmul.f32 %v2425, %v2430
  %2434 = vrot.lane.b32.xlu0 %v2432, 16
  %v2435 = vpop.permute.xlu0 %2434
  %v2437 = vadd.f32 %v2427, %v2435
  %v2438 = vtanh.pop %v2437
  %2440 = vrot.lane.b32.xlu0 %v2438, 16
  %v2441 = vpop.permute.xlu0 %2440
  %v2443 = vmul.f32 %v2425, %v2441
  %2445 = vrot.lane.b32.xlu0 %v2443, 96
  %v2446 = vpop.permute.xlu0 %2445
  %2448 = vrot.lane.b32.xlu0 %v2338, 112
  %v2449 = vpop.permute.xlu0 %2448
  %v2451 = vsel %vm59, %v2446, %v2449
  %v2453 = vsel %vm252, %v2451, 0
  %2455 = vmatprep.subr.mxu0 0.0
  %2456 = vmatpush1.msra.mxu0 %v32
  %2457 = vmatprep.subr.mxu0 0.0
  %2458 = vmatpush1.msra.mxu0 %v33
  %2459 = vmatprep.subr.mxu0 0.0
  %2460 = vmatpush1.msra.mxu0 %v34
  %2461 = vmatprep.subr.mxu0 0.0
  %2462 = vmatpush1.msra.mxu0 %v35
  %2463 = vmatprep.subr.mxu0 0.0
  %2464 = vmatpush1.msra.mxu0 0.0
  %2465 = vmatprep.subr.mxu0 0.0
  %2466 = vmatpush1.msra.mxu0 0.0
  %2467 = vmatprep.subr.mxu0 0.0
  %2468 = vmatpush1.msra.mxu0 0.0
  %2469 = vmatprep.subr.mxu0 0.0
  %2470 = vmatpush1.msra.mxu0 0.0
  %2471 = vmatprep.subr.mxu0 0.0
  %2472 = vmatpush1.msra.mxu0 0.0
  %2473 = vmatprep.subr.mxu0 0.0
  %2474 = vmatpush1.msra.mxu0 0.0
  %2475 = vmatprep.subr.mxu0 0.0
  %2476 = vmatpush1.msra.mxu0 0.0
  %2477 = vmatprep.subr.mxu0 0.0
  %2478 = vmatpush1.msra.mxu0 0.0
  %2479 = vmatprep.subr.mxu0 0.0
  %2480 = vmatpush1.msra.mxu0 0.0
  %2481 = vmatprep.subr.mxu0 0.0
  %2482 = vmatpush1.msra.mxu0 0.0
  %2483 = vmatprep.subr.mxu0 0.0
  %2484 = vmatpush1.msra.mxu0 0.0
  %2485 = vmatprep.subr.mxu0 0.0
  %2486 = vmatpush1.msra.mxu0 0.0
  %2487 = vmatprep.subr.mxu0 0.0
  %2488 = vmatpush1.msra.mxu0 0.0
  %2489 = vmatprep.subr.mxu0 0.0
  %2490 = vmatpush1.msra.mxu0 0.0
  %2491 = vmatprep.subr.mxu0 0.0
  %2492 = vmatpush1.msra.mxu0 0.0
  %2493 = vmatprep.subr.mxu0 0.0
  %2494 = vmatpush1.msra.mxu0 0.0
  %2495 = vmatprep.subr.mxu0 0.0
  %2496 = vmatpush1.msra.mxu0 0.0
  %2497 = vmatprep.subr.mxu0 0.0
  %2498 = vmatpush1.msra.mxu0 0.0
  %2499 = vmatprep.subr.mxu0 0.0
  %2500 = vmatpush1.msra.mxu0 0.0
  %2501 = vmatprep.subr.mxu0 0.0
  %2502 = vmatpush1.msra.mxu0 0.0
  %2503 = vmatprep.subr.mxu0 0.0
  %2504 = vmatpush1.msra.mxu0 0.0
  %2505 = vmatprep.subr.mxu0 0.0
  %2506 = vmatpush1.msra.mxu0 0.0
  %2507 = vmatprep.subr.mxu0 0.0
  %2508 = vmatpush1.msra.mxu0 0.0
  %2509 = vmatprep.subr.mxu0 0.0
  %2510 = vmatpush1.msra.mxu0 0.0
  %2511 = vmatprep.subr.mxu0 0.0
  %2512 = vmatpush1.msra.mxu0 0.0
  %2513 = vmatprep.subr.mxu0 0.0
  %2514 = vmatpush1.msra.mxu0 0.0
  %2515 = vmatprep.subr.mxu0 0.0
  %2516 = vmatpush1.msra.mxu0 0.0
  %2517 = vmatprep.subr.mxu0 0.0
  %2518 = vmatpush1.msra.mxu0 0.0
  %2519 = vmatprep.mubr.f32.mxu0 0.0
  %2520 = vmatmul.mubr.f32.gmra.mrb[0].mxu0 %v2453
  %v2521 = vpop.f32.mrb[0].mxu0
  %v2522 = vadd.f32 %v53, %v2521
  %v2523 = vpop.f32.mrb[0].mxu0
  %2524 = vdwg.mxu0
  %v2525 = vxor.u32 %v2522, 2147483648
  %v2526 = vmul.f32 %v2525, 1.442695
  %v2527 = vpow.pop %v2526
  %v2528 = vadd.f32 %v2527, 1.0
  %v2529 = vrcp.pop %v2528
  %v2530 = vmul.f32 1.0, %v2529
  %v2531 = vtanh.pop %v2522
  %v2532 = vmul.f32 %v2530, %v2332
  %2534 = vrot.lane.b32.xlu0 %v2531, 80
  %v2535 = vpop.permute.xlu0 %2534
  %v2537 = vmul.f32 %v2530, %v2535
  %2539 = vrot.lane.b32.xlu0 %v2537, 16
  %v2540 = vpop.permute.xlu0 %2539
  %v2542 = vadd.f32 %v2532, %v2540
  %v2543 = vtanh.pop %v2542
  %2545 = vrot.lane.b32.xlu0 %v2543, 16
  %v2546 = vpop.permute.xlu0 %2545
  %v2548 = vmul.f32 %v2530, %v2546
  %2550 = vrot.lane.b32.xlu0 %v2548, 96
  %v2551 = vpop.permute.xlu0 %2550
  %2553 = vrot.lane.b32.xlu0 %v2443, 112
  %v2554 = vpop.permute.xlu0 %2553
  %v2556 = vsel %vm59, %v2551, %v2554
  %v2558 = vsel %vm252, %v2556, 0
  %2560 = vmatprep.subr.mxu0 0.0
  %2561 = vmatpush1.msra.mxu0 %v28
  %2562 = vmatprep.subr.mxu0 0.0
  %2563 = vmatpush1.msra.mxu0 %v29
  %2564 = vmatprep.subr.mxu0 0.0
  %2565 = vmatpush1.msra.mxu0 %v30
  %2566 = vmatprep.subr.mxu0 0.0
  %2567 = vmatpush1.msra.mxu0 %v31
  %2568 = vmatprep.subr.mxu0 0.0
  %2569 = vmatpush1.msra.mxu0 0.0
  %2570 = vmatprep.subr.mxu0 0.0
  %2571 = vmatpush1.msra.mxu0 0.0
  %2572 = vmatprep.subr.mxu0 0.0
  %2573 = vmatpush1.msra.mxu0 0.0
  %2574 = vmatprep.subr.mxu0 0.0
  %2575 = vmatpush1.msra.mxu0 0.0
  %2576 = vmatprep.subr.mxu0 0.0
  %2577 = vmatpush1.msra.mxu0 0.0
  %2578 = vmatprep.subr.mxu0 0.0
  %2579 = vmatpush1.msra.mxu0 0.0
  %2580 = vmatprep.subr.mxu0 0.0
  %2581 = vmatpush1.msra.mxu0 0.0
  %2582 = vmatprep.subr.mxu0 0.0
  %2583 = vmatpush1.msra.mxu0 0.0
  %2584 = vmatprep.subr.mxu0 0.0
  %2585 = vmatpush1.msra.mxu0 0.0
  %2586 = vmatprep.subr.mxu0 0.0
  %2587 = vmatpush1.msra.mxu0 0.0
  %2588 = vmatprep.subr.mxu0 0.0
  %2589 = vmatpush1.msra.mxu0 0.0
  %2590 = vmatprep.subr.mxu0 0.0
  %2591 = vmatpush1.msra.mxu0 0.0
  %2592 = vmatprep.subr.mxu0 0.0
  %2593 = vmatpush1.msra.mxu0 0.0
  %2594 = vmatprep.subr.mxu0 0.0
  %2595 = vmatpush1.msra.mxu0 0.0
  %2596 = vmatprep.subr.mxu0 0.0
  %2597 = vmatpush1.msra.mxu0 0.0
  %2598 = vmatprep.subr.mxu0 0.0
  %2599 = vmatpush1.msra.mxu0 0.0
  %2600 = vmatprep.subr.mxu0 0.0
  %2601 = vmatpush1.msra.mxu0 0.0
  %2602 = vmatprep.subr.mxu0 0.0
  %2603 = vmatpush1.msra.mxu0 0.0
  %2604 = vmatprep.subr.mxu0 0.0
  %2605 = vmatpush1.msra.mxu0 0.0
  %2606 = vmatprep.subr.mxu0 0.0
  %2607 = vmatpush1.msra.mxu0 0.0
  %2608 = vmatprep.subr.mxu0 0.0
  %2609 = vmatpush1.msra.mxu0 0.0
  %2610 = vmatprep.subr.mxu0 0.0
  %2611 = vmatpush1.msra.mxu0 0.0
  %2612 = vmatprep.subr.mxu0 0.0
  %2613 = vmatpush1.msra.mxu0 0.0
  %2614 = vmatprep.subr.mxu0 0.0
  %2615 = vmatpush1.msra.mxu0 0.0
  %2616 = vmatprep.subr.mxu0 0.0
  %2617 = vmatpush1.msra.mxu0 0.0
  %2618 = vmatprep.subr.mxu0 0.0
  %2619 = vmatpush1.msra.mxu0 0.0
  %2620 = vmatprep.subr.mxu0 0.0
  %2621 = vmatpush1.msra.mxu0 0.0
  %2622 = vmatprep.subr.mxu0 0.0
  %2623 = vmatpush1.msra.mxu0 0.0
  %2624 = vmatprep.mubr.f32.mxu0 0.0
  %2625 = vmatmul.mubr.f32.gmra.mrb[0].mxu0 %v2558
  %v2626 = vpop.f32.mrb[0].mxu0
  %v2627 = vadd.f32 %v48, %v2626
  %v2628 = vpop.f32.mrb[0].mxu0
  %2629 = vdwg.mxu0
  %v2630 = vxor.u32 %v2627, 2147483648
  %v2631 = vmul.f32 %v2630, 1.442695
  %v2632 = vpow.pop %v2631
  %v2633 = vadd.f32 %v2632, 1.0
  %v2634 = vrcp.pop %v2633
  %v2635 = vmul.f32 1.0, %v2634
  %v2636 = vtanh.pop %v2627
  %v2637 = vmul.f32 %v2635, %v2437
  %2639 = vrot.lane.b32.xlu0 %v2636, 80
  %v2640 = vpop.permute.xlu0 %2639
  %v2642 = vmul.f32 %v2635, %v2640
  %2644 = vrot.lane.b32.xlu0 %v2642, 16
  %v2645 = vpop.permute.xlu0 %2644
  %v2647 = vadd.f32 %v2637, %v2645
  %v2648 = vtanh.pop %v2647
  %2650 = vrot.lane.b32.xlu0 %v2648, 16
  %v2651 = vpop.permute.xlu0 %2650
  %v2653 = vmul.f32 %v2635, %v2651
  %2655 = vrot.lane.b32.xlu0 %v2653, 96
  %v2656 = vpop.permute.xlu0 %2655
  %2658 = vrot.lane.b32.xlu0 %v2548, 112
  %v2659 = vpop.permute.xlu0 %2658
  %v2661 = vsel %vm59, %v2656, %v2659
  %v2663 = vsel %vm252, %v2661, 0
  %2665 = vmatprep.subr.mxu0 0.0
  %2666 = vmatpush1.msra.mxu0 %v32
  %2667 = vmatprep.subr.mxu0 0.0
  %2668 = vmatpush1.msra.mxu0 %v33
  %2669 = vmatprep.subr.mxu0 0.0
  %2670 = vmatpush1.msra.mxu0 %v34
  %2671 = vmatprep.subr.mxu0 0.0
  %2672 = vmatpush1.msra.mxu0 %v35
  %2673 = vmatprep.subr.mxu0 0.0
  %2674 = vmatpush1.msra.mxu0 0.0
  %2675 = vmatprep.subr.mxu0 0.0
  %2676 = vmatpush1.msra.mxu0 0.0
  %2677 = vmatprep.subr.mxu0 0.0
  %2678 = vmatpush1.msra.mxu0 0.0
  %2679 = vmatprep.subr.mxu0 0.0
  %2680 = vmatpush1.msra.mxu0 0.0
  %2681 = vmatprep.subr.mxu0 0.0
  %2682 = vmatpush1.msra.mxu0 0.0
  %2683 = vmatprep.subr.mxu0 0.0
  %2684 = vmatpush1.msra.mxu0 0.0
  %2685 = vmatprep.subr.mxu0 0.0
  %2686 = vmatpush1.msra.mxu0 0.0
  %2687 = vmatprep.subr.mxu0 0.0
  %2688 = vmatpush1.msra.mxu0 0.0
  %2689 = vmatprep.subr.mxu0 0.0
  %2690 = vmatpush1.msra.mxu0 0.0
  %2691 = vmatprep.subr.mxu0 0.0
  %2692 = vmatpush1.msra.mxu0 0.0
  %2693 = vmatprep.subr.mxu0 0.0
  %2694 = vmatpush1.msra.mxu0 0.0
  %2695 = vmatprep.subr.mxu0 0.0
  %2696 = vmatpush1.msra.mxu0 0.0
  %2697 = vmatprep.subr.mxu0 0.0
  %2698 = vmatpush1.msra.mxu0 0.0
  %2699 = vmatprep.subr.mxu0 0.0
  %2700 = vmatpush1.msra.mxu0 0.0
  %2701 = vmatprep.subr.mxu0 0.0
  %2702 = vmatpush1.msra.mxu0 0.0
  %2703 = vmatprep.subr.mxu0 0.0
  %2704 = vmatpush1.msra.mxu0 0.0
  %2705 = vmatprep.subr.mxu0 0.0
  %2706 = vmatpush1.msra.mxu0 0.0
  %2707 = vmatprep.subr.mxu0 0.0
  %2708 = vmatpush1.msra.mxu0 0.0
  %2709 = vmatprep.subr.mxu0 0.0
  %2710 = vmatpush1.msra.mxu0 0.0
  %2711 = vmatprep.subr.mxu0 0.0
  %2712 = vmatpush1.msra.mxu0 0.0
  %2713 = vmatprep.subr.mxu0 0.0
  %2714 = vmatpush1.msra.mxu0 0.0
  %2715 = vmatprep.subr.mxu0 0.0
  %2716 = vmatpush1.msra.mxu0 0.0
  %2717 = vmatprep.subr.mxu0 0.0
  %2718 = vmatpush1.msra.mxu0 0.0
  %2719 = vmatprep.subr.mxu0 0.0
  %2720 = vmatpush1.msra.mxu0 0.0
  %2721 = vmatprep.subr.mxu0 0.0
  %2722 = vmatpush1.msra.mxu0 0.0
  %2723 = vmatprep.subr.mxu0 0.0
  %2724 = vmatpush1.msra.mxu0 0.0
  %2725 = vmatprep.subr.mxu0 0.0
  %2726 = vmatpush1.msra.mxu0 0.0
  %2727 = vmatprep.subr.mxu0 0.0
  %2728 = vmatpush1.msra.mxu0 0.0
  %2729 = vmatprep.mubr.f32.mxu0 0.0
  %2730 = vmatmul.mubr.f32.gmra.mrb[0].mxu0 %v2663
  %v2731 = vpop.f32.mrb[0].mxu0
  %v2732 = vadd.f32 %v53, %v2731
  %v2733 = vpop.f32.mrb[0].mxu0
  %2734 = vdwg.mxu0
  %v2735 = vxor.u32 %v2732, 2147483648
  %v2736 = vmul.f32 %v2735, 1.442695
  %v2737 = vpow.pop %v2736
  %v2738 = vadd.f32 %v2737, 1.0
  %v2739 = vrcp.pop %v2738
  %v2740 = vmul.f32 1.0, %v2739
  %v2741 = vtanh.pop %v2732
  %v2742 = vmul.f32 %v2740, %v2542
  %2744 = vrot.lane.b32.xlu0 %v2741, 80
  %v2745 = vpop.permute.xlu0 %2744
  %v2747 = vmul.f32 %v2740, %v2745
  %2749 = vrot.lane.b32.xlu0 %v2747, 16
  %v2750 = vpop.permute.xlu0 %2749
  %v2752 = vadd.f32 %v2742, %v2750
  %v2753 = vtanh.pop %v2752
  %2755 = vrot.lane.b32.xlu0 %v2753, 16
  %v2756 = vpop.permute.xlu0 %2755
  %v2758 = vmul.f32 %v2740, %v2756
  %v2759 = vrot.slane %v2338, 6
  %v2761 = vrot.slane %v2548, 4
  %v2764 = vrot.slane %v2758, 2
  %vm2766 = vcmask 1041408
  %v2767 = vsel %vm2766, %v2128, %v2759
  %vm2768 = vcmask 1043456
  %v2769 = vsel %vm2768, %v2767, %v2761
  %vm2770 = vcmask 1045504
  %v2771 = vsel %vm2770, %v2769, %v2764
  %v2772 = vld [vmem:[%s2] sm:$0xff]
  %v2773 = vld [vmem:[%s2 + $0x8] sm:$0xff]
  %v2774 = vld [vmem:[%s2 + $0x10] sm:$0x1]
  %v2775 = vlaneseq
  %v2776 = vshrl.u32 %v2775, 7
  %v2777 = vsub.s32 0, %v2776
  %v2778 = vrot.slane %v2774, %v2777
  %2780 = vrot.lane.b32.xlu0 %v2771, 96
  %v2781 = vpop.permute.xlu0 %2780
  %v2782 = vsel %vm59, %v2781, 0
  %2784 = vmatprep.subr.mxu0 0.0
  %2785 = vmatpush1.msra.mxu0 %v2772
  %2786 = vmatprep.subr.mxu0 0.0
  %2787 = vmatpush1.msra.mxu0 %v2773
  %2788 = vmatprep.subr.mxu0 0.0
  %2789 = vmatpush1.msra.mxu0 0.0
  %2790 = vmatprep.subr.mxu0 0.0
  %2791 = vmatpush1.msra.mxu0 0.0
  %2792 = vmatprep.subr.mxu0 0.0
  %2793 = vmatpush1.msra.mxu0 0.0
  %2794 = vmatprep.subr.mxu0 0.0
  %2795 = vmatpush1.msra.mxu0 0.0
  %2796 = vmatprep.subr.mxu0 0.0
  %2797 = vmatpush1.msra.mxu0 0.0
  %2798 = vmatprep.subr.mxu0 0.0
  %2799 = vmatpush1.msra.mxu0 0.0
  %2800 = vmatprep.subr.mxu0 0.0
  %2801 = vmatpush1.msra.mxu0 0.0
  %2802 = vmatprep.subr.mxu0 0.0
  %2803 = vmatpush1.msra.mxu0 0.0
  %2804 = vmatprep.subr.mxu0 0.0
  %2805 = vmatpush1.msra.mxu0 0.0
  %2806 = vmatprep.subr.mxu0 0.0
  %2807 = vmatpush1.msra.mxu0 0.0
  %2808 = vmatprep.subr.mxu0 0.0
  %2809 = vmatpush1.msra.mxu0 0.0
  %2810 = vmatprep.subr.mxu0 0.0
  %2811 = vmatpush1.msra.mxu0 0.0
  %2812 = vmatprep.subr.mxu0 0.0
  %2813 = vmatpush1.msra.mxu0 0.0
  %2814 = vmatprep.subr.mxu0 0.0
  %2815 = vmatpush1.msra.mxu0 0.0
  %2816 = vmatprep.subr.mxu0 0.0
  %2817 = vmatpush1.msra.mxu0 0.0
  %2818 = vmatprep.subr.mxu0 0.0
  %2819 = vmatpush1.msra.mxu0 0.0
  %2820 = vmatprep.subr.mxu0 0.0
  %2821 = vmatpush1.msra.mxu0 0.0
  %2822 = vmatprep.subr.mxu0 0.0
  %2823 = vmatpush1.msra.mxu0 0.0
  %2824 = vmatprep.subr.mxu0 0.0
  %2825 = vmatpush1.msra.mxu0 0.0
  %2826 = vmatprep.subr.mxu0 0.0
  %2827 = vmatpush1.msra.mxu0 0.0
  %2828 = vmatprep.subr.mxu0 0.0
  %2829 = vmatpush1.msra.mxu0 0.0
  %2830 = vmatprep.subr.mxu0 0.0
  %2831 = vmatpush1.msra.mxu0 0.0
  %2832 = vmatprep.subr.mxu0 0.0
  %2833 = vmatpush1.msra.mxu0 0.0
  %2834 = vmatprep.subr.mxu0 0.0
  %2835 = vmatpush1.msra.mxu0 0.0
  %2836 = vmatprep.subr.mxu0 0.0
  %2837 = vmatpush1.msra.mxu0 0.0
  %2838 = vmatprep.subr.mxu0 0.0
  %2839 = vmatpush1.msra.mxu0 0.0
  %2840 = vmatprep.subr.mxu0 0.0
  %2841 = vmatpush1.msra.mxu0 0.0
  %2842 = vmatprep.subr.mxu0 0.0
  %2843 = vmatpush1.msra.mxu0 0.0
  %2844 = vmatprep.subr.mxu0 0.0
  %2845 = vmatpush1.msra.mxu0 0.0
  %2846 = vmatprep.subr.mxu0 0.0
  %2847 = vmatpush1.msra.mxu0 0.0
  %2848 = vmatprep.mubr.f32.mxu0 0.0
  %2849 = vmatmul.mubr.f32.gmra.mrb[0].mxu0 %v2782
  %v2850 = vpop.f32.mrb[0].mxu0
  %v2851 = vadd.f32 %v2778, %v2850
  %v2852 = vpop.f32.mrb[0].mxu0
  %2853 = vdwg.mxu0
  %2854 = vst [vmem:[%s3] sm:$0xff] %v2851
  // Predicated region
  $region14: #{seq2seq_forward.1} parent=0 // pred_check
    _
  $region15: #{seq2seq_forward.1} parent=0 // pred_check_branch
    %2856 = sbr.rel (0) target = $region17
  $region16: #{seq2seq_forward.1} parent=0 // pred_region
    _
  $region17: #{seq2seq_forward.1} parent=0 // pred_fallthru
    _
  // Predicated region
  $region18: #{seq2seq_forward.1} parent=0 // pred_check
    _
  $region19: #{seq2seq_forward.1} parent=0 // pred_check_branch
    %2858 = sbr.rel (0) target = $region21
  $region20: #{seq2seq_forward.1} parent=0 // pred_region
    _
  $region21: #{seq2seq_forward.1} parent=0 // pred_fallthru
    _

</llo_original>
